<compile_context>
chip_gen: v6e
topology: v6e:2x2x1
jax: 0.10.0
libtpu: 0.0.40
codegen_flags: <defaults>
</compile_context>

<pallas_src>
import functools

import jax
import jax.numpy as jnp
from jax.experimental import pallas as pl
from jax.experimental.pallas import tpu as pltpu

EPS = 1e-5
LANES = 128


# ----------------------------- fused kernel ---------------------------------


def _gen_block(x, w_ref, gamma_ref, beta_ref):
    """Linear (bias-free) -> BatchNorm1d (biased batch stats) -> ReLU, all f32.

    Weights live in VMEM as bf16 (half the HBM DMA) and are unpacked to f32 here;
    activations are never downcast, so the matmul runs at f32 precision with f32
    accumulation.
    """
    y = jnp.dot(x, w_ref[...].astype(jnp.float32),
                preferred_element_type=jnp.float32)
    mean = jnp.mean(y, axis=0, keepdims=True)
    yc = y - mean                                      # centered activations, reused
    var = jnp.mean(yc * yc, axis=0, keepdims=True)     # biased variance (PyTorch train mode)
    scale = gamma_ref[...] * jax.lax.rsqrt(var + EPS)  # gamma folded into the rsqrt scale
    return jnp.maximum(yc * scale + beta_ref[...], 0.0)


def _generator_fused_kernel(x_ref,
                            w1_ref, g1_ref, b1_ref,
                            w2_ref, g2_ref, b2_ref,
                            w3_ref, g3_ref, b3_ref,
                            w4_ref, g4_ref, b4_ref,
                            w5_ref, bias5_ref,
                            o_ref):
    x = x_ref[...]
    x = _gen_block(x, w1_ref, g1_ref, b1_ref)
    x = _gen_block(x, w2_ref, g2_ref, b2_ref)
    x = _gen_block(x, w3_ref, g3_ref, b3_ref)
    x = _gen_block(x, w4_ref, g4_ref, b4_ref)
    # Final Linear (+ bias) + Sigmoid, f32 throughout. Output block is lane-padded
    # to a multiple of 128 -> unmasked vector stores.
    y = jnp.dot(x, w5_ref[...].astype(jnp.float32),
                preferred_element_type=jnp.float32) + bias5_ref[...]
    o_ref[...] = jax.nn.sigmoid(y).astype(o_ref.dtype)


# ----------------------------- wrapper ---------------------------------------


def _pad_lanes(a, target):
    pad = target - a.shape[-1]
    if pad == 0:
        return a
    return jnp.pad(a, [(0, 0)] * (a.ndim - 1) + [(0, pad)])


def prepare_generator_params(params):
    """One-time (NOT per-call) parameter prep for the kernel:
      * drop pre-BN Linear biases (cancelled by the batch-mean subtraction),
      * store weights in bf16 (halves weight HBM->VMEM DMA),
      * zero-pad the output layer to a multiple of 128 lanes (unmasked stores).
    Returns (flat_param_tuple, padded_im_dim)."""
    flat = []
    for (w, _b, gamma, beta) in params[:4]:
        flat += [w.astype(jnp.bfloat16),
                 gamma.astype(jnp.float32),
                 beta.astype(jnp.float32)]
    w5, b5 = params[4]
    im_dim = w5.shape[1]
    im_pad = ((im_dim + LANES - 1) // LANES) * LANES
    flat += [_pad_lanes(w5, im_pad).astype(jnp.bfloat16),
             _pad_lanes(b5, im_pad).astype(jnp.float32)]
    return tuple(flat), im_pad


def generator_forward_pallas(noise_batches, flat_params):
    """One fused pallas_call running N independent generator forward passes.

    noise_batches: (N, B, z_dim); each of the N slices is one forward pass with its
    own BatchNorm batch statistics (== calling the PyTorch module N times). Weights /
    BN params use constant index_maps, so they are copied to VMEM once and stay
    resident across the whole grid loop; the batch grid axis is "parallel" so v7x
    spreads it over both TensorCores.

    Returns the lane-padded output (N, B, im_pad); callers slice back to im_dim.
    VMEM here is ~10 MiB total (weights + one f32 weight temp); for production batch
    sizes that would stress v7x's 64 MiB, tile the batch dim and switch BN to a
    two-pass / partial-sum reduction.
    """
    N, B, Z = noise_batches.shape
    im_pad = flat_params[-1].shape[-1]

    def resident(a):  # whole-array block with a constant index -> DMA'd once
        nd = a.ndim
        return pl.BlockSpec(a.shape, lambda b: (0,) * nd)

    in_specs = [pl.BlockSpec((None, B, Z), lambda b: (b, 0, 0))]
    in_specs += [resident(a) for a in flat_params]

    return pl.pallas_call(
        _generator_fused_kernel,
        grid=(N,),
        out_shape=jax.ShapeDtypeStruct((N, B, im_pad), jnp.float32),
        in_specs=in_specs,
        out_specs=pl.BlockSpec((None, B, im_pad), lambda b: (b, 0, 0)),
        compiler_params=pltpu.CompilerParams(
            dimension_semantics=("parallel",),
            vmem_limit_bytes=32 * 1024 * 1024,
        ),
    )(noise_batches, *flat_params)


@functools.partial(jax.jit, static_argnums=2)
def generator_forward(noise_batches, flat_params, im_dim):
    out_padded = generator_forward_pallas(noise_batches, flat_params)
    return out_padded[..., :im_dim]


# ----------------------------- params & reference ----------------------------


def init_generator_params(key, z_dim, im_dim, hidden_dim):
    """Deterministic synthetic parameters with the PyTorch module's shapes/init."""
    dims = [z_dim, hidden_dim, hidden_dim * 2, hidden_dim * 4, hidden_dim * 8]
    params = []
    keys = jax.random.split(key, 5)
    for i in range(4):
        in_d, out_d = dims[i], dims[i + 1]
        kw, kb = jax.random.split(keys[i])
        bound = 1.0 / jnp.sqrt(in_d)
        w = jax.random.uniform(kw, (in_d, out_d), jnp.float32, -bound, bound)
        b = jax.random.uniform(kb, (1, out_d), jnp.float32, -bound, bound)
        gamma = jnp.ones((1, out_d), jnp.float32)   # BatchNorm1d default weight
        beta = jnp.zeros((1, out_d), jnp.float32)   # BatchNorm1d default bias
        params.append((w, b, gamma, beta))
    kw, kb = jax.random.split(keys[4])
    bound = 1.0 / jnp.sqrt(dims[-1])
    w_out = jax.random.uniform(kw, (dims[-1], im_dim), jnp.float32, -bound, bound)
    b_out = jax.random.uniform(kb, (1, im_dim), jnp.float32, -bound, bound)
    params.append((w_out, b_out))
    return params


def generator_reference(noise_batches, params):
    """Pure-JAX f32 reference with the exact PyTorch training-mode math, including
    the pre-BN Linear biases the kernel drops. Matmuls use HIGHEST precision so
    XLA's default bf16 truncation of f32 dots does not pollute the comparison."""
    hp = jax.lax.Precision.HIGHEST

    def single_forward(x):
        for (w, b, gamma, beta) in params[:4]:
            y = jnp.dot(x, w, precision=hp) + b
            mean = jnp.mean(y, axis=0, keepdims=True)
            var = jnp.mean((y - mean) ** 2, axis=0, keepdims=True)
            x = jnp.maximum((y - mean) * jax.lax.rsqrt(var + EPS) * gamma + beta, 0.0)
        w_out, b_out = params[4]
        return jax.nn.sigmoid(jnp.dot(x, w_out, precision=hp) + b_out)

    return jax.vmap(single_forward)(noise_batches)


# ----------------------------- main ------------------------------------------

if __name__ == "__main__":
    # Module defaults: z_dim=64 (file-level global), hidden_dim=128 (hidden widths
    # 128/256/512/1024, all lane-aligned), im_dim=784 (28*28, lane-padded to 896
    # inside the kernel). 4 independent batches of 8 noise vectors per pallas_call.
    num_batches, batch = 4, 8
    z_dim, im_dim, hidden_dim = 64, 784, 128

    key = jax.random.PRNGKey(0)
    k_noise, k_params = jax.random.split(key)
    noise = jax.random.normal(k_noise, (num_batches, batch, z_dim), jnp.float32)
    params = init_generator_params(k_params, z_dim, im_dim, hidden_dim)

    flat_params, _ = prepare_generator_params(params)
    out = generator_forward(noise, flat_params, im_dim)
    out = jax.block_until_ready(out)

    # The kernel stores weights in bf16 (a one-time deployment choice); the numeric
    # check therefore uses the same bf16-rounded weights in the f32 reference so it
    # isolates the kernel's compute path (f32 activations, f32 accumulation).
    def bf16w(w):
        return w.astype(jnp.bfloat16).astype(jnp.float32)

    params_bf16w = [(bf16w(w), b, g, be) for (w, b, g, be) in params[:4]]
    params_bf16w.append((bf16w(params[4][0]), params[4][1]))
    ref = generator_reference(noise, params_bf16w)

    assert out.shape == (num_batches, batch, im_dim), out.shape
    err = float(jnp.max(jnp.abs(out - ref)))
    # f32 matmul operands + f32 accumulation: typically ~1e-6; 2e-3 leaves headroom
    # for EUP transcendental (rsqrt / exp) differences across the 5 layers.
    assert err < 2e-3, f"max abs error {err} vs reference"

    print("KERNEL_OK")
</pallas_src>

<mosaic_0001>
module attributes {stable_mosaic.version = 11 : i64} {
  func.func @_generator_fused_kernel(%arg0: i32, %arg1: memref<1x8x64xf32, #tpu.memory_space<vmem>>, %arg2: memref<64x128xbf16, #tpu.memory_space<vmem>>, %arg3: memref<1x128xf32, #tpu.memory_space<vmem>>, %arg4: memref<1x128xf32, #tpu.memory_space<vmem>>, %arg5: memref<128x256xbf16, #tpu.memory_space<vmem>>, %arg6: memref<1x256xf32, #tpu.memory_space<vmem>>, %arg7: memref<1x256xf32, #tpu.memory_space<vmem>>, %arg8: memref<256x512xbf16, #tpu.memory_space<vmem>>, %arg9: memref<1x512xf32, #tpu.memory_space<vmem>>, %arg10: memref<1x512xf32, #tpu.memory_space<vmem>>, %arg11: memref<512x1024xbf16, #tpu.memory_space<vmem>>, %arg12: memref<1x1024xf32, #tpu.memory_space<vmem>>, %arg13: memref<1x1024xf32, #tpu.memory_space<vmem>>, %arg14: memref<1024x896xbf16, #tpu.memory_space<vmem>>, %arg15: memref<1x896xf32, #tpu.memory_space<vmem>>, %arg16: memref<1x8x896xf32, #tpu.memory_space<vmem>>) attributes {dimension_semantics = [#tpu.dimension_semantics<parallel>], iteration_bounds = array<i64: 4>, scalar_prefetch = 0 : i64, scratch_operands = 0 : i64, tpu.core_type = #tpu.core_type<tc>, window_params = [{transform_indices = @transform_0, window_bounds = array<i64: 1, 8, 64>}, {pipeline_mode = #tpu.pipeline_mode<synchronous>, transform_indices = @transform_1, window_bounds = array<i64: 64, 128>}, {pipeline_mode = #tpu.pipeline_mode<synchronous>, transform_indices = @transform_2, window_bounds = array<i64: 1, 128>}, {pipeline_mode = #tpu.pipeline_mode<synchronous>, transform_indices = @transform_3, window_bounds = array<i64: 1, 128>}, {pipeline_mode = #tpu.pipeline_mode<synchronous>, transform_indices = @transform_4, window_bounds = array<i64: 128, 256>}, {pipeline_mode = #tpu.pipeline_mode<synchronous>, transform_indices = @transform_5, window_bounds = array<i64: 1, 256>}, {pipeline_mode = #tpu.pipeline_mode<synchronous>, transform_indices = @transform_6, window_bounds = array<i64: 1, 256>}, {pipeline_mode = #tpu.pipeline_mode<synchronous>, transform_indices = @transform_7, window_bounds = array<i64: 256, 512>}, {pipeline_mode = #tpu.pipeline_mode<synchronous>, transform_indices = @transform_8, window_bounds = array<i64: 1, 512>}, {pipeline_mode = #tpu.pipeline_mode<synchronous>, transform_indices = @transform_9, window_bounds = array<i64: 1, 512>}, {pipeline_mode = #tpu.pipeline_mode<synchronous>, transform_indices = @transform_10, window_bounds = array<i64: 512, 1024>}, {pipeline_mode = #tpu.pipeline_mode<synchronous>, transform_indices = @transform_11, window_bounds = array<i64: 1, 1024>}, {pipeline_mode = #tpu.pipeline_mode<synchronous>, transform_indices = @transform_12, window_bounds = array<i64: 1, 1024>}, {pipeline_mode = #tpu.pipeline_mode<synchronous>, transform_indices = @transform_13, window_bounds = array<i64: 1024, 896>}, {pipeline_mode = #tpu.pipeline_mode<synchronous>, transform_indices = @transform_14, window_bounds = array<i64: 1, 896>}, {transform_indices = @transform_15, window_bounds = array<i64: 1, 8, 896>}]} {
    %c0 = arith.constant 0 : index
    %c0_0 = arith.constant 0 : index
    %c0_1 = arith.constant 0 : index
    %0 = vector.load %arg1[%c0, %c0_0, %c0_1] : memref<1x8x64xf32, #tpu.memory_space<vmem>>, vector<1x8x64xf32>
    %1 = vector.shape_cast %0 : vector<1x8x64xf32> to vector<8x64xf32>
    %c0_2 = arith.constant 0 : index
    %c0_3 = arith.constant 0 : index
    %2 = vector.load %arg2[%c0_2, %c0_3] : memref<64x128xbf16, #tpu.memory_space<vmem>>, vector<64x128xbf16>
    %3 = arith.extf %2 : vector<64x128xbf16> to vector<64x128xf32>
    %cst = arith.constant dense<0.000000e+00> : vector<8x128xf32>
    %4 = tpu.matmul %1, %3, %cst {dimension_numbers = #tpu.dot_dimension_numbers<[1], [0], [0], [1], [0, 0, 1, 1], [], []>} : vector<8x64xf32>, vector<64x128xf32>, vector<8x128xf32> -> vector<8x128xf32>
    %cst_4 = arith.constant dense<0.000000e+00> : vector<128xf32>
    %5 = vector.multi_reduction <add>, %4, %cst_4 [0] : vector<8x128xf32> to vector<128xf32>
    %6 = vector.shape_cast %5 : vector<128xf32> to vector<1x128xf32>
    %cst_5 = arith.constant 8.000000e+00 : f32
    %7 = vector.broadcast %cst_5 : f32 to vector<1x128xf32>
    %8 = arith.divf %6, %7 : vector<1x128xf32>
    %9 = vector.broadcast %8 : vector<1x128xf32> to vector<8x128xf32>
    %10 = arith.subf %4, %9 : vector<8x128xf32>
    %11 = arith.mulf %10, %10 : vector<8x128xf32>
    %cst_6 = arith.constant dense<0.000000e+00> : vector<128xf32>
    %12 = vector.multi_reduction <add>, %11, %cst_6 [0] : vector<8x128xf32> to vector<128xf32>
    %13 = vector.shape_cast %12 : vector<128xf32> to vector<1x128xf32>
    %cst_7 = arith.constant 8.000000e+00 : f32
    %14 = vector.broadcast %cst_7 : f32 to vector<1x128xf32>
    %15 = arith.divf %13, %14 : vector<1x128xf32>
    %c0_8 = arith.constant 0 : index
    %c0_9 = arith.constant 0 : index
    %16 = vector.load %arg3[%c0_8, %c0_9] : memref<1x128xf32, #tpu.memory_space<vmem>>, vector<1x128xf32>
    %cst_10 = arith.constant 9.99999974E-6 : f32
    %17 = vector.broadcast %cst_10 : f32 to vector<1x128xf32>
    %18 = arith.addf %15, %17 : vector<1x128xf32>
    %19 = math.rsqrt %18 : vector<1x128xf32>
    %20 = arith.mulf %16, %19 : vector<1x128xf32>
    %21 = vector.broadcast %20 : vector<1x128xf32> to vector<8x128xf32>
    %22 = arith.mulf %10, %21 : vector<8x128xf32>
    %c0_11 = arith.constant 0 : index
    %c0_12 = arith.constant 0 : index
    %23 = vector.load %arg4[%c0_11, %c0_12] : memref<1x128xf32, #tpu.memory_space<vmem>>, vector<1x128xf32>
    %24 = vector.broadcast %23 : vector<1x128xf32> to vector<8x128xf32>
    %25 = arith.addf %22, %24 : vector<8x128xf32>
    %cst_13 = arith.constant 0.000000e+00 : f32
    %26 = vector.broadcast %cst_13 : f32 to vector<8x128xf32>
    %27 = arith.maximumf %25, %26 : vector<8x128xf32>
    %c0_14 = arith.constant 0 : index
    %c0_15 = arith.constant 0 : index
    %28 = vector.load %arg5[%c0_14, %c0_15] : memref<128x256xbf16, #tpu.memory_space<vmem>>, vector<128x256xbf16>
    %29 = arith.extf %28 : vector<128x256xbf16> to vector<128x256xf32>
    %cst_16 = arith.constant dense<0.000000e+00> : vector<8x256xf32>
    %30 = tpu.matmul %27, %29, %cst_16 {dimension_numbers = #tpu.dot_dimension_numbers<[1], [0], [0], [1], [0, 0, 1, 1], [], []>} : vector<8x128xf32>, vector<128x256xf32>, vector<8x256xf32> -> vector<8x256xf32>
    %cst_17 = arith.constant dense<0.000000e+00> : vector<256xf32>
    %31 = vector.multi_reduction <add>, %30, %cst_17 [0] : vector<8x256xf32> to vector<256xf32>
    %32 = vector.shape_cast %31 : vector<256xf32> to vector<1x256xf32>
    %cst_18 = arith.constant 8.000000e+00 : f32
    %33 = vector.broadcast %cst_18 : f32 to vector<1x256xf32>
    %34 = arith.divf %32, %33 : vector<1x256xf32>
    %35 = vector.broadcast %34 : vector<1x256xf32> to vector<8x256xf32>
    %36 = arith.subf %30, %35 : vector<8x256xf32>
    %37 = arith.mulf %36, %36 : vector<8x256xf32>
    %cst_19 = arith.constant dense<0.000000e+00> : vector<256xf32>
    %38 = vector.multi_reduction <add>, %37, %cst_19 [0] : vector<8x256xf32> to vector<256xf32>
    %39 = vector.shape_cast %38 : vector<256xf32> to vector<1x256xf32>
    %cst_20 = arith.constant 8.000000e+00 : f32
    %40 = vector.broadcast %cst_20 : f32 to vector<1x256xf32>
    %41 = arith.divf %39, %40 : vector<1x256xf32>
    %c0_21 = arith.constant 0 : index
    %c0_22 = arith.constant 0 : index
    %42 = vector.load %arg6[%c0_21, %c0_22] : memref<1x256xf32, #tpu.memory_space<vmem>>, vector<1x256xf32>
    %cst_23 = arith.constant 9.99999974E-6 : f32
    %43 = vector.broadcast %cst_23 : f32 to vector<1x256xf32>
    %44 = arith.addf %41, %43 : vector<1x256xf32>
    %45 = math.rsqrt %44 : vector<1x256xf32>
    %46 = arith.mulf %42, %45 : vector<1x256xf32>
    %47 = vector.broadcast %46 : vector<1x256xf32> to vector<8x256xf32>
    %48 = arith.mulf %36, %47 : vector<8x256xf32>
    %c0_24 = arith.constant 0 : index
    %c0_25 = arith.constant 0 : index
    %49 = vector.load %arg7[%c0_24, %c0_25] : memref<1x256xf32, #tpu.memory_space<vmem>>, vector<1x256xf32>
    %50 = vector.broadcast %49 : vector<1x256xf32> to vector<8x256xf32>
    %51 = arith.addf %48, %50 : vector<8x256xf32>
    %cst_26 = arith.constant 0.000000e+00 : f32
    %52 = vector.broadcast %cst_26 : f32 to vector<8x256xf32>
    %53 = arith.maximumf %51, %52 : vector<8x256xf32>
    %c0_27 = arith.constant 0 : index
    %c0_28 = arith.constant 0 : index
    %54 = vector.load %arg8[%c0_27, %c0_28] : memref<256x512xbf16, #tpu.memory_space<vmem>>, vector<256x512xbf16>
    %55 = arith.extf %54 : vector<256x512xbf16> to vector<256x512xf32>
    %cst_29 = arith.constant dense<0.000000e+00> : vector<8x512xf32>
    %56 = tpu.matmul %53, %55, %cst_29 {dimension_numbers = #tpu.dot_dimension_numbers<[1], [0], [0], [1], [0, 0, 1, 1], [], []>} : vector<8x256xf32>, vector<256x512xf32>, vector<8x512xf32> -> vector<8x512xf32>
    %cst_30 = arith.constant dense<0.000000e+00> : vector<512xf32>
    %57 = vector.multi_reduction <add>, %56, %cst_30 [0] : vector<8x512xf32> to vector<512xf32>
    %58 = vector.shape_cast %57 : vector<512xf32> to vector<1x512xf32>
    %cst_31 = arith.constant 8.000000e+00 : f32
    %59 = vector.broadcast %cst_31 : f32 to vector<1x512xf32>
    %60 = arith.divf %58, %59 : vector<1x512xf32>
    %61 = vector.broadcast %60 : vector<1x512xf32> to vector<8x512xf32>
    %62 = arith.subf %56, %61 : vector<8x512xf32>
    %63 = arith.mulf %62, %62 : vector<8x512xf32>
    %cst_32 = arith.constant dense<0.000000e+00> : vector<512xf32>
    %64 = vector.multi_reduction <add>, %63, %cst_32 [0] : vector<8x512xf32> to vector<512xf32>
    %65 = vector.shape_cast %64 : vector<512xf32> to vector<1x512xf32>
    %cst_33 = arith.constant 8.000000e+00 : f32
    %66 = vector.broadcast %cst_33 : f32 to vector<1x512xf32>
    %67 = arith.divf %65, %66 : vector<1x512xf32>
    %c0_34 = arith.constant 0 : index
    %c0_35 = arith.constant 0 : index
    %68 = vector.load %arg9[%c0_34, %c0_35] : memref<1x512xf32, #tpu.memory_space<vmem>>, vector<1x512xf32>
    %cst_36 = arith.constant 9.99999974E-6 : f32
    %69 = vector.broadcast %cst_36 : f32 to vector<1x512xf32>
    %70 = arith.addf %67, %69 : vector<1x512xf32>
    %71 = math.rsqrt %70 : vector<1x512xf32>
    %72 = arith.mulf %68, %71 : vector<1x512xf32>
    %73 = vector.broadcast %72 : vector<1x512xf32> to vector<8x512xf32>
    %74 = arith.mulf %62, %73 : vector<8x512xf32>
    %c0_37 = arith.constant 0 : index
    %c0_38 = arith.constant 0 : index
    %75 = vector.load %arg10[%c0_37, %c0_38] : memref<1x512xf32, #tpu.memory_space<vmem>>, vector<1x512xf32>
    %76 = vector.broadcast %75 : vector<1x512xf32> to vector<8x512xf32>
    %77 = arith.addf %74, %76 : vector<8x512xf32>
    %cst_39 = arith.constant 0.000000e+00 : f32
    %78 = vector.broadcast %cst_39 : f32 to vector<8x512xf32>
    %79 = arith.maximumf %77, %78 : vector<8x512xf32>
    %c0_40 = arith.constant 0 : index
    %c0_41 = arith.constant 0 : index
    %80 = vector.load %arg11[%c0_40, %c0_41] : memref<512x1024xbf16, #tpu.memory_space<vmem>>, vector<512x1024xbf16>
    %81 = arith.extf %80 : vector<512x1024xbf16> to vector<512x1024xf32>
    %cst_42 = arith.constant dense<0.000000e+00> : vector<8x1024xf32>
    %82 = tpu.matmul %79, %81, %cst_42 {dimension_numbers = #tpu.dot_dimension_numbers<[1], [0], [0], [1], [0, 0, 1, 1], [], []>} : vector<8x512xf32>, vector<512x1024xf32>, vector<8x1024xf32> -> vector<8x1024xf32>
    %cst_43 = arith.constant dense<0.000000e+00> : vector<1024xf32>
    %83 = vector.multi_reduction <add>, %82, %cst_43 [0] : vector<8x1024xf32> to vector<1024xf32>
    %84 = vector.shape_cast %83 : vector<1024xf32> to vector<1x1024xf32>
    %cst_44 = arith.constant 8.000000e+00 : f32
    %85 = vector.broadcast %cst_44 : f32 to vector<1x1024xf32>
    %86 = arith.divf %84, %85 : vector<1x1024xf32>
    %87 = vector.broadcast %86 : vector<1x1024xf32> to vector<8x1024xf32>
    %88 = arith.subf %82, %87 : vector<8x1024xf32>
    %89 = arith.mulf %88, %88 : vector<8x1024xf32>
    %cst_45 = arith.constant dense<0.000000e+00> : vector<1024xf32>
    %90 = vector.multi_reduction <add>, %89, %cst_45 [0] : vector<8x1024xf32> to vector<1024xf32>
    %91 = vector.shape_cast %90 : vector<1024xf32> to vector<1x1024xf32>
    %cst_46 = arith.constant 8.000000e+00 : f32
    %92 = vector.broadcast %cst_46 : f32 to vector<1x1024xf32>
    %93 = arith.divf %91, %92 : vector<1x1024xf32>
    %c0_47 = arith.constant 0 : index
    %c0_48 = arith.constant 0 : index
    %94 = vector.load %arg12[%c0_47, %c0_48] : memref<1x1024xf32, #tpu.memory_space<vmem>>, vector<1x1024xf32>
    %cst_49 = arith.constant 9.99999974E-6 : f32
    %95 = vector.broadcast %cst_49 : f32 to vector<1x1024xf32>
    %96 = arith.addf %93, %95 : vector<1x1024xf32>
    %97 = math.rsqrt %96 : vector<1x1024xf32>
    %98 = arith.mulf %94, %97 : vector<1x1024xf32>
    %99 = vector.broadcast %98 : vector<1x1024xf32> to vector<8x1024xf32>
    %100 = arith.mulf %88, %99 : vector<8x1024xf32>
    %c0_50 = arith.constant 0 : index
    %c0_51 = arith.constant 0 : index
    %101 = vector.load %arg13[%c0_50, %c0_51] : memref<1x1024xf32, #tpu.memory_space<vmem>>, vector<1x1024xf32>
    %102 = vector.broadcast %101 : vector<1x1024xf32> to vector<8x1024xf32>
    %103 = arith.addf %100, %102 : vector<8x1024xf32>
    %cst_52 = arith.constant 0.000000e+00 : f32
    %104 = vector.broadcast %cst_52 : f32 to vector<8x1024xf32>
    %105 = arith.maximumf %103, %104 : vector<8x1024xf32>
    %c0_53 = arith.constant 0 : index
    %c0_54 = arith.constant 0 : index
    %106 = vector.load %arg14[%c0_53, %c0_54] : memref<1024x896xbf16, #tpu.memory_space<vmem>>, vector<1024x896xbf16>
    %107 = arith.extf %106 : vector<1024x896xbf16> to vector<1024x896xf32>
    %cst_55 = arith.constant dense<0.000000e+00> : vector<8x896xf32>
    %108 = tpu.matmul %105, %107, %cst_55 {dimension_numbers = #tpu.dot_dimension_numbers<[1], [0], [0], [1], [0, 0, 1, 1], [], []>} : vector<8x1024xf32>, vector<1024x896xf32>, vector<8x896xf32> -> vector<8x896xf32>
    %c0_56 = arith.constant 0 : index
    %c0_57 = arith.constant 0 : index
    %109 = vector.load %arg15[%c0_56, %c0_57] : memref<1x896xf32, #tpu.memory_space<vmem>>, vector<1x896xf32>
    %110 = vector.broadcast %109 : vector<1x896xf32> to vector<8x896xf32>
    %111 = arith.addf %108, %110 : vector<8x896xf32>
    %112 = arith.negf %111 : vector<8x896xf32>
    %113 = math.exp %112 : vector<8x896xf32>
    %cst_58 = arith.constant 1.000000e+00 : f32
    %114 = vector.broadcast %cst_58 : f32 to vector<8x896xf32>
    %115 = arith.addf %114, %113 : vector<8x896xf32>
    %116 = arith.divf %114, %115 : vector<8x896xf32>
    %c0_59 = arith.constant 0 : index
    %c0_60 = arith.constant 0 : index
    %c0_61 = arith.constant 0 : index
    %117 = vector.load %arg16[%c0_59, %c0_60, %c0_61] : memref<1x8x896xf32, #tpu.memory_space<vmem>>, vector<1x8x896xf32>
    %118 = vector.shape_cast %117 : vector<1x8x896xf32> to vector<8x896xf32>
    %119 = vector.shape_cast %116 : vector<8x896xf32> to vector<1x8x896xf32>
    tpu.vector_store %arg16[%c0_59, %c0_60, %c0_61], %119 {strides = array<i32>} : memref<1x8x896xf32, #tpu.memory_space<vmem>>, vector<1x8x896xf32>,
    return
  }
  func.func @transform_0(%arg0: i32) -> (i32, i32, i32) {
    %c0_i32 = arith.constant 0 : i32
    %c0_i32_0 = arith.constant 0 : i32
    %c0_i32_1 = arith.constant 0 : i32
    return %arg0, %c0_i32, %c0_i32_0 : i32, i32, i32
  }
  func.func @transform_1(%arg0: i32) -> (i32, i32) {
    %c0_i32 = arith.constant 0 : i32
    %c0_i32_0 = arith.constant 0 : i32
    %c0_i32_1 = arith.constant 0 : i32
    return %c0_i32, %c0_i32_0 : i32, i32
  }
  func.func @transform_2(%arg0: i32) -> (i32, i32) {
    %c0_i32 = arith.constant 0 : i32
    %c0_i32_0 = arith.constant 0 : i32
    %c0_i32_1 = arith.constant 0 : i32
    return %c0_i32, %c0_i32_0 : i32, i32
  }
  func.func @transform_3(%arg0: i32) -> (i32, i32) {
    %c0_i32 = arith.constant 0 : i32
    %c0_i32_0 = arith.constant 0 : i32
    %c0_i32_1 = arith.constant 0 : i32
    return %c0_i32, %c0_i32_0 : i32, i32
  }
  func.func @transform_4(%arg0: i32) -> (i32, i32) {
    %c0_i32 = arith.constant 0 : i32
    %c0_i32_0 = arith.constant 0 : i32
    %c0_i32_1 = arith.constant 0 : i32
    return %c0_i32, %c0_i32_0 : i32, i32
  }
  func.func @transform_5(%arg0: i32) -> (i32, i32) {
    %c0_i32 = arith.constant 0 : i32
    %c0_i32_0 = arith.constant 0 : i32
    %c0_i32_1 = arith.constant 0 : i32
    return %c0_i32, %c0_i32_0 : i32, i32
  }
  func.func @transform_6(%arg0: i32) -> (i32, i32) {
    %c0_i32 = arith.constant 0 : i32
    %c0_i32_0 = arith.constant 0 : i32
    %c0_i32_1 = arith.constant 0 : i32
    return %c0_i32, %c0_i32_0 : i32, i32
  }
  func.func @transform_7(%arg0: i32) -> (i32, i32) {
    %c0_i32 = arith.constant 0 : i32
    %c0_i32_0 = arith.constant 0 : i32
    %c0_i32_1 = arith.constant 0 : i32
    return %c0_i32, %c0_i32_0 : i32, i32
  }
  func.func @transform_8(%arg0: i32) -> (i32, i32) {
    %c0_i32 = arith.constant 0 : i32
    %c0_i32_0 = arith.constant 0 : i32
    %c0_i32_1 = arith.constant 0 : i32
    return %c0_i32, %c0_i32_0 : i32, i32
  }
  func.func @transform_9(%arg0: i32) -> (i32, i32) {
    %c0_i32 = arith.constant 0 : i32
    %c0_i32_0 = arith.constant 0 : i32
    %c0_i32_1 = arith.constant 0 : i32
    return %c0_i32, %c0_i32_0 : i32, i32
  }
  func.func @transform_10(%arg0: i32) -> (i32, i32) {
    %c0_i32 = arith.constant 0 : i32
    %c0_i32_0 = arith.constant 0 : i32
    %c0_i32_1 = arith.constant 0 : i32
    return %c0_i32, %c0_i32_0 : i32, i32
  }
  func.func @transform_11(%arg0: i32) -> (i32, i32) {
    %c0_i32 = arith.constant 0 : i32
    %c0_i32_0 = arith.constant 0 : i32
    %c0_i32_1 = arith.constant 0 : i32
    return %c0_i32, %c0_i32_0 : i32, i32
  }
  func.func @transform_12(%arg0: i32) -> (i32, i32) {
    %c0_i32 = arith.constant 0 : i32
    %c0_i32_0 = arith.constant 0 : i32
    %c0_i32_1 = arith.constant 0 : i32
    return %c0_i32, %c0_i32_0 : i32, i32
  }
  func.func @transform_13(%arg0: i32) -> (i32, i32) {
    %c0_i32 = arith.constant 0 : i32
    %c0_i32_0 = arith.constant 0 : i32
    %c0_i32_1 = arith.constant 0 : i32
    return %c0_i32, %c0_i32_0 : i32, i32
  }
  func.func @transform_14(%arg0: i32) -> (i32, i32) {
    %c0_i32 = arith.constant 0 : i32
    %c0_i32_0 = arith.constant 0 : i32
    %c0_i32_1 = arith.constant 0 : i32
    return %c0_i32, %c0_i32_0 : i32, i32
  }
  func.func @transform_15(%arg0: i32) -> (i32, i32, i32) {
    %c0_i32 = arith.constant 0 : i32
    %c0_i32_0 = arith.constant 0 : i32
    %c0_i32_1 = arith.constant 0 : i32
    return %arg0, %c0_i32, %c0_i32_0 : i32, i32, i32
  }
}

</mosaic_0001>

<llo_original>
// kernel: generator_forward.1
$region0: #{generator_forward.1}
  #allocation0 [shape = 'u32[]', space=smem, size = 0x4, offset = 0x4, fixed_abs, tag = 'smem constant byte address 0x4 - core index']
  #allocation1 [shape = 'u32[144,128]{1,0:T(1,128)}', space=vmem, size = 0x12000, scoped, tag = 'internal scratch']
  %s0 = inlined_call_operand.hbm [shape: f32[4,8,64], index: 0, kind: input, shape index: {}]
  %s1 = inlined_call_operand.hbm [shape: bf16[64,128], index: 1, kind: input, shape index: {}]
  %s2 = inlined_call_operand.hbm [shape: f32[1,128], index: 2, kind: input, shape index: {}]
  %s3 = inlined_call_operand.hbm [shape: f32[1,128], index: 3, kind: input, shape index: {}]
  %s4 = inlined_call_operand.hbm [shape: bf16[128,256], index: 4, kind: input, shape index: {}]
  %s5 = inlined_call_operand.hbm [shape: f32[1,256], index: 5, kind: input, shape index: {}]
  %s6 = inlined_call_operand.hbm [shape: f32[1,256], index: 6, kind: input, shape index: {}]
  %s7 = inlined_call_operand.hbm [shape: bf16[256,512], index: 7, kind: input, shape index: {}]
  %s8 = inlined_call_operand.hbm [shape: f32[1,512], index: 8, kind: input, shape index: {}]
  %s9 = inlined_call_operand.hbm [shape: f32[1,512], index: 9, kind: input, shape index: {}]
  %s10 = inlined_call_operand.hbm [shape: bf16[512,1024], index: 10, kind: input, shape index: {}]
  %s11 = inlined_call_operand.hbm [shape: f32[1,1024], index: 11, kind: input, shape index: {}]
  %s12 = inlined_call_operand.hbm [shape: f32[1,1024], index: 12, kind: input, shape index: {}]
  %s13 = inlined_call_operand.hbm [shape: bf16[1024,896], index: 13, kind: input, shape index: {}]
  %s14 = inlined_call_operand.hbm [shape: f32[1,896], index: 14, kind: input, shape index: {}]
  %s15 = inlined_call_operand.hbm [shape: f32[4,8,896], index: 15, kind: output, shape index: {}]
  %s16 = sld [smem:[#allocation0]]
  $region153: #{generator_forward.1} parent=0
    _
  %s18 = ssub.s32 1, %s16
  %s19 = scalar_select 0, %s18, %s16
  $region1: #{generator_forward.1} parent=0
    #allocation2 [shape = 'u8[8192]{0}', space=vmem, size = 0x2000, scoped, tag = 'input window, operand 0']
    #allocation3 [shape = 's32[2]{0}', space=sflag, size = 0x8, scoped, tag = 'scoped memory for generator_forward.1']
    #allocation4 [shape = 's32[2]{0}', space=sflag, size = 0x8, scoped, tag = 'scoped memory for generator_forward.1']
    #allocation5 [shape = 'u8[16384]{0}', space=vmem, size = 0x4000, scoped, tag = 'input window, operand 1, single buffered']
    #allocation6 [shape = 's32[1]{0}', space=sflag, size = 0x4, scoped, tag = 'scoped memory for generator_forward.1']
    #allocation7 [shape = 'u8[512]{0}', space=vmem, size = 0x400, scoped, tag = 'input window, operand 2, single buffered']
    #allocation8 [shape = 'u8[512]{0}', space=vmem, size = 0x400, scoped, tag = 'input window, operand 3, single buffered']
    #allocation9 [shape = 's32[1]{0}', space=sflag, size = 0x4, scoped, tag = 'scoped memory for generator_forward.1']
    #allocation10 [shape = 'u8[65536]{0}', space=vmem, size = 0x10000, scoped, tag = 'input window, operand 4, single buffered']
    #allocation11 [shape = 'u8[1024]{0}', space=vmem, size = 0x400, scoped, tag = 'input window, operand 5, single buffered']
    #allocation12 [shape = 's32[1]{0}', space=sflag, size = 0x4, scoped, tag = 'scoped memory for generator_forward.1']
    #allocation13 [shape = 'u8[1024]{0}', space=vmem, size = 0x400, scoped, tag = 'input window, operand 6, single buffered']
    #allocation14 [shape = 'u8[262144]{0}', space=vmem, size = 0x40000, scoped, tag = 'input window, operand 7, single buffered']
    #allocation15 [shape = 's32[1]{0}', space=sflag, size = 0x4, scoped, tag = 'scoped memory for generator_forward.1']
    #allocation16 [shape = 'u8[2048]{0}', space=vmem, size = 0x800, scoped, tag = 'input window, operand 8, single buffered']
    #allocation17 [shape = 'u8[2048]{0}', space=vmem, size = 0x800, scoped, tag = 'input window, operand 9, single buffered']
    #allocation18 [shape = 's32[1]{0}', space=sflag, size = 0x4, scoped, tag = 'scoped memory for generator_forward.1']
    #allocation19 [shape = 'u8[1048576]{0}', space=vmem, size = 0x100000, scoped, tag = 'input window, operand 10, single buffered']
    #allocation20 [shape = 'u8[4096]{0}', space=vmem, size = 0x1000, scoped, tag = 'input window, operand 11, single buffered']
    #allocation21 [shape = 's32[1]{0}', space=sflag, size = 0x4, scoped, tag = 'scoped memory for generator_forward.1']
    #allocation22 [shape = 'u8[4096]{0}', space=vmem, size = 0x1000, scoped, tag = 'input window, operand 12, single buffered']
    #allocation23 [shape = 'u8[1835008]{0}', space=vmem, size = 0x1c0000, scoped, tag = 'input window, operand 13, single buffered']
    #allocation24 [shape = 's32[1]{0}', space=sflag, size = 0x4, scoped, tag = 'scoped memory for generator_forward.1']
    #allocation25 [shape = 'u8[3584]{0}', space=vmem, size = 0x1000, scoped, tag = 'input window, operand 14, single buffered']
    #allocation26 [shape = 'u8[57344]{0}', space=vmem, size = 0xe000, scoped, tag = 'output window, operand 0']
    %20 = vsyncpa [#allocation3], 0
    %s21 = scalar_lea.sflag [#allocation3], 1
    %22 = vsyncpa %s21, 0
    %23 = vsyncpa [#allocation6], 0
    %24 = vsyncpa [#allocation9], 0
    %25 = vsyncpa [#allocation12], 0
    %26 = vsyncpa [#allocation15], 0
    %27 = vsyncpa [#allocation18], 0
    %28 = vsyncpa [#allocation21], 0
    %29 = vsyncpa [#allocation24], 0
    %30 = vsyncpa [#allocation4], 0
    %s31 = scalar_lea.sflag [#allocation4], 1
    %32 = vsyncpa %s31, 0
    loop: start=0, step=1, limit=6
    $region2: #{generator_forward.1} parent=1 // loop_pre_header
      _
    $region3: #{generator_forward.1} parent=1 // loop_header
      %s34 = sphi 0, %s38
      %p35 = scmp.ge.s32.totalorder %s34, 6
      %s44 = sphi 0, %s46
      %s47 = sphi 0, %s44
      %s48 = sphi 0, %s47
      %s64 = sphi 0, %s48
      %s68 = sphi 0, %s68
      %s70 = sphi 0, %s68
      %s71 = sphi 0, %s70
      %s85 = sphi 0, %s71
      %s89 = sphi 0, %s89
      %s91 = sphi 0, %s89
      %s92 = sphi 0, %s91
      %s106 = sphi 0, %s92
      %s110 = sphi 0, %s110
      %s112 = sphi 0, %s110
      %s113 = sphi 0, %s112
      %s127 = sphi 0, %s113
      %s131 = sphi 0, %s131
      %s133 = sphi 0, %s131
      %s134 = sphi 0, %s133
      %s148 = sphi 0, %s134
      %s152 = sphi 0, %s152
      %s154 = sphi 0, %s152
      %s155 = sphi 0, %s154
      %s169 = sphi 0, %s155
      %s173 = sphi 0, %s173
      %s175 = sphi 0, %s173
      %s176 = sphi 0, %s175
      %s190 = sphi 0, %s176
      %s194 = sphi 0, %s194
      %s196 = sphi 0, %s194
      %s197 = sphi 0, %s196
      %s211 = sphi 0, %s197
      %s215 = sphi 0, %s215
      %s217 = sphi 0, %s215
      %s218 = sphi 0, %s217
      %s232 = sphi 0, %s218
      %s236 = sphi 0, %s236
      %s238 = sphi 0, %s236
      %s239 = sphi 0, %s238
      %s253 = sphi 0, %s239
      %s257 = sphi 0, %s257
      %s259 = sphi 0, %s257
      %s260 = sphi 0, %s259
      %s274 = sphi 0, %s260
      %s278 = sphi 0, %s278
      %s280 = sphi 0, %s278
      %s281 = sphi 0, %s280
      %s295 = sphi 0, %s281
      %s299 = sphi 0, %s299
      %s301 = sphi 0, %s299
      %s302 = sphi 0, %s301
      %s316 = sphi 0, %s302
      %s320 = sphi 0, %s320
      %s322 = sphi 0, %s320
      %s323 = sphi 0, %s322
      %s337 = sphi 0, %s323
      %s341 = sphi 0, %s341
      %s343 = sphi 0, %s341
      %s344 = sphi 0, %s343
      %s358 = sphi 0, %s344
      %s364 = sphi 0, %s366
      %s367 = sphi 0, %s364
      %s368 = sphi 0, %s367
      %s384 = sphi 0, %s368
    $region4: #{generator_forward.1} parent=1 // loop_header_branch
      %37 = sbr.rel (%p35) target = $region8
    $region5: #{generator_forward.1} parent=1 // loop_body
      %s39 = ssub.s32 %s34, 1
      %s40 = ssub.s32 %s34, 2
      %s41 = sadd.s32 %s34, 1
      %s42 = ssub.s32 %s34, %s41
      %p43 = scmp.eq.s32.totalorder %s42, 0
      %s45 = sadd.s32 %s44, 1
      %s46 = scalar_select %p43, %s44, %s45
      %p49 = pneg %p43
      %p50 = scmp.eq.s32.totalorder %s34, 3
      %p51 = por %p49, %p50
      %p52 = scmp.ne.s32.totalorder %s44, %s47
      %p53 = scmp.eq.s32.totalorder %s34, 0
      %p54 = por %p52, %p53
      %p55 = scmp.ne.s32.totalorder %s44, %s47
      %p56 = scmp.eq.s32.totalorder %s39, 3
      %p57 = por %p55, %p56
      %p58 = scmp.ne.s32.totalorder %s47, %s48
      %p59 = scmp.eq.s32.totalorder %s39, 0
      %p60 = por %p58, %p59
      %p61 = scmp.ne.s32.totalorder %s47, %s48
      %p62 = scmp.eq.s32.totalorder %s40, 3
      %p63 = por %p61, %p62
      %p65 = scmp.ne.s32.totalorder %s48, %s64
      %p66 = scmp.eq.s32.totalorder %s40, 0
      %p67 = por %p65, %p66
      %s69 = sadd.s32 %s68, 1
      %p72 = scmp.eq.s32.totalorder %s34, 3
      %p73 = scmp.ne.s32.totalorder %s68, %s70
      %p74 = scmp.eq.s32.totalorder %s34, 0
      %p75 = por %p73, %p74
      %p76 = scmp.ne.s32.totalorder %s68, %s70
      %p77 = scmp.eq.s32.totalorder %s39, 3
      %p78 = por %p76, %p77
      %p79 = scmp.ne.s32.totalorder %s70, %s71
      %p80 = scmp.eq.s32.totalorder %s39, 0
      %p81 = por %p79, %p80
      %p82 = scmp.ne.s32.totalorder %s70, %s71
      %p83 = scmp.eq.s32.totalorder %s40, 3
      %p84 = por %p82, %p83
      %p86 = scmp.ne.s32.totalorder %s71, %s85
      %p87 = scmp.eq.s32.totalorder %s40, 0
      %p88 = por %p86, %p87
      %s90 = sadd.s32 %s89, 1
      %p93 = scmp.eq.s32.totalorder %s34, 3
      %p94 = scmp.ne.s32.totalorder %s89, %s91
      %p95 = scmp.eq.s32.totalorder %s34, 0
      %p96 = por %p94, %p95
      %p97 = scmp.ne.s32.totalorder %s89, %s91
      %p98 = scmp.eq.s32.totalorder %s39, 3
      %p99 = por %p97, %p98
      %p100 = scmp.ne.s32.totalorder %s91, %s92
      %p101 = scmp.eq.s32.totalorder %s39, 0
      %p102 = por %p100, %p101
      %p103 = scmp.ne.s32.totalorder %s91, %s92
      %p104 = scmp.eq.s32.totalorder %s40, 3
      %p105 = por %p103, %p104
      %p107 = scmp.ne.s32.totalorder %s92, %s106
      %p108 = scmp.eq.s32.totalorder %s40, 0
      %p109 = por %p107, %p108
      %s111 = sadd.s32 %s110, 1
      %p114 = scmp.eq.s32.totalorder %s34, 3
      %p115 = scmp.ne.s32.totalorder %s110, %s112
      %p116 = scmp.eq.s32.totalorder %s34, 0
      %p117 = por %p115, %p116
      %p118 = scmp.ne.s32.totalorder %s110, %s112
      %p119 = scmp.eq.s32.totalorder %s39, 3
      %p120 = por %p118, %p119
      %p121 = scmp.ne.s32.totalorder %s112, %s113
      %p122 = scmp.eq.s32.totalorder %s39, 0
      %p123 = por %p121, %p122
      %p124 = scmp.ne.s32.totalorder %s112, %s113
      %p125 = scmp.eq.s32.totalorder %s40, 3
      %p126 = por %p124, %p125
      %p128 = scmp.ne.s32.totalorder %s113, %s127
      %p129 = scmp.eq.s32.totalorder %s40, 0
      %p130 = por %p128, %p129
      %s132 = sadd.s32 %s131, 1
      %p135 = scmp.eq.s32.totalorder %s34, 3
      %p136 = scmp.ne.s32.totalorder %s131, %s133
      %p137 = scmp.eq.s32.totalorder %s34, 0
      %p138 = por %p136, %p137
      %p139 = scmp.ne.s32.totalorder %s131, %s133
      %p140 = scmp.eq.s32.totalorder %s39, 3
      %p141 = por %p139, %p140
      %p142 = scmp.ne.s32.totalorder %s133, %s134
      %p143 = scmp.eq.s32.totalorder %s39, 0
      %p144 = por %p142, %p143
      %p145 = scmp.ne.s32.totalorder %s133, %s134
      %p146 = scmp.eq.s32.totalorder %s40, 3
      %p147 = por %p145, %p146
      %p149 = scmp.ne.s32.totalorder %s134, %s148
      %p150 = scmp.eq.s32.totalorder %s40, 0
      %p151 = por %p149, %p150
      %s153 = sadd.s32 %s152, 1
      %p156 = scmp.eq.s32.totalorder %s34, 3
      %p157 = scmp.ne.s32.totalorder %s152, %s154
      %p158 = scmp.eq.s32.totalorder %s34, 0
      %p159 = por %p157, %p158
      %p160 = scmp.ne.s32.totalorder %s152, %s154
      %p161 = scmp.eq.s32.totalorder %s39, 3
      %p162 = por %p160, %p161
      %p163 = scmp.ne.s32.totalorder %s154, %s155
      %p164 = scmp.eq.s32.totalorder %s39, 0
      %p165 = por %p163, %p164
      %p166 = scmp.ne.s32.totalorder %s154, %s155
      %p167 = scmp.eq.s32.totalorder %s40, 3
      %p168 = por %p166, %p167
      %p170 = scmp.ne.s32.totalorder %s155, %s169
      %p171 = scmp.eq.s32.totalorder %s40, 0
      %p172 = por %p170, %p171
      %s174 = sadd.s32 %s173, 1
      %p177 = scmp.eq.s32.totalorder %s34, 3
      %p178 = scmp.ne.s32.totalorder %s173, %s175
      %p179 = scmp.eq.s32.totalorder %s34, 0
      %p180 = por %p178, %p179
      %p181 = scmp.ne.s32.totalorder %s173, %s175
      %p182 = scmp.eq.s32.totalorder %s39, 3
      %p183 = por %p181, %p182
      %p184 = scmp.ne.s32.totalorder %s175, %s176
      %p185 = scmp.eq.s32.totalorder %s39, 0
      %p186 = por %p184, %p185
      %p187 = scmp.ne.s32.totalorder %s175, %s176
      %p188 = scmp.eq.s32.totalorder %s40, 3
      %p189 = por %p187, %p188
      %p191 = scmp.ne.s32.totalorder %s176, %s190
      %p192 = scmp.eq.s32.totalorder %s40, 0
      %p193 = por %p191, %p192
      %s195 = sadd.s32 %s194, 1
      %p198 = scmp.eq.s32.totalorder %s34, 3
      %p199 = scmp.ne.s32.totalorder %s194, %s196
      %p200 = scmp.eq.s32.totalorder %s34, 0
      %p201 = por %p199, %p200
      %p202 = scmp.ne.s32.totalorder %s194, %s196
      %p203 = scmp.eq.s32.totalorder %s39, 3
      %p204 = por %p202, %p203
      %p205 = scmp.ne.s32.totalorder %s196, %s197
      %p206 = scmp.eq.s32.totalorder %s39, 0
      %p207 = por %p205, %p206
      %p208 = scmp.ne.s32.totalorder %s196, %s197
      %p209 = scmp.eq.s32.totalorder %s40, 3
      %p210 = por %p208, %p209
      %p212 = scmp.ne.s32.totalorder %s197, %s211
      %p213 = scmp.eq.s32.totalorder %s40, 0
      %p214 = por %p212, %p213
      %s216 = sadd.s32 %s215, 1
      %p219 = scmp.eq.s32.totalorder %s34, 3
      %p220 = scmp.ne.s32.totalorder %s215, %s217
      %p221 = scmp.eq.s32.totalorder %s34, 0
      %p222 = por %p220, %p221
      %p223 = scmp.ne.s32.totalorder %s215, %s217
      %p224 = scmp.eq.s32.totalorder %s39, 3
      %p225 = por %p223, %p224
      %p226 = scmp.ne.s32.totalorder %s217, %s218
      %p227 = scmp.eq.s32.totalorder %s39, 0
      %p228 = por %p226, %p227
      %p229 = scmp.ne.s32.totalorder %s217, %s218
      %p230 = scmp.eq.s32.totalorder %s40, 3
      %p231 = por %p229, %p230
      %p233 = scmp.ne.s32.totalorder %s218, %s232
      %p234 = scmp.eq.s32.totalorder %s40, 0
      %p235 = por %p233, %p234
      %s237 = sadd.s32 %s236, 1
      %p240 = scmp.eq.s32.totalorder %s34, 3
      %p241 = scmp.ne.s32.totalorder %s236, %s238
      %p242 = scmp.eq.s32.totalorder %s34, 0
      %p243 = por %p241, %p242
      %p244 = scmp.ne.s32.totalorder %s236, %s238
      %p245 = scmp.eq.s32.totalorder %s39, 3
      %p246 = por %p244, %p245
      %p247 = scmp.ne.s32.totalorder %s238, %s239
      %p248 = scmp.eq.s32.totalorder %s39, 0
      %p249 = por %p247, %p248
      %p250 = scmp.ne.s32.totalorder %s238, %s239
      %p251 = scmp.eq.s32.totalorder %s40, 3
      %p252 = por %p250, %p251
      %p254 = scmp.ne.s32.totalorder %s239, %s253
      %p255 = scmp.eq.s32.totalorder %s40, 0
      %p256 = por %p254, %p255
      %s258 = sadd.s32 %s257, 1
      %p261 = scmp.eq.s32.totalorder %s34, 3
      %p262 = scmp.ne.s32.totalorder %s257, %s259
      %p263 = scmp.eq.s32.totalorder %s34, 0
      %p264 = por %p262, %p263
      %p265 = scmp.ne.s32.totalorder %s257, %s259
      %p266 = scmp.eq.s32.totalorder %s39, 3
      %p267 = por %p265, %p266
      %p268 = scmp.ne.s32.totalorder %s259, %s260
      %p269 = scmp.eq.s32.totalorder %s39, 0
      %p270 = por %p268, %p269
      %p271 = scmp.ne.s32.totalorder %s259, %s260
      %p272 = scmp.eq.s32.totalorder %s40, 3
      %p273 = por %p271, %p272
      %p275 = scmp.ne.s32.totalorder %s260, %s274
      %p276 = scmp.eq.s32.totalorder %s40, 0
      %p277 = por %p275, %p276
      %s279 = sadd.s32 %s278, 1
      %p282 = scmp.eq.s32.totalorder %s34, 3
      %p283 = scmp.ne.s32.totalorder %s278, %s280
      %p284 = scmp.eq.s32.totalorder %s34, 0
      %p285 = por %p283, %p284
      %p286 = scmp.ne.s32.totalorder %s278, %s280
      %p287 = scmp.eq.s32.totalorder %s39, 3
      %p288 = por %p286, %p287
      %p289 = scmp.ne.s32.totalorder %s280, %s281
      %p290 = scmp.eq.s32.totalorder %s39, 0
      %p291 = por %p289, %p290
      %p292 = scmp.ne.s32.totalorder %s280, %s281
      %p293 = scmp.eq.s32.totalorder %s40, 3
      %p294 = por %p292, %p293
      %p296 = scmp.ne.s32.totalorder %s281, %s295
      %p297 = scmp.eq.s32.totalorder %s40, 0
      %p298 = por %p296, %p297
      %s300 = sadd.s32 %s299, 1
      %p303 = scmp.eq.s32.totalorder %s34, 3
      %p304 = scmp.ne.s32.totalorder %s299, %s301
      %p305 = scmp.eq.s32.totalorder %s34, 0
      %p306 = por %p304, %p305
      %p307 = scmp.ne.s32.totalorder %s299, %s301
      %p308 = scmp.eq.s32.totalorder %s39, 3
      %p309 = por %p307, %p308
      %p310 = scmp.ne.s32.totalorder %s301, %s302
      %p311 = scmp.eq.s32.totalorder %s39, 0
      %p312 = por %p310, %p311
      %p313 = scmp.ne.s32.totalorder %s301, %s302
      %p314 = scmp.eq.s32.totalorder %s40, 3
      %p315 = por %p313, %p314
      %p317 = scmp.ne.s32.totalorder %s302, %s316
      %p318 = scmp.eq.s32.totalorder %s40, 0
      %p319 = por %p317, %p318
      %s321 = sadd.s32 %s320, 1
      %p324 = scmp.eq.s32.totalorder %s34, 3
      %p325 = scmp.ne.s32.totalorder %s320, %s322
      %p326 = scmp.eq.s32.totalorder %s34, 0
      %p327 = por %p325, %p326
      %p328 = scmp.ne.s32.totalorder %s320, %s322
      %p329 = scmp.eq.s32.totalorder %s39, 3
      %p330 = por %p328, %p329
      %p331 = scmp.ne.s32.totalorder %s322, %s323
      %p332 = scmp.eq.s32.totalorder %s39, 0
      %p333 = por %p331, %p332
      %p334 = scmp.ne.s32.totalorder %s322, %s323
      %p335 = scmp.eq.s32.totalorder %s40, 3
      %p336 = por %p334, %p335
      %p338 = scmp.ne.s32.totalorder %s323, %s337
      %p339 = scmp.eq.s32.totalorder %s40, 0
      %p340 = por %p338, %p339
      %s342 = sadd.s32 %s341, 1
      %p345 = scmp.eq.s32.totalorder %s34, 3
      %p346 = scmp.ne.s32.totalorder %s341, %s343
      %p347 = scmp.eq.s32.totalorder %s34, 0
      %p348 = por %p346, %p347
      %p349 = scmp.ne.s32.totalorder %s341, %s343
      %p350 = scmp.eq.s32.totalorder %s39, 3
      %p351 = por %p349, %p350
      %p352 = scmp.ne.s32.totalorder %s343, %s344
      %p353 = scmp.eq.s32.totalorder %s39, 0
      %p354 = por %p352, %p353
      %p355 = scmp.ne.s32.totalorder %s343, %s344
      %p356 = scmp.eq.s32.totalorder %s40, 3
      %p357 = por %p355, %p356
      %p359 = scmp.ne.s32.totalorder %s344, %s358
      %p360 = scmp.eq.s32.totalorder %s40, 0
      %p361 = por %p359, %p360
      %s362 = ssub.s32 %s34, %s41
      %p363 = scmp.eq.s32.totalorder %s362, 0
      %s365 = sadd.s32 %s364, 1
      %s366 = scalar_select %p363, %s364, %s365
      %p369 = pneg %p363
      %p370 = scmp.eq.s32.totalorder %s34, 3
      %p371 = por %p369, %p370
      %p372 = scmp.ne.s32.totalorder %s364, %s367
      %p373 = scmp.eq.s32.totalorder %s34, 0
      %p374 = por %p372, %p373
      %p375 = scmp.ne.s32.totalorder %s364, %s367
      %p376 = scmp.eq.s32.totalorder %s39, 3
      %p377 = por %p375, %p376
      %p378 = scmp.ne.s32.totalorder %s367, %s368
      %p379 = scmp.eq.s32.totalorder %s39, 0
      %p380 = por %p378, %p379
      %p381 = scmp.ne.s32.totalorder %s367, %s368
      %p382 = scmp.eq.s32.totalorder %s40, 3
      %p383 = por %p381, %p382
      %p385 = scmp.ne.s32.totalorder %s368, %s384
      %p386 = scmp.eq.s32.totalorder %s40, 0
      %p387 = por %p385, %p386
      %p388 = scmp.le.s32.totalorder 1, %s34
      %p389 = scmp.lt.s32.totalorder %s34, 5
      %p390 = pnand %p388, %p389
      %p391 = pneg %p390
      // Predicated region
      $region9: #{generator_forward.1} parent=5 // pred_check
        _
      $region10: #{generator_forward.1} parent=5 // pred_check_branch
        %393 = sbr.rel (%p390) target = $region12
      $region11: #{generator_forward.1} parent=5 // pred_region
        %s394 = ssub.s32 %s34, 1
        // Predicated region
        $region13: #{generator_forward.1} parent=11 // pred_check
          %p395 = pneg %p81
        $region14: #{generator_forward.1} parent=11 // pred_check_branch
          %397 = sbr.rel (%p395) target = $region16
        $region15: #{generator_forward.1} parent=11 // pred_region
          %s399 = ssub.s32 512, 512
          %400 = vsyncadd [#allocation6], %s399
          %s401 = sshll.u32 [#allocation5], 4
          %s402 = int_to_ptr.vmem [resolvable:$true] %s401
          %407 = dma.hbm_to_vmem [thread:$0]  %s1, 512, %s402, [#allocation6], 64, 64, 4
        $region16: #{generator_forward.1} parent=11 // pred_fallthru
          _
        // Predicated region
        $region17: #{generator_forward.1} parent=11 // pred_check
          %p408 = pneg %p102
        $region18: #{generator_forward.1} parent=11 // pred_check_branch
          %410 = sbr.rel (%p408) target = $region20
        $region19: #{generator_forward.1} parent=11 // pred_region
          %s412 = ssub.s32 16, 16
          %413 = vsyncadd [#allocation6], %s412
          %s415 = sshll.u32 [#allocation7], 4
          %s416 = int_to_ptr.vmem [resolvable:$true] %s415
          %418 = dma.hbm_to_vmem [thread:$0]  %s2, 16, %s416, [#allocation6]
        $region20: #{generator_forward.1} parent=11 // pred_fallthru
          _
        // Predicated region
        $region21: #{generator_forward.1} parent=11 // pred_check
          %p419 = pneg %p123
        $region22: #{generator_forward.1} parent=11 // pred_check_branch
          %421 = sbr.rel (%p419) target = $region24
        $region23: #{generator_forward.1} parent=11 // pred_region
          %s423 = ssub.s32 16, 16
          %424 = vsyncadd [#allocation9], %s423
          %s426 = sshll.u32 [#allocation8], 4
          %s427 = int_to_ptr.vmem [resolvable:$true] %s426
          %429 = dma.hbm_to_vmem [thread:$0]  %s3, 16, %s427, [#allocation9]
        $region24: #{generator_forward.1} parent=11 // pred_fallthru
          _
        // Predicated region
        $region25: #{generator_forward.1} parent=11 // pred_check
          %p430 = pneg %p144
        $region26: #{generator_forward.1} parent=11 // pred_check_branch
          %432 = sbr.rel (%p430) target = $region28
        $region27: #{generator_forward.1} parent=11 // pred_region
          %s434 = ssub.s32 2048, 2048
          %435 = vsyncadd [#allocation9], %s434
          %s436 = sshll.u32 [#allocation10], 4
          %s437 = int_to_ptr.vmem [resolvable:$true] %s436
          %442 = dma.hbm_to_vmem [thread:$0]  %s4, 2048, %s437, [#allocation9], 128, 128, 8
        $region28: #{generator_forward.1} parent=11 // pred_fallthru
          _
        // Predicated region
        $region29: #{generator_forward.1} parent=11 // pred_check
          %p443 = pneg %p165
        $region30: #{generator_forward.1} parent=11 // pred_check_branch
          %445 = sbr.rel (%p443) target = $region32
        $region31: #{generator_forward.1} parent=11 // pred_region
          %s447 = ssub.s32 32, 32
          %448 = vsyncadd [#allocation12], %s447
          %s450 = sshll.u32 [#allocation11], 4
          %s451 = int_to_ptr.vmem [resolvable:$true] %s450
          %453 = dma.hbm_to_vmem [thread:$0]  %s5, 32, %s451, [#allocation12]
        $region32: #{generator_forward.1} parent=11 // pred_fallthru
          _
        // Predicated region
        $region33: #{generator_forward.1} parent=11 // pred_check
          %p454 = pneg %p186
        $region34: #{generator_forward.1} parent=11 // pred_check_branch
          %456 = sbr.rel (%p454) target = $region36
        $region35: #{generator_forward.1} parent=11 // pred_region
          %s458 = ssub.s32 32, 32
          %459 = vsyncadd [#allocation12], %s458
          %s461 = sshll.u32 [#allocation13], 4
          %s462 = int_to_ptr.vmem [resolvable:$true] %s461
          %464 = dma.hbm_to_vmem [thread:$0]  %s6, 32, %s462, [#allocation12]
        $region36: #{generator_forward.1} parent=11 // pred_fallthru
          _
        // Predicated region
        $region37: #{generator_forward.1} parent=11 // pred_check
          %p465 = pneg %p207
        $region38: #{generator_forward.1} parent=11 // pred_check_branch
          %467 = sbr.rel (%p465) target = $region40
        $region39: #{generator_forward.1} parent=11 // pred_region
          %s469 = ssub.s32 8192, 8192
          %470 = vsyncadd [#allocation15], %s469
          %s471 = sshll.u32 [#allocation14], 4
          %s472 = int_to_ptr.vmem [resolvable:$true] %s471
          %477 = dma.hbm_to_vmem [thread:$0]  %s7, 8192, %s472, [#allocation15], 256, 256, 16
        $region40: #{generator_forward.1} parent=11 // pred_fallthru
          _
        // Predicated region
        $region41: #{generator_forward.1} parent=11 // pred_check
          %p478 = pneg %p228
        $region42: #{generator_forward.1} parent=11 // pred_check_branch
          %480 = sbr.rel (%p478) target = $region44
        $region43: #{generator_forward.1} parent=11 // pred_region
          %s482 = ssub.s32 64, 64
          %483 = vsyncadd [#allocation15], %s482
          %s485 = sshll.u32 [#allocation16], 4
          %s486 = int_to_ptr.vmem [resolvable:$true] %s485
          %488 = dma.hbm_to_vmem [thread:$0]  %s8, 64, %s486, [#allocation15]
        $region44: #{generator_forward.1} parent=11 // pred_fallthru
          _
        // Predicated region
        $region45: #{generator_forward.1} parent=11 // pred_check
          %p489 = pneg %p249
        $region46: #{generator_forward.1} parent=11 // pred_check_branch
          %491 = sbr.rel (%p489) target = $region48
        $region47: #{generator_forward.1} parent=11 // pred_region
          %s493 = ssub.s32 64, 64
          %494 = vsyncadd [#allocation18], %s493
          %s496 = sshll.u32 [#allocation17], 4
          %s497 = int_to_ptr.vmem [resolvable:$true] %s496
          %499 = dma.hbm_to_vmem [thread:$0]  %s9, 64, %s497, [#allocation18]
        $region48: #{generator_forward.1} parent=11 // pred_fallthru
          _
        // Predicated region
        $region49: #{generator_forward.1} parent=11 // pred_check
          %p500 = pneg %p270
        $region50: #{generator_forward.1} parent=11 // pred_check_branch
          %502 = sbr.rel (%p500) target = $region52
        $region51: #{generator_forward.1} parent=11 // pred_region
          %s504 = ssub.s32 32768, 32768
          %505 = vsyncadd [#allocation18], %s504
          %s506 = sshll.u32 [#allocation19], 4
          %s507 = int_to_ptr.vmem [resolvable:$true] %s506
          %512 = dma.hbm_to_vmem [thread:$0]  %s10, 32768, %s507, [#allocation18], 512, 512, 32
        $region52: #{generator_forward.1} parent=11 // pred_fallthru
          _
        // Predicated region
        $region53: #{generator_forward.1} parent=11 // pred_check
          %p513 = pneg %p291
        $region54: #{generator_forward.1} parent=11 // pred_check_branch
          %515 = sbr.rel (%p513) target = $region56
        $region55: #{generator_forward.1} parent=11 // pred_region
          %s517 = ssub.s32 128, 128
          %518 = vsyncadd [#allocation21], %s517
          %s520 = sshll.u32 [#allocation20], 4
          %s521 = int_to_ptr.vmem [resolvable:$true] %s520
          %523 = dma.hbm_to_vmem [thread:$0]  %s11, 128, %s521, [#allocation21]
        $region56: #{generator_forward.1} parent=11 // pred_fallthru
          _
        // Predicated region
        $region57: #{generator_forward.1} parent=11 // pred_check
          %p524 = pneg %p312
        $region58: #{generator_forward.1} parent=11 // pred_check_branch
          %526 = sbr.rel (%p524) target = $region60
        $region59: #{generator_forward.1} parent=11 // pred_region
          %s528 = ssub.s32 128, 128
          %529 = vsyncadd [#allocation21], %s528
          %s531 = sshll.u32 [#allocation22], 4
          %s532 = int_to_ptr.vmem [resolvable:$true] %s531
          %534 = dma.hbm_to_vmem [thread:$0]  %s12, 128, %s532, [#allocation21]
        $region60: #{generator_forward.1} parent=11 // pred_fallthru
          _
        // Predicated region
        $region61: #{generator_forward.1} parent=11 // pred_check
          %p535 = pneg %p333
        $region62: #{generator_forward.1} parent=11 // pred_check_branch
          %537 = sbr.rel (%p535) target = $region64
        $region63: #{generator_forward.1} parent=11 // pred_region
          %s539 = ssub.s32 57344, 57344
          %540 = vsyncadd [#allocation24], %s539
          %s541 = sshll.u32 [#allocation23], 4
          %s542 = int_to_ptr.vmem [resolvable:$true] %s541
          %547 = dma.hbm_to_vmem [thread:$0]  %s13, 57344, %s542, [#allocation24], 448, 448, 28
        $region64: #{generator_forward.1} parent=11 // pred_fallthru
          _
        // Predicated region
        $region65: #{generator_forward.1} parent=11 // pred_check
          %p548 = pneg %p354
        $region66: #{generator_forward.1} parent=11 // pred_check_branch
          %550 = sbr.rel (%p548) target = $region68
        $region67: #{generator_forward.1} parent=11 // pred_region
          %s552 = ssub.s32 112, 112
          %553 = vsyncadd [#allocation24], %s552
          %s555 = sshll.u32 [#allocation25], 4
          %s556 = int_to_ptr.vmem [resolvable:$true] %s555
          %558 = dma.hbm_to_vmem [thread:$0]  %s14, 112, %s556, [#allocation24]
        $region68: #{generator_forward.1} parent=11 // pred_fallthru
          _
      $region12: #{generator_forward.1} parent=5 // pred_fallthru
        _
      %p559 = scmp.lt.s32.totalorder %s34, 4
      // Predicated region
      $region69: #{generator_forward.1} parent=5 // pred_check
        %p560 = pneg %p559
      $region70: #{generator_forward.1} parent=5 // pred_check_branch
        %562 = sbr.rel (%p560) target = $region72
      $region71: #{generator_forward.1} parent=5 // pred_region
        // Predicated region
        $region73: #{generator_forward.1} parent=71 // pred_check
          %p563 = pneg %p54
        $region74: #{generator_forward.1} parent=71 // pred_check_branch
          %565 = sbr.rel (%p563) target = $region76
        $region75: #{generator_forward.1} parent=71 // pred_region
          %s566 = sand.u32 %s44, 1
          %s567 = scalar_lea.sflag [#allocation3], %s566
          %s568 = sand.u32 %s44, 1
          %s569 = smul.addr %s568, 8
          %s570 = scalar_lea.vmem [#allocation2], %s569
          %s572 = ssub.s32 128, 128
          %573 = vsyncadd %s567, %s572
          %s574 = smul.addr %s34, 128
          %s575 = scalar_lea.hbm %s0, %s574
          %s577 = sshll.u32 %s570, 4
          %s578 = int_to_ptr.vmem [resolvable:$true] %s577
          %580 = dma.hbm_to_vmem [thread:$0]  %s575, 128, %s578, %s567
        $region76: #{generator_forward.1} parent=71 // pred_fallthru
          _
      $region72: #{generator_forward.1} parent=5 // pred_fallthru
        _
      %p581 = scmp.le.s32.totalorder 1, %s34
      %p582 = scmp.lt.s32.totalorder %s34, 5
      %p583 = pnand %p581, %p582
      %p584 = pneg %p583
      // Predicated region
      $region77: #{generator_forward.1} parent=5 // pred_check
        _
      $region78: #{generator_forward.1} parent=5 // pred_check_branch
        %586 = sbr.rel (%p583) target = $region80
      $region79: #{generator_forward.1} parent=5 // pred_region
        %s587 = ssub.s32 %s34, 1
        %s588 = sand.u32 %s47, 1
        %s589 = scalar_lea.sflag [#allocation3], %s588
        %s590 = sand.u32 %s47, 1
        %s591 = smul.addr %s590, 8
        %s592 = scalar_lea.vmem [#allocation2], %s591
        // Predicated region
        $region81: #{generator_forward.1} parent=79 // pred_check
          %p593 = pneg %p60
        $region82: #{generator_forward.1} parent=79 // pred_check_branch
          %595 = sbr.rel (%p593) target = $region84
        $region83: #{generator_forward.1} parent=79 // pred_region
          %596 = dma.done %s589, 128
        $region84: #{generator_forward.1} parent=79 // pred_fallthru
          _
        // Predicated region
        $region85: #{generator_forward.1} parent=79 // pred_check
          %p597 = pneg %p81
        $region86: #{generator_forward.1} parent=79 // pred_check_branch
          %599 = sbr.rel (%p597) target = $region88
        $region87: #{generator_forward.1} parent=79 // pred_region
          %600 = dma.done [#allocation6], 512
        $region88: #{generator_forward.1} parent=79 // pred_fallthru
          _
        // Predicated region
        $region89: #{generator_forward.1} parent=79 // pred_check
          %p601 = pneg %p102
        $region90: #{generator_forward.1} parent=79 // pred_check_branch
          %603 = sbr.rel (%p601) target = $region92
        $region91: #{generator_forward.1} parent=79 // pred_region
          %604 = dma.done [#allocation6], 16
        $region92: #{generator_forward.1} parent=79 // pred_fallthru
          _
        // Predicated region
        $region93: #{generator_forward.1} parent=79 // pred_check
          %p605 = pneg %p123
        $region94: #{generator_forward.1} parent=79 // pred_check_branch
          %607 = sbr.rel (%p605) target = $region96
        $region95: #{generator_forward.1} parent=79 // pred_region
          %608 = dma.done [#allocation9], 16
        $region96: #{generator_forward.1} parent=79 // pred_fallthru
          _
        // Predicated region
        $region97: #{generator_forward.1} parent=79 // pred_check
          %p609 = pneg %p144
        $region98: #{generator_forward.1} parent=79 // pred_check_branch
          %611 = sbr.rel (%p609) target = $region100
        $region99: #{generator_forward.1} parent=79 // pred_region
          %612 = dma.done [#allocation9], 2048
        $region100: #{generator_forward.1} parent=79 // pred_fallthru
          _
        // Predicated region
        $region101: #{generator_forward.1} parent=79 // pred_check
          %p613 = pneg %p165
        $region102: #{generator_forward.1} parent=79 // pred_check_branch
          %615 = sbr.rel (%p613) target = $region104
        $region103: #{generator_forward.1} parent=79 // pred_region
          %616 = dma.done [#allocation12], 32
        $region104: #{generator_forward.1} parent=79 // pred_fallthru
          _
        // Predicated region
        $region105: #{generator_forward.1} parent=79 // pred_check
          %p617 = pneg %p186
        $region106: #{generator_forward.1} parent=79 // pred_check_branch
          %619 = sbr.rel (%p617) target = $region108
        $region107: #{generator_forward.1} parent=79 // pred_region
          %620 = dma.done [#allocation12], 32
        $region108: #{generator_forward.1} parent=79 // pred_fallthru
          _
        // Predicated region
        $region109: #{generator_forward.1} parent=79 // pred_check
          %p621 = pneg %p207
        $region110: #{generator_forward.1} parent=79 // pred_check_branch
          %623 = sbr.rel (%p621) target = $region112
        $region111: #{generator_forward.1} parent=79 // pred_region
          %624 = dma.done [#allocation15], 8192
        $region112: #{generator_forward.1} parent=79 // pred_fallthru
          _
        // Predicated region
        $region113: #{generator_forward.1} parent=79 // pred_check
          %p625 = pneg %p228
        $region114: #{generator_forward.1} parent=79 // pred_check_branch
          %627 = sbr.rel (%p625) target = $region116
        $region115: #{generator_forward.1} parent=79 // pred_region
          %628 = dma.done [#allocation15], 64
        $region116: #{generator_forward.1} parent=79 // pred_fallthru
          _
        // Predicated region
        $region117: #{generator_forward.1} parent=79 // pred_check
          %p629 = pneg %p249
        $region118: #{generator_forward.1} parent=79 // pred_check_branch
          %631 = sbr.rel (%p629) target = $region120
        $region119: #{generator_forward.1} parent=79 // pred_region
          %632 = dma.done [#allocation18], 64
        $region120: #{generator_forward.1} parent=79 // pred_fallthru
          _
        // Predicated region
        $region121: #{generator_forward.1} parent=79 // pred_check
          %p633 = pneg %p270
        $region122: #{generator_forward.1} parent=79 // pred_check_branch
          %635 = sbr.rel (%p633) target = $region124
        $region123: #{generator_forward.1} parent=79 // pred_region
          %636 = dma.done [#allocation18], 32768
        $region124: #{generator_forward.1} parent=79 // pred_fallthru
          _
        // Predicated region
        $region125: #{generator_forward.1} parent=79 // pred_check
          %p637 = pneg %p291
        $region126: #{generator_forward.1} parent=79 // pred_check_branch
          %639 = sbr.rel (%p637) target = $region128
        $region127: #{generator_forward.1} parent=79 // pred_region
          %640 = dma.done [#allocation21], 128
        $region128: #{generator_forward.1} parent=79 // pred_fallthru
          _
        // Predicated region
        $region129: #{generator_forward.1} parent=79 // pred_check
          %p641 = pneg %p312
        $region130: #{generator_forward.1} parent=79 // pred_check_branch
          %643 = sbr.rel (%p641) target = $region132
        $region131: #{generator_forward.1} parent=79 // pred_region
          %644 = dma.done [#allocation21], 128
        $region132: #{generator_forward.1} parent=79 // pred_fallthru
          _
        // Predicated region
        $region133: #{generator_forward.1} parent=79 // pred_check
          %p645 = pneg %p333
        $region134: #{generator_forward.1} parent=79 // pred_check_branch
          %647 = sbr.rel (%p645) target = $region136
        $region135: #{generator_forward.1} parent=79 // pred_region
          %648 = dma.done [#allocation24], 57344
        $region136: #{generator_forward.1} parent=79 // pred_fallthru
          _
        // Predicated region
        $region137: #{generator_forward.1} parent=79 // pred_check
          %p649 = pneg %p354
        $region138: #{generator_forward.1} parent=79 // pred_check_branch
          %651 = sbr.rel (%p649) target = $region140
        $region139: #{generator_forward.1} parent=79 // pred_region
          %652 = dma.done [#allocation24], 112
        $region140: #{generator_forward.1} parent=79 // pred_fallthru
          _
        %s653 = sand.u32 %s47, 1
        %s654 = scalar_lea.sflag [#allocation3], %s653
        %s655 = sand.u32 %s47, 1
        %s656 = smul.addr %s655, 8
        %s657 = scalar_lea.vmem [#allocation2], %s656
        %p658 = pneg %p60
        %p659 = pneg %p57
        %p660 = pneg %p81
        %p661 = pneg %p78
        %p662 = pneg %p102
        %p663 = pneg %p99
        %p664 = pneg %p123
        %p665 = pneg %p120
        %p666 = pneg %p144
        %p667 = pneg %p141
        %p668 = pneg %p165
        %p669 = pneg %p162
        %p670 = pneg %p186
        %p671 = pneg %p183
        %p672 = pneg %p207
        %p673 = pneg %p204
        %p674 = pneg %p228
        %p675 = pneg %p225
        %p676 = pneg %p249
        %p677 = pneg %p246
        %p678 = pneg %p270
        %p679 = pneg %p267
        %p680 = pneg %p291
        %p681 = pneg %p288
        %p682 = pneg %p312
        %p683 = pneg %p309
        %p684 = pneg %p333
        %p685 = pneg %p330
        %p686 = pneg %p354
        %p687 = pneg %p351
        %p688 = pneg %p380
        %p689 = pneg %p377
        %s690 = sand.u32 %s367, 1
        %s691 = scalar_lea.sflag [#allocation4], %s690
        %s692 = sand.u32 %s367, 1
        %s693 = smul.addr %s692, 56
        %s694 = scalar_lea.vmem [#allocation26], %s693
        %v695 = vld [vmem:[%s592] sm:$0xff]
        %v696 = vld [vmem:[#allocation5] sm:$0xf]
        %v697 = vld [vmem:[#allocation5 + $0x4] sm:$0xf]
        %v698 = vld [vmem:[#allocation5 + $0x8] sm:$0xf]
        %v699 = vld [vmem:[#allocation5 + $0xc] sm:$0xf]
        %v700 = vld [vmem:[#allocation5 + $0x10] sm:$0xf]
        %v701 = vld [vmem:[#allocation5 + $0x14] sm:$0xf]
        %v702 = vld [vmem:[#allocation5 + $0x18] sm:$0xf]
        %v703 = vld [vmem:[#allocation5 + $0x1c] sm:$0xf]
        %v704 = vunpack.c.l.bf16 %v696
        %v705 = vunpack.c.l.bf16 %v697
        %v706 = vunpack.c.l.bf16 %v698
        %v707 = vunpack.c.l.bf16 %v699
        %v708 = vunpack.c.l.bf16 %v700
        %v709 = vunpack.c.l.bf16 %v701
        %v710 = vunpack.c.l.bf16 %v702
        %v711 = vunpack.c.l.bf16 %v703
        %vm712 = vcmask 523264
        %v714 = vsel %vm712, %v695, 0
        %716 = vmatprep.subr.mxu0 0.0
        %717 = vmatpush1.msra.mxu0 0.0
        %718 = vmatprep.subr.mxu0 0.0
        %719 = vmatpush1.msra.mxu0 0.0
        %720 = vmatprep.subr.mxu0 0.0
        %721 = vmatpush1.msra.mxu0 0.0
        %722 = vmatprep.subr.mxu0 0.0
        %723 = vmatpush1.msra.mxu0 0.0
        %724 = vmatprep.subr.mxu0 0.0
        %725 = vmatpush1.msra.mxu0 0.0
        %726 = vmatprep.subr.mxu0 0.0
        %727 = vmatpush1.msra.mxu0 0.0
        %728 = vmatprep.subr.mxu0 0.0
        %729 = vmatpush1.msra.mxu0 0.0
        %730 = vmatprep.subr.mxu0 0.0
        %731 = vmatpush1.msra.mxu0 0.0
        %732 = vmatprep.subr.mxu0 0.0
        %733 = vmatpush1.msra.mxu0 %v711
        %734 = vmatprep.subr.mxu0 0.0
        %735 = vmatpush1.msra.mxu0 %v710
        %736 = vmatprep.subr.mxu0 0.0
        %737 = vmatpush1.msra.mxu0 %v709
        %738 = vmatprep.subr.mxu0 0.0
        %739 = vmatpush1.msra.mxu0 %v708
        %740 = vmatprep.subr.mxu0 0.0
        %741 = vmatpush1.msra.mxu0 %v707
        %742 = vmatprep.subr.mxu0 0.0
        %743 = vmatpush1.msra.mxu0 %v706
        %744 = vmatprep.subr.mxu0 0.0
        %745 = vmatpush1.msra.mxu0 %v705
        %746 = vmatprep.subr.mxu0 0.0
        %747 = vmatpush1.msra.mxu0 %v704
        %748 = vmatprep.subr.mxu0 0.0
        %749 = vmatpush2.msra.mxu0 0.0
        %750 = vmatprep.subr.mxu0 0.0
        %751 = vmatpush2.msra.mxu0 0.0
        %752 = vmatprep.subr.mxu0 0.0
        %753 = vmatpush2.msra.mxu0 0.0
        %754 = vmatprep.subr.mxu0 0.0
        %755 = vmatpush2.msra.mxu0 0.0
        %756 = vmatprep.subr.mxu0 0.0
        %757 = vmatpush2.msra.mxu0 0.0
        %758 = vmatprep.subr.mxu0 0.0
        %759 = vmatpush2.msra.mxu0 0.0
        %760 = vmatprep.subr.mxu0 0.0
        %761 = vmatpush2.msra.mxu0 0.0
        %762 = vmatprep.subr.mxu0 0.0
        %763 = vmatpush2.msra.mxu0 0.0
        %764 = vmatprep.subr.mxu0 0.0
        %765 = vmatpush2.msra.mxu0 0.0
        %766 = vmatprep.subr.mxu0 0.0
        %767 = vmatpush2.msra.mxu0 0.0
        %768 = vmatprep.subr.mxu0 0.0
        %769 = vmatpush2.msra.mxu0 0.0
        %770 = vmatprep.subr.mxu0 0.0
        %771 = vmatpush2.msra.mxu0 0.0
        %772 = vmatprep.subr.mxu0 0.0
        %773 = vmatpush2.msra.mxu0 0.0
        %774 = vmatprep.subr.mxu0 0.0
        %775 = vmatpush2.msra.mxu0 0.0
        %776 = vmatprep.subr.mxu0 0.0
        %777 = vmatpush2.msra.mxu0 0.0
        %778 = vmatprep.subr.mxu0 0.0
        %779 = vmatpush2.msra.mxu0 0.0
        %780 = vmatprep.mubr.f32.mxu0 0.0
        %781 = vmatmul.mubr.f32.gmra.mxu0 %v714
        %v782 = vpop.f32.mrf.mxu0
        %v783 = vadd.f32 0.0, %v782
        %v784 = vpop.f32.mrf.mxu0
        %785 = vdwg.mxu0
        %v786 = vrot.slane %v783, 4
        %v787 = vadd.f32 %v783, %v786
        %v788 = vrot.slane %v787, 2
        %v789 = vadd.f32 %v787, %v788
        %v790 = vrot.slane %v789, 1
        %v791 = vadd.f32 %v789, %v790
        %v792 = vrcp.pop 8.0
        %v793 = vmul.f32 %v791, %v792
        %v794 = vsub.f32 %v783, %v793
        %v795 = vmul.f32 %v794, %v794
        %v796 = vrot.slane %v795, 4
        %v797 = vadd.f32 %v795, %v796
        %v798 = vrot.slane %v797, 2
        %v799 = vadd.f32 %v797, %v798
        %v800 = vrot.slane %v799, 1
        %v801 = vadd.f32 %v799, %v800
        %v802 = vmul.f32 %v801, %v792
        %v803 = vld [vmem:[#allocation7] sm:$0x1]
        %v804 = vadd.f32 %v802, 1e-05
        %v805 = vrsqrt.pop %v804
        %v806 = vmul.f32 %v803, %v805
        %v808 = vlaneseq
        %v809 = vshrl.u32 %v808, 7
        %v810 = vsub.s32 0, %v809
        %v811 = vrot.slane %v806, %v810
        %v813 = vmul.f32 %v794, %v811
        %v814 = vld [vmem:[#allocation8] sm:$0x1]
        %v816 = vlaneseq
        %v817 = vshrl.u32 %v816, 7
        %v818 = vsub.s32 0, %v817
        %v819 = vrot.slane %v814, %v818
        %v821 = vadd.f32 %v813, %v819
        %v822 = vmax.f32 %v821, 0.0
        %v823 = vld [vmem:[#allocation10] sm:$0xff]
        %v824 = vld [vmem:[#allocation10 + $0x8] sm:$0xff]
        %v825 = vld [vmem:[#allocation10 + $0x10] sm:$0xff]
        %v826 = vld [vmem:[#allocation10 + $0x18] sm:$0xff]
        %v827 = vld [vmem:[#allocation10 + $0x20] sm:$0xff]
        %v828 = vld [vmem:[#allocation10 + $0x28] sm:$0xff]
        %v829 = vld [vmem:[#allocation10 + $0x30] sm:$0xff]
        %v830 = vld [vmem:[#allocation10 + $0x38] sm:$0xff]
        %v831 = vld [vmem:[#allocation10 + $0x40] sm:$0xff]
        %v832 = vld [vmem:[#allocation10 + $0x48] sm:$0xff]
        %v833 = vld [vmem:[#allocation10 + $0x50] sm:$0xff]
        %v834 = vld [vmem:[#allocation10 + $0x58] sm:$0xff]
        %v835 = vld [vmem:[#allocation10 + $0x60] sm:$0xff]
        %v836 = vld [vmem:[#allocation10 + $0x68] sm:$0xff]
        %v837 = vld [vmem:[#allocation10 + $0x70] sm:$0xff]
        %v838 = vld [vmem:[#allocation10 + $0x78] sm:$0xff]
        %v839 = vunpack.c.l.bf16 %v823
        %v840 = vunpack.c.h.bf16 %v823
        %v841 = vunpack.c.l.bf16 %v824
        %v842 = vunpack.c.h.bf16 %v824
        %v843 = vunpack.c.l.bf16 %v825
        %v844 = vunpack.c.h.bf16 %v825
        %v845 = vunpack.c.l.bf16 %v826
        %v846 = vunpack.c.h.bf16 %v826
        %v847 = vunpack.c.l.bf16 %v827
        %v848 = vunpack.c.h.bf16 %v827
        %v849 = vunpack.c.l.bf16 %v828
        %v850 = vunpack.c.h.bf16 %v828
        %v851 = vunpack.c.l.bf16 %v829
        %v852 = vunpack.c.h.bf16 %v829
        %v853 = vunpack.c.l.bf16 %v830
        %v854 = vunpack.c.h.bf16 %v830
        %v855 = vunpack.c.l.bf16 %v831
        %v856 = vunpack.c.h.bf16 %v831
        %v857 = vunpack.c.l.bf16 %v832
        %v858 = vunpack.c.h.bf16 %v832
        %v859 = vunpack.c.l.bf16 %v833
        %v860 = vunpack.c.h.bf16 %v833
        %v861 = vunpack.c.l.bf16 %v834
        %v862 = vunpack.c.h.bf16 %v834
        %v863 = vunpack.c.l.bf16 %v835
        %v864 = vunpack.c.h.bf16 %v835
        %v865 = vunpack.c.l.bf16 %v836
        %v866 = vunpack.c.h.bf16 %v836
        %v867 = vunpack.c.l.bf16 %v837
        %v868 = vunpack.c.h.bf16 %v837
        %v869 = vunpack.c.l.bf16 %v838
        %v870 = vunpack.c.h.bf16 %v838
        %871 = vmatprep.subr.mxu0 %v870
        %872 = vmatpush1.msra.mxu0 %v869
        %873 = vmatprep.subr.mxu0 %v868
        %874 = vmatpush1.msra.mxu0 %v867
        %875 = vmatprep.subr.mxu0 %v866
        %876 = vmatpush1.msra.mxu0 %v865
        %877 = vmatprep.subr.mxu0 %v864
        %878 = vmatpush1.msra.mxu0 %v863
        %879 = vmatprep.subr.mxu0 %v862
        %880 = vmatpush1.msra.mxu0 %v861
        %881 = vmatprep.subr.mxu0 %v860
        %882 = vmatpush1.msra.mxu0 %v859
        %883 = vmatprep.subr.mxu0 %v858
        %884 = vmatpush1.msra.mxu0 %v857
        %885 = vmatprep.subr.mxu0 %v856
        %886 = vmatpush1.msra.mxu0 %v855
        %887 = vmatprep.subr.mxu0 %v854
        %888 = vmatpush1.msra.mxu0 %v853
        %889 = vmatprep.subr.mxu0 %v852
        %890 = vmatpush1.msra.mxu0 %v851
        %891 = vmatprep.subr.mxu0 %v850
        %892 = vmatpush1.msra.mxu0 %v849
        %893 = vmatprep.subr.mxu0 %v848
        %894 = vmatpush1.msra.mxu0 %v847
        %895 = vmatprep.subr.mxu0 %v846
        %896 = vmatpush1.msra.mxu0 %v845
        %897 = vmatprep.subr.mxu0 %v844
        %898 = vmatpush1.msra.mxu0 %v843
        %899 = vmatprep.subr.mxu0 %v842
        %900 = vmatpush1.msra.mxu0 %v841
        %901 = vmatprep.subr.mxu0 %v840
        %902 = vmatpush1.msra.mxu0 %v839
        %903 = vmatprep.subr.mxu0 0.0
        %904 = vmatpush2.msra.mxu0 0.0
        %905 = vmatprep.subr.mxu0 0.0
        %906 = vmatpush2.msra.mxu0 0.0
        %907 = vmatprep.subr.mxu0 0.0
        %908 = vmatpush2.msra.mxu0 0.0
        %909 = vmatprep.subr.mxu0 0.0
        %910 = vmatpush2.msra.mxu0 0.0
        %911 = vmatprep.subr.mxu0 0.0
        %912 = vmatpush2.msra.mxu0 0.0
        %913 = vmatprep.subr.mxu0 0.0
        %914 = vmatpush2.msra.mxu0 0.0
        %915 = vmatprep.subr.mxu0 0.0
        %916 = vmatpush2.msra.mxu0 0.0
        %917 = vmatprep.subr.mxu0 0.0
        %918 = vmatpush2.msra.mxu0 0.0
        %919 = vmatprep.subr.mxu0 0.0
        %920 = vmatpush2.msra.mxu0 0.0
        %921 = vmatprep.subr.mxu0 0.0
        %922 = vmatpush2.msra.mxu0 0.0
        %923 = vmatprep.subr.mxu0 0.0
        %924 = vmatpush2.msra.mxu0 0.0
        %925 = vmatprep.subr.mxu0 0.0
        %926 = vmatpush2.msra.mxu0 0.0
        %927 = vmatprep.subr.mxu0 0.0
        %928 = vmatpush2.msra.mxu0 0.0
        %929 = vmatprep.subr.mxu0 0.0
        %930 = vmatpush2.msra.mxu0 0.0
        %931 = vmatprep.subr.mxu0 0.0
        %932 = vmatpush2.msra.mxu0 0.0
        %933 = vmatprep.subr.mxu0 0.0
        %934 = vmatpush2.msra.mxu0 0.0
        %935 = vmatprep.mubr.f32.mxu0 0.0
        %936 = vmatmul.mubr.f32.gmra.mxu0 %v822
        %v937 = vpop.f32.mrf.mxu0
        %v938 = vadd.f32 0.0, %v937
        %v939 = vpop.f32.mrf.mxu0
        %v940 = vadd.f32 0.0, %v939
        %941 = vdwg.mxu0
        %v942 = vrot.slane %v938, 4
        %v943 = vadd.f32 %v938, %v942
        %v944 = vrot.slane %v943, 2
        %v945 = vadd.f32 %v943, %v944
        %v946 = vrot.slane %v945, 1
        %v947 = vadd.f32 %v945, %v946
        %v948 = vrot.slane %v940, 4
        %v949 = vadd.f32 %v940, %v948
        %v950 = vrot.slane %v949, 2
        %v951 = vadd.f32 %v949, %v950
        %v952 = vrot.slane %v951, 1
        %v953 = vadd.f32 %v951, %v952
        %v954 = vmul.f32 %v947, %v792
        %v955 = vmul.f32 %v953, %v792
        %v956 = vsub.f32 %v938, %v954
        %v957 = vsub.f32 %v940, %v955
        %v958 = vmul.f32 %v956, %v956
        %v959 = vmul.f32 %v957, %v957
        %v960 = vrot.slane %v958, 4
        %v961 = vadd.f32 %v958, %v960
        %v962 = vrot.slane %v961, 2
        %v963 = vadd.f32 %v961, %v962
        %v964 = vrot.slane %v963, 1
        %v965 = vadd.f32 %v963, %v964
        %v966 = vrot.slane %v959, 4
        %v967 = vadd.f32 %v959, %v966
        %v968 = vrot.slane %v967, 2
        %v969 = vadd.f32 %v967, %v968
        %v970 = vrot.slane %v969, 1
        %v971 = vadd.f32 %v969, %v970
        %v972 = vmul.f32 %v965, %v792
        %v973 = vmul.f32 %v971, %v792
        %v974 = vld [vmem:[#allocation11] sm:$0x3]
        %v975 = vadd.f32 %v972, 1e-05
        %v976 = vadd.f32 %v973, 1e-05
        %v977 = vrsqrt.pop %v975
        %v978 = vrsqrt.pop %v976
        %v981 = vcombine.low %v977, %v978
        %v983 = vunpack.c.l.s4 1966171168
        %v984 = vunpack.c.0.s8 %v983
        %v985 = vlaneseq
        %v986 = vshrl.u32 %v985, 7
        %v987 = vsub.s32 %v984, %v986
        %v988 = vrot.slane %v981, %v987
        %v990 = vunpack.c.l.s4 1966171168
        %v991 = vunpack.c.0.s8 %v990
        %v992 = vlaneseq
        %v993 = vshrl.u32 %v992, 7
        %v994 = vsub.s32 %v991, %v993
        %v995 = vrot.slane %v988, %v994
        %v997 = vmul.f32 %v974, %v995
        %v999 = vlaneseq
        %v1000 = vshrl.u32 %v999, 7
        %v1001 = vsub.s32 0, %v1000
        %v1002 = vrot.slane %v997, %v1001
        %v1003 = vlaneseq
        %v1004 = vshrl.u32 %v1003, 7
        %v1005 = vsub.s32 1, %v1004
        %v1006 = vrot.slane %v997, %v1005
        %v1009 = vmul.f32 %v956, %v1002
        %v1010 = vmul.f32 %v957, %v1006
        %v1011 = vld [vmem:[#allocation13] sm:$0x3]
        %v1013 = vlaneseq
        %v1014 = vshrl.u32 %v1013, 7
        %v1015 = vsub.s32 0, %v1014
        %v1016 = vrot.slane %v1011, %v1015
        %v1017 = vlaneseq
        %v1018 = vshrl.u32 %v1017, 7
        %v1019 = vsub.s32 1, %v1018
        %v1020 = vrot.slane %v1011, %v1019
        %v1023 = vadd.f32 %v1009, %v1016
        %v1024 = vadd.f32 %v1010, %v1020
        %v1025 = vmax.f32 %v1023, 0.0
        %v1026 = vmax.f32 %v1024, 0.0
        %v1027 = vld [vmem:[#allocation14] sm:$0xff]
        %v1028 = vld [vmem:[#allocation14 + $0x8] sm:$0xff]
        %v1029 = vld [vmem:[#allocation14 + $0x10] sm:$0xff]
        %v1030 = vld [vmem:[#allocation14 + $0x18] sm:$0xff]
        %v1031 = vld [vmem:[#allocation14 + $0x20] sm:$0xff]
        %v1032 = vld [vmem:[#allocation14 + $0x28] sm:$0xff]
        %v1033 = vld [vmem:[#allocation14 + $0x30] sm:$0xff]
        %v1034 = vld [vmem:[#allocation14 + $0x38] sm:$0xff]
        %v1035 = vld [vmem:[#allocation14 + $0x40] sm:$0xff]
        %v1036 = vld [vmem:[#allocation14 + $0x48] sm:$0xff]
        %v1037 = vld [vmem:[#allocation14 + $0x50] sm:$0xff]
        %v1038 = vld [vmem:[#allocation14 + $0x58] sm:$0xff]
        %v1039 = vld [vmem:[#allocation14 + $0x60] sm:$0xff]
        %v1040 = vld [vmem:[#allocation14 + $0x68] sm:$0xff]
        %v1041 = vld [vmem:[#allocation14 + $0x70] sm:$0xff]
        %v1042 = vld [vmem:[#allocation14 + $0x78] sm:$0xff]
        %v1043 = vld [vmem:[#allocation14 + $0x80] sm:$0xff]
        %v1044 = vld [vmem:[#allocation14 + $0x88] sm:$0xff]
        %v1045 = vld [vmem:[#allocation14 + $0x90] sm:$0xff]
        %v1046 = vld [vmem:[#allocation14 + $0x98] sm:$0xff]
        %v1047 = vld [vmem:[#allocation14 + $0xa0] sm:$0xff]
        %v1048 = vld [vmem:[#allocation14 + $0xa8] sm:$0xff]
        %v1049 = vld [vmem:[#allocation14 + $0xb0] sm:$0xff]
        %v1050 = vld [vmem:[#allocation14 + $0xb8] sm:$0xff]
        %v1051 = vld [vmem:[#allocation14 + $0xc0] sm:$0xff]
        %v1052 = vld [vmem:[#allocation14 + $0xc8] sm:$0xff]
        %v1053 = vld [vmem:[#allocation14 + $0xd0] sm:$0xff]
        %v1054 = vld [vmem:[#allocation14 + $0xd8] sm:$0xff]
        %v1055 = vld [vmem:[#allocation14 + $0xe0] sm:$0xff]
        %v1056 = vld [vmem:[#allocation14 + $0xe8] sm:$0xff]
        %v1057 = vld [vmem:[#allocation14 + $0xf0] sm:$0xff]
        %v1058 = vld [vmem:[#allocation14 + $0xf8] sm:$0xff]
        %v1059 = vld [vmem:[#allocation14 + $0x100] sm:$0xff]
        %v1060 = vld [vmem:[#allocation14 + $0x108] sm:$0xff]
        %v1061 = vld [vmem:[#allocation14 + $0x110] sm:$0xff]
        %v1062 = vld [vmem:[#allocation14 + $0x118] sm:$0xff]
        %v1063 = vld [vmem:[#allocation14 + $0x120] sm:$0xff]
        %v1064 = vld [vmem:[#allocation14 + $0x128] sm:$0xff]
        %v1065 = vld [vmem:[#allocation14 + $0x130] sm:$0xff]
        %v1066 = vld [vmem:[#allocation14 + $0x138] sm:$0xff]
        %v1067 = vld [vmem:[#allocation14 + $0x140] sm:$0xff]
        %v1068 = vld [vmem:[#allocation14 + $0x148] sm:$0xff]
        %v1069 = vld [vmem:[#allocation14 + $0x150] sm:$0xff]
        %v1070 = vld [vmem:[#allocation14 + $0x158] sm:$0xff]
        %v1071 = vld [vmem:[#allocation14 + $0x160] sm:$0xff]
        %v1072 = vld [vmem:[#allocation14 + $0x168] sm:$0xff]
        %v1073 = vld [vmem:[#allocation14 + $0x170] sm:$0xff]
        %v1074 = vld [vmem:[#allocation14 + $0x178] sm:$0xff]
        %v1075 = vld [vmem:[#allocation14 + $0x180] sm:$0xff]
        %v1076 = vld [vmem:[#allocation14 + $0x188] sm:$0xff]
        %v1077 = vld [vmem:[#allocation14 + $0x190] sm:$0xff]
        %v1078 = vld [vmem:[#allocation14 + $0x198] sm:$0xff]
        %v1079 = vld [vmem:[#allocation14 + $0x1a0] sm:$0xff]
        %v1080 = vld [vmem:[#allocation14 + $0x1a8] sm:$0xff]
        %v1081 = vld [vmem:[#allocation14 + $0x1b0] sm:$0xff]
        %v1082 = vld [vmem:[#allocation14 + $0x1b8] sm:$0xff]
        %v1083 = vld [vmem:[#allocation14 + $0x1c0] sm:$0xff]
        %v1084 = vld [vmem:[#allocation14 + $0x1c8] sm:$0xff]
        %v1085 = vld [vmem:[#allocation14 + $0x1d0] sm:$0xff]
        %v1086 = vld [vmem:[#allocation14 + $0x1d8] sm:$0xff]
        %v1087 = vld [vmem:[#allocation14 + $0x1e0] sm:$0xff]
        %v1088 = vld [vmem:[#allocation14 + $0x1e8] sm:$0xff]
        %v1089 = vld [vmem:[#allocation14 + $0x1f0] sm:$0xff]
        %v1090 = vld [vmem:[#allocation14 + $0x1f8] sm:$0xff]
        %v1091 = vunpack.c.l.bf16 %v1027
        %v1092 = vunpack.c.h.bf16 %v1027
        %v1093 = vunpack.c.l.bf16 %v1028
        %v1094 = vunpack.c.h.bf16 %v1028
        %v1095 = vunpack.c.l.bf16 %v1029
        %v1096 = vunpack.c.h.bf16 %v1029
        %v1097 = vunpack.c.l.bf16 %v1030
        %v1098 = vunpack.c.h.bf16 %v1030
        %v1099 = vunpack.c.l.bf16 %v1031
        %v1100 = vunpack.c.h.bf16 %v1031
        %v1101 = vunpack.c.l.bf16 %v1032
        %v1102 = vunpack.c.h.bf16 %v1032
        %v1103 = vunpack.c.l.bf16 %v1033
        %v1104 = vunpack.c.h.bf16 %v1033
        %v1105 = vunpack.c.l.bf16 %v1034
        %v1106 = vunpack.c.h.bf16 %v1034
        %v1107 = vunpack.c.l.bf16 %v1035
        %v1108 = vunpack.c.h.bf16 %v1035
        %v1109 = vunpack.c.l.bf16 %v1036
        %v1110 = vunpack.c.h.bf16 %v1036
        %v1111 = vunpack.c.l.bf16 %v1037
        %v1112 = vunpack.c.h.bf16 %v1037
        %v1113 = vunpack.c.l.bf16 %v1038
        %v1114 = vunpack.c.h.bf16 %v1038
        %v1115 = vunpack.c.l.bf16 %v1039
        %v1116 = vunpack.c.h.bf16 %v1039
        %v1117 = vunpack.c.l.bf16 %v1040
        %v1118 = vunpack.c.h.bf16 %v1040
        %v1119 = vunpack.c.l.bf16 %v1041
        %v1120 = vunpack.c.h.bf16 %v1041
        %v1121 = vunpack.c.l.bf16 %v1042
        %v1122 = vunpack.c.h.bf16 %v1042
        %v1123 = vunpack.c.l.bf16 %v1043
        %v1124 = vunpack.c.h.bf16 %v1043
        %v1125 = vunpack.c.l.bf16 %v1044
        %v1126 = vunpack.c.h.bf16 %v1044
        %v1127 = vunpack.c.l.bf16 %v1045
        %v1128 = vunpack.c.h.bf16 %v1045
        %v1129 = vunpack.c.l.bf16 %v1046
        %v1130 = vunpack.c.h.bf16 %v1046
        %v1131 = vunpack.c.l.bf16 %v1047
        %v1132 = vunpack.c.h.bf16 %v1047
        %v1133 = vunpack.c.l.bf16 %v1048
        %v1134 = vunpack.c.h.bf16 %v1048
        %v1135 = vunpack.c.l.bf16 %v1049
        %v1136 = vunpack.c.h.bf16 %v1049
        %v1137 = vunpack.c.l.bf16 %v1050
        %v1138 = vunpack.c.h.bf16 %v1050
        %v1139 = vunpack.c.l.bf16 %v1051
        %v1140 = vunpack.c.h.bf16 %v1051
        %v1141 = vunpack.c.l.bf16 %v1052
        %v1142 = vunpack.c.h.bf16 %v1052
        %v1143 = vunpack.c.l.bf16 %v1053
        %v1144 = vunpack.c.h.bf16 %v1053
        %v1145 = vunpack.c.l.bf16 %v1054
        %v1146 = vunpack.c.h.bf16 %v1054
        %v1147 = vunpack.c.l.bf16 %v1055
        %v1148 = vunpack.c.h.bf16 %v1055
        %v1149 = vunpack.c.l.bf16 %v1056
        %v1150 = vunpack.c.h.bf16 %v1056
        %v1151 = vunpack.c.l.bf16 %v1057
        %v1152 = vunpack.c.h.bf16 %v1057
        %v1153 = vunpack.c.l.bf16 %v1058
        %v1154 = vunpack.c.h.bf16 %v1058
        %v1155 = vunpack.c.l.bf16 %v1059
        %v1156 = vunpack.c.h.bf16 %v1059
        %v1157 = vunpack.c.l.bf16 %v1060
        %v1158 = vunpack.c.h.bf16 %v1060
        %v1159 = vunpack.c.l.bf16 %v1061
        %v1160 = vunpack.c.h.bf16 %v1061
        %v1161 = vunpack.c.l.bf16 %v1062
        %v1162 = vunpack.c.h.bf16 %v1062
        %v1163 = vunpack.c.l.bf16 %v1063
        %v1164 = vunpack.c.h.bf16 %v1063
        %v1165 = vunpack.c.l.bf16 %v1064
        %v1166 = vunpack.c.h.bf16 %v1064
        %v1167 = vunpack.c.l.bf16 %v1065
        %v1168 = vunpack.c.h.bf16 %v1065
        %v1169 = vunpack.c.l.bf16 %v1066
        %v1170 = vunpack.c.h.bf16 %v1066
        %v1171 = vunpack.c.l.bf16 %v1067
        %v1172 = vunpack.c.h.bf16 %v1067
        %v1173 = vunpack.c.l.bf16 %v1068
        %v1174 = vunpack.c.h.bf16 %v1068
        %v1175 = vunpack.c.l.bf16 %v1069
        %v1176 = vunpack.c.h.bf16 %v1069
        %v1177 = vunpack.c.l.bf16 %v1070
        %v1178 = vunpack.c.h.bf16 %v1070
        %v1179 = vunpack.c.l.bf16 %v1071
        %v1180 = vunpack.c.h.bf16 %v1071
        %v1181 = vunpack.c.l.bf16 %v1072
        %v1182 = vunpack.c.h.bf16 %v1072
        %v1183 = vunpack.c.l.bf16 %v1073
        %v1184 = vunpack.c.h.bf16 %v1073
        %v1185 = vunpack.c.l.bf16 %v1074
        %v1186 = vunpack.c.h.bf16 %v1074
        %v1187 = vunpack.c.l.bf16 %v1075
        %v1188 = vunpack.c.h.bf16 %v1075
        %v1189 = vunpack.c.l.bf16 %v1076
        %v1190 = vunpack.c.h.bf16 %v1076
        %v1191 = vunpack.c.l.bf16 %v1077
        %v1192 = vunpack.c.h.bf16 %v1077
        %v1193 = vunpack.c.l.bf16 %v1078
        %v1194 = vunpack.c.h.bf16 %v1078
        %v1195 = vunpack.c.l.bf16 %v1079
        %v1196 = vunpack.c.h.bf16 %v1079
        %v1197 = vunpack.c.l.bf16 %v1080
        %v1198 = vunpack.c.h.bf16 %v1080
        %v1199 = vunpack.c.l.bf16 %v1081
        %v1200 = vunpack.c.h.bf16 %v1081
        %v1201 = vunpack.c.l.bf16 %v1082
        %v1202 = vunpack.c.h.bf16 %v1082
        %v1203 = vunpack.c.l.bf16 %v1083
        %v1204 = vunpack.c.h.bf16 %v1083
        %v1205 = vunpack.c.l.bf16 %v1084
        %v1206 = vunpack.c.h.bf16 %v1084
        %v1207 = vunpack.c.l.bf16 %v1085
        %v1208 = vunpack.c.h.bf16 %v1085
        %v1209 = vunpack.c.l.bf16 %v1086
        %v1210 = vunpack.c.h.bf16 %v1086
        %v1211 = vunpack.c.l.bf16 %v1087
        %v1212 = vunpack.c.h.bf16 %v1087
        %v1213 = vunpack.c.l.bf16 %v1088
        %v1214 = vunpack.c.h.bf16 %v1088
        %v1215 = vunpack.c.l.bf16 %v1089
        %v1216 = vunpack.c.h.bf16 %v1089
        %v1217 = vunpack.c.l.bf16 %v1090
        %v1218 = vunpack.c.h.bf16 %v1090
        %1219 = vmatprep.subr.mxu0 %v1152
        %1220 = vmatpush1.msra.mxu0 %v1151
        %1221 = vmatprep.subr.mxu0 %v1148
        %1222 = vmatpush1.msra.mxu0 %v1147
        %1223 = vmatprep.subr.mxu0 %v1144
        %1224 = vmatpush1.msra.mxu0 %v1143
        %1225 = vmatprep.subr.mxu0 %v1140
        %1226 = vmatpush1.msra.mxu0 %v1139
        %1227 = vmatprep.subr.mxu0 %v1136
        %1228 = vmatpush1.msra.mxu0 %v1135
        %1229 = vmatprep.subr.mxu0 %v1132
        %1230 = vmatpush1.msra.mxu0 %v1131
        %1231 = vmatprep.subr.mxu0 %v1128
        %1232 = vmatpush1.msra.mxu0 %v1127
        %1233 = vmatprep.subr.mxu0 %v1124
        %1234 = vmatpush1.msra.mxu0 %v1123
        %1235 = vmatprep.subr.mxu0 %v1120
        %1236 = vmatpush1.msra.mxu0 %v1119
        %1237 = vmatprep.subr.mxu0 %v1116
        %1238 = vmatpush1.msra.mxu0 %v1115
        %1239 = vmatprep.subr.mxu0 %v1112
        %1240 = vmatpush1.msra.mxu0 %v1111
        %1241 = vmatprep.subr.mxu0 %v1108
        %1242 = vmatpush1.msra.mxu0 %v1107
        %1243 = vmatprep.subr.mxu0 %v1104
        %1244 = vmatpush1.msra.mxu0 %v1103
        %1245 = vmatprep.subr.mxu0 %v1100
        %1246 = vmatpush1.msra.mxu0 %v1099
        %1247 = vmatprep.subr.mxu0 %v1096
        %1248 = vmatpush1.msra.mxu0 %v1095
        %1249 = vmatprep.subr.mxu0 %v1092
        %1250 = vmatpush1.msra.mxu0 %v1091
        %1251 = vmatprep.subr.mxu0 %v1216
        %1252 = vmatpush2.msra.mxu0 %v1215
        %1253 = vmatprep.subr.mxu0 %v1212
        %1254 = vmatpush2.msra.mxu0 %v1211
        %1255 = vmatprep.subr.mxu0 %v1208
        %1256 = vmatpush2.msra.mxu0 %v1207
        %1257 = vmatprep.subr.mxu0 %v1204
        %1258 = vmatpush2.msra.mxu0 %v1203
        %1259 = vmatprep.subr.mxu0 %v1200
        %1260 = vmatpush2.msra.mxu0 %v1199
        %1261 = vmatprep.subr.mxu0 %v1196
        %1262 = vmatpush2.msra.mxu0 %v1195
        %1263 = vmatprep.subr.mxu0 %v1192
        %1264 = vmatpush2.msra.mxu0 %v1191
        %1265 = vmatprep.subr.mxu0 %v1188
        %1266 = vmatpush2.msra.mxu0 %v1187
        %1267 = vmatprep.subr.mxu0 %v1184
        %1268 = vmatpush2.msra.mxu0 %v1183
        %1269 = vmatprep.subr.mxu0 %v1180
        %1270 = vmatpush2.msra.mxu0 %v1179
        %1271 = vmatprep.subr.mxu0 %v1176
        %1272 = vmatpush2.msra.mxu0 %v1175
        %1273 = vmatprep.subr.mxu0 %v1172
        %1274 = vmatpush2.msra.mxu0 %v1171
        %1275 = vmatprep.subr.mxu0 %v1168
        %1276 = vmatpush2.msra.mxu0 %v1167
        %1277 = vmatprep.subr.mxu0 %v1164
        %1278 = vmatpush2.msra.mxu0 %v1163
        %1279 = vmatprep.subr.mxu0 %v1160
        %1280 = vmatpush2.msra.mxu0 %v1159
        %1281 = vmatprep.subr.mxu0 %v1156
        %1282 = vmatpush2.msra.mxu0 %v1155
        %1283 = vmatprep.mubr.f32.mxu0 %v1026
        %1284 = vmatmul.mubr.f32.gmra.mxu0 %v1025
        %v1285 = vpop.f32.mrf.mxu0
        %v1286 = vadd.f32 0.0, %v1285
        %v1287 = vpop.f32.mrf.mxu0
        %v1288 = vadd.f32 0.0, %v1287
        %1289 = vdwg.mxu0
        %1290 = vmatprep.subr.mxu0 %v1154
        %1291 = vmatpush1.msra.mxu0 %v1153
        %1292 = vmatprep.subr.mxu0 %v1150
        %1293 = vmatpush1.msra.mxu0 %v1149
        %1294 = vmatprep.subr.mxu0 %v1146
        %1295 = vmatpush1.msra.mxu0 %v1145
        %1296 = vmatprep.subr.mxu0 %v1142
        %1297 = vmatpush1.msra.mxu0 %v1141
        %1298 = vmatprep.subr.mxu0 %v1138
        %1299 = vmatpush1.msra.mxu0 %v1137
        %1300 = vmatprep.subr.mxu0 %v1134
        %1301 = vmatpush1.msra.mxu0 %v1133
        %1302 = vmatprep.subr.mxu0 %v1130
        %1303 = vmatpush1.msra.mxu0 %v1129
        %1304 = vmatprep.subr.mxu0 %v1126
        %1305 = vmatpush1.msra.mxu0 %v1125
        %1306 = vmatprep.subr.mxu0 %v1122
        %1307 = vmatpush1.msra.mxu0 %v1121
        %1308 = vmatprep.subr.mxu0 %v1118
        %1309 = vmatpush1.msra.mxu0 %v1117
        %1310 = vmatprep.subr.mxu0 %v1114
        %1311 = vmatpush1.msra.mxu0 %v1113
        %1312 = vmatprep.subr.mxu0 %v1110
        %1313 = vmatpush1.msra.mxu0 %v1109
        %1314 = vmatprep.subr.mxu0 %v1106
        %1315 = vmatpush1.msra.mxu0 %v1105
        %1316 = vmatprep.subr.mxu0 %v1102
        %1317 = vmatpush1.msra.mxu0 %v1101
        %1318 = vmatprep.subr.mxu0 %v1098
        %1319 = vmatpush1.msra.mxu0 %v1097
        %1320 = vmatprep.subr.mxu0 %v1094
        %1321 = vmatpush1.msra.mxu0 %v1093
        %1322 = vmatprep.subr.mxu0 %v1218
        %1323 = vmatpush2.msra.mxu0 %v1217
        %1324 = vmatprep.subr.mxu0 %v1214
        %1325 = vmatpush2.msra.mxu0 %v1213
        %1326 = vmatprep.subr.mxu0 %v1210
        %1327 = vmatpush2.msra.mxu0 %v1209
        %1328 = vmatprep.subr.mxu0 %v1206
        %1329 = vmatpush2.msra.mxu0 %v1205
        %1330 = vmatprep.subr.mxu0 %v1202
        %1331 = vmatpush2.msra.mxu0 %v1201
        %1332 = vmatprep.subr.mxu0 %v1198
        %1333 = vmatpush2.msra.mxu0 %v1197
        %1334 = vmatprep.subr.mxu0 %v1194
        %1335 = vmatpush2.msra.mxu0 %v1193
        %1336 = vmatprep.subr.mxu0 %v1190
        %1337 = vmatpush2.msra.mxu0 %v1189
        %1338 = vmatprep.subr.mxu0 %v1186
        %1339 = vmatpush2.msra.mxu0 %v1185
        %1340 = vmatprep.subr.mxu0 %v1182
        %1341 = vmatpush2.msra.mxu0 %v1181
        %1342 = vmatprep.subr.mxu0 %v1178
        %1343 = vmatpush2.msra.mxu0 %v1177
        %1344 = vmatprep.subr.mxu0 %v1174
        %1345 = vmatpush2.msra.mxu0 %v1173
        %1346 = vmatprep.subr.mxu0 %v1170
        %1347 = vmatpush2.msra.mxu0 %v1169
        %1348 = vmatprep.subr.mxu0 %v1166
        %1349 = vmatpush2.msra.mxu0 %v1165
        %1350 = vmatprep.subr.mxu0 %v1162
        %1351 = vmatpush2.msra.mxu0 %v1161
        %1352 = vmatprep.subr.mxu0 %v1158
        %1353 = vmatpush2.msra.mxu0 %v1157
        %1354 = vmatprep.mubr.f32.mxu0 %v1026
        %1355 = vmatmul.mubr.f32.gmra.mxu0 %v1025
        %v1356 = vpop.f32.mrf.mxu0
        %v1357 = vadd.f32 0.0, %v1356
        %v1358 = vpop.f32.mrf.mxu0
        %v1359 = vadd.f32 0.0, %v1358
        %1360 = vdwg.mxu0
        %v1361 = vrot.slane %v1286, 4
        %v1362 = vadd.f32 %v1286, %v1361
        %v1363 = vrot.slane %v1362, 2
        %v1364 = vadd.f32 %v1362, %v1363
        %v1365 = vrot.slane %v1364, 1
        %v1366 = vadd.f32 %v1364, %v1365
        %v1367 = vrot.slane %v1288, 4
        %v1368 = vadd.f32 %v1288, %v1367
        %v1369 = vrot.slane %v1368, 2
        %v1370 = vadd.f32 %v1368, %v1369
        %v1371 = vrot.slane %v1370, 1
        %v1372 = vadd.f32 %v1370, %v1371
        %v1373 = vrot.slane %v1357, 4
        %v1374 = vadd.f32 %v1357, %v1373
        %v1375 = vrot.slane %v1374, 2
        %v1376 = vadd.f32 %v1374, %v1375
        %v1377 = vrot.slane %v1376, 1
        %v1378 = vadd.f32 %v1376, %v1377
        %v1379 = vrot.slane %v1359, 4
        %v1380 = vadd.f32 %v1359, %v1379
        %v1381 = vrot.slane %v1380, 2
        %v1382 = vadd.f32 %v1380, %v1381
        %v1383 = vrot.slane %v1382, 1
        %v1384 = vadd.f32 %v1382, %v1383
        %v1385 = vmul.f32 %v1366, %v792
        %v1386 = vmul.f32 %v1372, %v792
        %v1387 = vmul.f32 %v1378, %v792
        %v1388 = vmul.f32 %v1384, %v792
        %v1389 = vsub.f32 %v1286, %v1385
        %v1390 = vsub.f32 %v1288, %v1386
        %v1391 = vsub.f32 %v1357, %v1387
        %v1392 = vsub.f32 %v1359, %v1388
        %v1393 = vmul.f32 %v1389, %v1389
        %v1394 = vmul.f32 %v1390, %v1390
        %v1395 = vmul.f32 %v1391, %v1391
        %v1396 = vmul.f32 %v1392, %v1392
        %v1397 = vrot.slane %v1393, 4
        %v1398 = vadd.f32 %v1393, %v1397
        %v1399 = vrot.slane %v1398, 2
        %v1400 = vadd.f32 %v1398, %v1399
        %v1401 = vrot.slane %v1400, 1
        %v1402 = vadd.f32 %v1400, %v1401
        %v1403 = vrot.slane %v1394, 4
        %v1404 = vadd.f32 %v1394, %v1403
        %v1405 = vrot.slane %v1404, 2
        %v1406 = vadd.f32 %v1404, %v1405
        %v1407 = vrot.slane %v1406, 1
        %v1408 = vadd.f32 %v1406, %v1407
        %v1409 = vrot.slane %v1395, 4
        %v1410 = vadd.f32 %v1395, %v1409
        %v1411 = vrot.slane %v1410, 2
        %v1412 = vadd.f32 %v1410, %v1411
        %v1413 = vrot.slane %v1412, 1
        %v1414 = vadd.f32 %v1412, %v1413
        %v1415 = vrot.slane %v1396, 4
        %v1416 = vadd.f32 %v1396, %v1415
        %v1417 = vrot.slane %v1416, 2
        %v1418 = vadd.f32 %v1416, %v1417
        %v1419 = vrot.slane %v1418, 1
        %v1420 = vadd.f32 %v1418, %v1419
        %v1421 = vmul.f32 %v1402, %v792
        %v1422 = vmul.f32 %v1408, %v792
        %v1423 = vmul.f32 %v1414, %v792
        %v1424 = vmul.f32 %v1420, %v792
        %v1425 = vld [vmem:[#allocation16] sm:$0xf]
        %v1426 = vadd.f32 %v1421, 1e-05
        %v1427 = vadd.f32 %v1422, 1e-05
        %v1428 = vadd.f32 %v1423, 1e-05
        %v1429 = vadd.f32 %v1424, 1e-05
        %v1430 = vrsqrt.pop %v1426
        %v1431 = vrsqrt.pop %v1427
        %v1432 = vrsqrt.pop %v1428
        %v1433 = vrsqrt.pop %v1429
        %v1438 = vcombine.low %v1430, %v1431
        %v1439 = vcombine.low %v1432, %v1433
        %v1441 = vunpack.c.l.s4 1966171168
        %v1442 = vunpack.c.0.s8 %v1441
        %v1443 = vlaneseq
        %v1444 = vshrl.u32 %v1443, 7
        %v1445 = vsub.s32 %v1442, %v1444
        %v1446 = vrot.slane %v1438, %v1445
        %v1448 = vunpack.c.l.s4 1966171168
        %v1449 = vunpack.c.0.s8 %v1448
        %v1450 = vlaneseq
        %v1451 = vshrl.u32 %v1450, 7
        %v1452 = vsub.s32 %v1449, %v1451
        %v1453 = vrot.slane %v1439, %v1452
        %v1454 = vcombine.low %v1446, %v1453
        %v1456 = vunpack.c.l.s4 1966171168
        %v1457 = vunpack.c.0.s8 %v1456
        %v1458 = vlaneseq
        %v1459 = vshrl.u32 %v1458, 7
        %v1460 = vsub.s32 %v1457, %v1459
        %v1461 = vrot.slane %v1454, %v1460
        %v1463 = vmul.f32 %v1425, %v1461
        %v1465 = vlaneseq
        %v1466 = vshrl.u32 %v1465, 7
        %v1467 = vsub.s32 0, %v1466
        %v1468 = vrot.slane %v1463, %v1467
        %v1469 = vlaneseq
        %v1470 = vshrl.u32 %v1469, 7
        %v1471 = vsub.s32 1, %v1470
        %v1472 = vrot.slane %v1463, %v1471
        %v1473 = vlaneseq
        %v1474 = vshrl.u32 %v1473, 7
        %v1475 = vsub.s32 2, %v1474
        %v1476 = vrot.slane %v1463, %v1475
        %v1477 = vlaneseq
        %v1478 = vshrl.u32 %v1477, 7
        %v1479 = vsub.s32 3, %v1478
        %v1480 = vrot.slane %v1463, %v1479
        %v1485 = vmul.f32 %v1389, %v1468
        %v1486 = vmul.f32 %v1390, %v1472
        %v1487 = vmul.f32 %v1391, %v1476
        %v1488 = vmul.f32 %v1392, %v1480
        %v1489 = vld [vmem:[#allocation17] sm:$0xf]
        %v1491 = vlaneseq
        %v1492 = vshrl.u32 %v1491, 7
        %v1493 = vsub.s32 0, %v1492
        %v1494 = vrot.slane %v1489, %v1493
        %v1495 = vlaneseq
        %v1496 = vshrl.u32 %v1495, 7
        %v1497 = vsub.s32 1, %v1496
        %v1498 = vrot.slane %v1489, %v1497
        %v1499 = vlaneseq
        %v1500 = vshrl.u32 %v1499, 7
        %v1501 = vsub.s32 2, %v1500
        %v1502 = vrot.slane %v1489, %v1501
        %v1503 = vlaneseq
        %v1504 = vshrl.u32 %v1503, 7
        %v1505 = vsub.s32 3, %v1504
        %v1506 = vrot.slane %v1489, %v1505
        %v1511 = vadd.f32 %v1485, %v1494
        %v1512 = vadd.f32 %v1486, %v1498
        %v1513 = vadd.f32 %v1487, %v1502
        %v1514 = vadd.f32 %v1488, %v1506
        %v1515 = vmax.f32 %v1511, 0.0
        %v1516 = vmax.f32 %v1512, 0.0
        %v1517 = vmax.f32 %v1513, 0.0
        %v1518 = vmax.f32 %v1514, 0.0
        %v1519 = vld [vmem:[#allocation19] sm:$0xff]
        %v1520 = vld [vmem:[#allocation19 + $0x8] sm:$0xff]
        %v1521 = vld [vmem:[#allocation19 + $0x10] sm:$0xff]
        %v1522 = vld [vmem:[#allocation19 + $0x18] sm:$0xff]
        %v1523 = vld [vmem:[#allocation19 + $0x20] sm:$0xff]
        %v1524 = vld [vmem:[#allocation19 + $0x28] sm:$0xff]
        %v1525 = vld [vmem:[#allocation19 + $0x30] sm:$0xff]
        %v1526 = vld [vmem:[#allocation19 + $0x38] sm:$0xff]
        %v1527 = vld [vmem:[#allocation19 + $0x40] sm:$0xff]
        %v1528 = vld [vmem:[#allocation19 + $0x48] sm:$0xff]
        %v1529 = vld [vmem:[#allocation19 + $0x50] sm:$0xff]
        %v1530 = vld [vmem:[#allocation19 + $0x58] sm:$0xff]
        %v1531 = vld [vmem:[#allocation19 + $0x60] sm:$0xff]
        %v1532 = vld [vmem:[#allocation19 + $0x68] sm:$0xff]
        %v1533 = vld [vmem:[#allocation19 + $0x70] sm:$0xff]
        %v1534 = vld [vmem:[#allocation19 + $0x78] sm:$0xff]
        %v1535 = vld [vmem:[#allocation19 + $0x80] sm:$0xff]
        %v1536 = vld [vmem:[#allocation19 + $0x88] sm:$0xff]
        %v1537 = vld [vmem:[#allocation19 + $0x90] sm:$0xff]
        %v1538 = vld [vmem:[#allocation19 + $0x98] sm:$0xff]
        %v1539 = vld [vmem:[#allocation19 + $0xa0] sm:$0xff]
        %v1540 = vld [vmem:[#allocation19 + $0xa8] sm:$0xff]
        %v1541 = vld [vmem:[#allocation19 + $0xb0] sm:$0xff]
        %v1542 = vld [vmem:[#allocation19 + $0xb8] sm:$0xff]
        %v1543 = vld [vmem:[#allocation19 + $0xc0] sm:$0xff]
        %v1544 = vld [vmem:[#allocation19 + $0xc8] sm:$0xff]
        %v1545 = vld [vmem:[#allocation19 + $0xd0] sm:$0xff]
        %v1546 = vld [vmem:[#allocation19 + $0xd8] sm:$0xff]
        %v1547 = vld [vmem:[#allocation19 + $0xe0] sm:$0xff]
        %v1548 = vld [vmem:[#allocation19 + $0xe8] sm:$0xff]
        %v1549 = vld [vmem:[#allocation19 + $0xf0] sm:$0xff]
        %v1550 = vld [vmem:[#allocation19 + $0xf8] sm:$0xff]
        %v1551 = vld [vmem:[#allocation19 + $0x100] sm:$0xff]
        %v1552 = vld [vmem:[#allocation19 + $0x108] sm:$0xff]
        %v1553 = vld [vmem:[#allocation19 + $0x110] sm:$0xff]
        %v1554 = vld [vmem:[#allocation19 + $0x118] sm:$0xff]
        %v1555 = vld [vmem:[#allocation19 + $0x120] sm:$0xff]
        %v1556 = vld [vmem:[#allocation19 + $0x128] sm:$0xff]
        %v1557 = vld [vmem:[#allocation19 + $0x130] sm:$0xff]
        %v1558 = vld [vmem:[#allocation19 + $0x138] sm:$0xff]
        %v1559 = vld [vmem:[#allocation19 + $0x140] sm:$0xff]
        %v1560 = vld [vmem:[#allocation19 + $0x148] sm:$0xff]
        %v1561 = vld [vmem:[#allocation19 + $0x150] sm:$0xff]
        %v1562 = vld [vmem:[#allocation19 + $0x158] sm:$0xff]
        %v1563 = vld [vmem:[#allocation19 + $0x160] sm:$0xff]
        %v1564 = vld [vmem:[#allocation19 + $0x168] sm:$0xff]
        %v1565 = vld [vmem:[#allocation19 + $0x170] sm:$0xff]
        %v1566 = vld [vmem:[#allocation19 + $0x178] sm:$0xff]
        %v1567 = vld [vmem:[#allocation19 + $0x180] sm:$0xff]
        %v1568 = vld [vmem:[#allocation19 + $0x188] sm:$0xff]
        %v1569 = vld [vmem:[#allocation19 + $0x190] sm:$0xff]
        %v1570 = vld [vmem:[#allocation19 + $0x198] sm:$0xff]
        %v1571 = vld [vmem:[#allocation19 + $0x1a0] sm:$0xff]
        %v1572 = vld [vmem:[#allocation19 + $0x1a8] sm:$0xff]
        %v1573 = vld [vmem:[#allocation19 + $0x1b0] sm:$0xff]
        %v1574 = vld [vmem:[#allocation19 + $0x1b8] sm:$0xff]
        %v1575 = vld [vmem:[#allocation19 + $0x1c0] sm:$0xff]
        %v1576 = vld [vmem:[#allocation19 + $0x1c8] sm:$0xff]
        %v1577 = vld [vmem:[#allocation19 + $0x1d0] sm:$0xff]
        %v1578 = vld [vmem:[#allocation19 + $0x1d8] sm:$0xff]
        %v1579 = vld [vmem:[#allocation19 + $0x1e0] sm:$0xff]
        %v1580 = vld [vmem:[#allocation19 + $0x1e8] sm:$0xff]
        %v1581 = vld [vmem:[#allocation19 + $0x1f0] sm:$0xff]
        %v1582 = vld [vmem:[#allocation19 + $0x1f8] sm:$0xff]
        %v1583 = vld [vmem:[#allocation19 + $0x200] sm:$0xff]
        %v1584 = vld [vmem:[#allocation19 + $0x208] sm:$0xff]
        %v1585 = vld [vmem:[#allocation19 + $0x210] sm:$0xff]
        %v1586 = vld [vmem:[#allocation19 + $0x218] sm:$0xff]
        %v1587 = vld [vmem:[#allocation19 + $0x220] sm:$0xff]
        %v1588 = vld [vmem:[#allocation19 + $0x228] sm:$0xff]
        %v1589 = vld [vmem:[#allocation19 + $0x230] sm:$0xff]
        %v1590 = vld [vmem:[#allocation19 + $0x238] sm:$0xff]
        %v1591 = vld [vmem:[#allocation19 + $0x240] sm:$0xff]
        %v1592 = vld [vmem:[#allocation19 + $0x248] sm:$0xff]
        %v1593 = vld [vmem:[#allocation19 + $0x250] sm:$0xff]
        %v1594 = vld [vmem:[#allocation19 + $0x258] sm:$0xff]
        %v1595 = vld [vmem:[#allocation19 + $0x260] sm:$0xff]
        %v1596 = vld [vmem:[#allocation19 + $0x268] sm:$0xff]
        %v1597 = vld [vmem:[#allocation19 + $0x270] sm:$0xff]
        %v1598 = vld [vmem:[#allocation19 + $0x278] sm:$0xff]
        %v1599 = vld [vmem:[#allocation19 + $0x280] sm:$0xff]
        %v1600 = vld [vmem:[#allocation19 + $0x288] sm:$0xff]
        %v1601 = vld [vmem:[#allocation19 + $0x290] sm:$0xff]
        %v1602 = vld [vmem:[#allocation19 + $0x298] sm:$0xff]
        %v1603 = vld [vmem:[#allocation19 + $0x2a0] sm:$0xff]
        %v1604 = vld [vmem:[#allocation19 + $0x2a8] sm:$0xff]
        %v1605 = vld [vmem:[#allocation19 + $0x2b0] sm:$0xff]
        %v1606 = vld [vmem:[#allocation19 + $0x2b8] sm:$0xff]
        %v1607 = vld [vmem:[#allocation19 + $0x2c0] sm:$0xff]
        %v1608 = vld [vmem:[#allocation19 + $0x2c8] sm:$0xff]
        %v1609 = vld [vmem:[#allocation19 + $0x2d0] sm:$0xff]
        %v1610 = vld [vmem:[#allocation19 + $0x2d8] sm:$0xff]
        %v1611 = vld [vmem:[#allocation19 + $0x2e0] sm:$0xff]
        %v1612 = vld [vmem:[#allocation19 + $0x2e8] sm:$0xff]
        %v1613 = vld [vmem:[#allocation19 + $0x2f0] sm:$0xff]
        %v1614 = vld [vmem:[#allocation19 + $0x2f8] sm:$0xff]
        %v1615 = vld [vmem:[#allocation19 + $0x300] sm:$0xff]
        %v1616 = vld [vmem:[#allocation19 + $0x308] sm:$0xff]
        %v1617 = vld [vmem:[#allocation19 + $0x310] sm:$0xff]
        %v1618 = vld [vmem:[#allocation19 + $0x318] sm:$0xff]
        %v1619 = vld [vmem:[#allocation19 + $0x320] sm:$0xff]
        %v1620 = vld [vmem:[#allocation19 + $0x328] sm:$0xff]
        %v1621 = vld [vmem:[#allocation19 + $0x330] sm:$0xff]
        %v1622 = vld [vmem:[#allocation19 + $0x338] sm:$0xff]
        %v1623 = vld [vmem:[#allocation19 + $0x340] sm:$0xff]
        %v1624 = vld [vmem:[#allocation19 + $0x348] sm:$0xff]
        %v1625 = vld [vmem:[#allocation19 + $0x350] sm:$0xff]
        %v1626 = vld [vmem:[#allocation19 + $0x358] sm:$0xff]
        %v1627 = vld [vmem:[#allocation19 + $0x360] sm:$0xff]
        %v1628 = vld [vmem:[#allocation19 + $0x368] sm:$0xff]
        %v1629 = vld [vmem:[#allocation19 + $0x370] sm:$0xff]
        %v1630 = vld [vmem:[#allocation19 + $0x378] sm:$0xff]
        %v1631 = vld [vmem:[#allocation19 + $0x380] sm:$0xff]
        %v1632 = vld [vmem:[#allocation19 + $0x388] sm:$0xff]
        %v1633 = vld [vmem:[#allocation19 + $0x390] sm:$0xff]
        %v1634 = vld [vmem:[#allocation19 + $0x398] sm:$0xff]
        %v1635 = vld [vmem:[#allocation19 + $0x3a0] sm:$0xff]
        %v1636 = vld [vmem:[#allocation19 + $0x3a8] sm:$0xff]
        %v1637 = vld [vmem:[#allocation19 + $0x3b0] sm:$0xff]
        %v1638 = vld [vmem:[#allocation19 + $0x3b8] sm:$0xff]
        %v1639 = vld [vmem:[#allocation19 + $0x3c0] sm:$0xff]
        %v1640 = vld [vmem:[#allocation19 + $0x3c8] sm:$0xff]
        %v1641 = vld [vmem:[#allocation19 + $0x3d0] sm:$0xff]
        %v1642 = vld [vmem:[#allocation19 + $0x3d8] sm:$0xff]
        %v1643 = vld [vmem:[#allocation19 + $0x3e0] sm:$0xff]
        %v1644 = vld [vmem:[#allocation19 + $0x3e8] sm:$0xff]
        %v1645 = vld [vmem:[#allocation19 + $0x3f0] sm:$0xff]
        %v1646 = vld [vmem:[#allocation19 + $0x3f8] sm:$0xff]
        %v1647 = vld [vmem:[#allocation19 + $0x400] sm:$0xff]
        %v1648 = vld [vmem:[#allocation19 + $0x408] sm:$0xff]
        %v1649 = vld [vmem:[#allocation19 + $0x410] sm:$0xff]
        %v1650 = vld [vmem:[#allocation19 + $0x418] sm:$0xff]
        %v1651 = vld [vmem:[#allocation19 + $0x420] sm:$0xff]
        %v1652 = vld [vmem:[#allocation19 + $0x428] sm:$0xff]
        %v1653 = vld [vmem:[#allocation19 + $0x430] sm:$0xff]
        %v1654 = vld [vmem:[#allocation19 + $0x438] sm:$0xff]
        %v1655 = vld [vmem:[#allocation19 + $0x440] sm:$0xff]
        %v1656 = vld [vmem:[#allocation19 + $0x448] sm:$0xff]
        %v1657 = vld [vmem:[#allocation19 + $0x450] sm:$0xff]
        %v1658 = vld [vmem:[#allocation19 + $0x458] sm:$0xff]
        %v1659 = vld [vmem:[#allocation19 + $0x460] sm:$0xff]
        %v1660 = vld [vmem:[#allocation19 + $0x468] sm:$0xff]
        %v1661 = vld [vmem:[#allocation19 + $0x470] sm:$0xff]
        %v1662 = vld [vmem:[#allocation19 + $0x478] sm:$0xff]
        %v1663 = vld [vmem:[#allocation19 + $0x480] sm:$0xff]
        %v1664 = vld [vmem:[#allocation19 + $0x488] sm:$0xff]
        %v1665 = vld [vmem:[#allocation19 + $0x490] sm:$0xff]
        %v1666 = vld [vmem:[#allocation19 + $0x498] sm:$0xff]
        %v1667 = vld [vmem:[#allocation19 + $0x4a0] sm:$0xff]
        %v1668 = vld [vmem:[#allocation19 + $0x4a8] sm:$0xff]
        %v1669 = vld [vmem:[#allocation19 + $0x4b0] sm:$0xff]
        %v1670 = vld [vmem:[#allocation19 + $0x4b8] sm:$0xff]
        %v1671 = vld [vmem:[#allocation19 + $0x4c0] sm:$0xff]
        %v1672 = vld [vmem:[#allocation19 + $0x4c8] sm:$0xff]
        %v1673 = vld [vmem:[#allocation19 + $0x4d0] sm:$0xff]
        %v1674 = vld [vmem:[#allocation19 + $0x4d8] sm:$0xff]
        %v1675 = vld [vmem:[#allocation19 + $0x4e0] sm:$0xff]
        %v1676 = vld [vmem:[#allocation19 + $0x4e8] sm:$0xff]
        %v1677 = vld [vmem:[#allocation19 + $0x4f0] sm:$0xff]
        %v1678 = vld [vmem:[#allocation19 + $0x4f8] sm:$0xff]
        %v1679 = vld [vmem:[#allocation19 + $0x500] sm:$0xff]
        %v1680 = vld [vmem:[#allocation19 + $0x508] sm:$0xff]
        %v1681 = vld [vmem:[#allocation19 + $0x510] sm:$0xff]
        %v1682 = vld [vmem:[#allocation19 + $0x518] sm:$0xff]
        %v1683 = vld [vmem:[#allocation19 + $0x520] sm:$0xff]
        %v1684 = vld [vmem:[#allocation19 + $0x528] sm:$0xff]
        %v1685 = vld [vmem:[#allocation19 + $0x530] sm:$0xff]
        %v1686 = vld [vmem:[#allocation19 + $0x538] sm:$0xff]
        %v1687 = vld [vmem:[#allocation19 + $0x540] sm:$0xff]
        %v1688 = vld [vmem:[#allocation19 + $0x548] sm:$0xff]
        %v1689 = vld [vmem:[#allocation19 + $0x550] sm:$0xff]
        %v1690 = vld [vmem:[#allocation19 + $0x558] sm:$0xff]
        %v1691 = vld [vmem:[#allocation19 + $0x560] sm:$0xff]
        %v1692 = vld [vmem:[#allocation19 + $0x568] sm:$0xff]
        %v1693 = vld [vmem:[#allocation19 + $0x570] sm:$0xff]
        %v1694 = vld [vmem:[#allocation19 + $0x578] sm:$0xff]
        %v1695 = vld [vmem:[#allocation19 + $0x580] sm:$0xff]
        %v1696 = vld [vmem:[#allocation19 + $0x588] sm:$0xff]
        %v1697 = vld [vmem:[#allocation19 + $0x590] sm:$0xff]
        %v1698 = vld [vmem:[#allocation19 + $0x598] sm:$0xff]
        %v1699 = vld [vmem:[#allocation19 + $0x5a0] sm:$0xff]
        %v1700 = vld [vmem:[#allocation19 + $0x5a8] sm:$0xff]
        %v1701 = vld [vmem:[#allocation19 + $0x5b0] sm:$0xff]
        %v1702 = vld [vmem:[#allocation19 + $0x5b8] sm:$0xff]
        %v1703 = vld [vmem:[#allocation19 + $0x5c0] sm:$0xff]
        %v1704 = vld [vmem:[#allocation19 + $0x5c8] sm:$0xff]
        %v1705 = vld [vmem:[#allocation19 + $0x5d0] sm:$0xff]
        %v1706 = vld [vmem:[#allocation19 + $0x5d8] sm:$0xff]
        %v1707 = vld [vmem:[#allocation19 + $0x5e0] sm:$0xff]
        %v1708 = vld [vmem:[#allocation19 + $0x5e8] sm:$0xff]
        %v1709 = vld [vmem:[#allocation19 + $0x5f0] sm:$0xff]
        %v1710 = vld [vmem:[#allocation19 + $0x5f8] sm:$0xff]
        %v1711 = vld [vmem:[#allocation19 + $0x600] sm:$0xff]
        %v1712 = vld [vmem:[#allocation19 + $0x608] sm:$0xff]
        %v1713 = vld [vmem:[#allocation19 + $0x610] sm:$0xff]
        %v1714 = vld [vmem:[#allocation19 + $0x618] sm:$0xff]
        %v1715 = vld [vmem:[#allocation19 + $0x620] sm:$0xff]
        %v1716 = vld [vmem:[#allocation19 + $0x628] sm:$0xff]
        %v1717 = vld [vmem:[#allocation19 + $0x630] sm:$0xff]
        %v1718 = vld [vmem:[#allocation19 + $0x638] sm:$0xff]
        %v1719 = vld [vmem:[#allocation19 + $0x640] sm:$0xff]
        %v1720 = vld [vmem:[#allocation19 + $0x648] sm:$0xff]
        %v1721 = vld [vmem:[#allocation19 + $0x650] sm:$0xff]
        %v1722 = vld [vmem:[#allocation19 + $0x658] sm:$0xff]
        %v1723 = vld [vmem:[#allocation19 + $0x660] sm:$0xff]
        %v1724 = vld [vmem:[#allocation19 + $0x668] sm:$0xff]
        %v1725 = vld [vmem:[#allocation19 + $0x670] sm:$0xff]
        %v1726 = vld [vmem:[#allocation19 + $0x678] sm:$0xff]
        %v1727 = vld [vmem:[#allocation19 + $0x680] sm:$0xff]
        %v1728 = vld [vmem:[#allocation19 + $0x688] sm:$0xff]
        %v1729 = vld [vmem:[#allocation19 + $0x690] sm:$0xff]
        %v1730 = vld [vmem:[#allocation19 + $0x698] sm:$0xff]
        %v1731 = vld [vmem:[#allocation19 + $0x6a0] sm:$0xff]
        %v1732 = vld [vmem:[#allocation19 + $0x6a8] sm:$0xff]
        %v1733 = vld [vmem:[#allocation19 + $0x6b0] sm:$0xff]
        %v1734 = vld [vmem:[#allocation19 + $0x6b8] sm:$0xff]
        %v1735 = vld [vmem:[#allocation19 + $0x6c0] sm:$0xff]
        %v1736 = vld [vmem:[#allocation19 + $0x6c8] sm:$0xff]
        %v1737 = vld [vmem:[#allocation19 + $0x6d0] sm:$0xff]
        %v1738 = vld [vmem:[#allocation19 + $0x6d8] sm:$0xff]
        %v1739 = vld [vmem:[#allocation19 + $0x6e0] sm:$0xff]
        %v1740 = vld [vmem:[#allocation19 + $0x6e8] sm:$0xff]
        %v1741 = vld [vmem:[#allocation19 + $0x6f0] sm:$0xff]
        %v1742 = vld [vmem:[#allocation19 + $0x6f8] sm:$0xff]
        %v1743 = vld [vmem:[#allocation19 + $0x700] sm:$0xff]
        %v1744 = vld [vmem:[#allocation19 + $0x708] sm:$0xff]
        %v1745 = vld [vmem:[#allocation19 + $0x710] sm:$0xff]
        %v1746 = vld [vmem:[#allocation19 + $0x718] sm:$0xff]
        %v1747 = vld [vmem:[#allocation19 + $0x720] sm:$0xff]
        %v1748 = vld [vmem:[#allocation19 + $0x728] sm:$0xff]
        %v1749 = vld [vmem:[#allocation19 + $0x730] sm:$0xff]
        %v1750 = vld [vmem:[#allocation19 + $0x738] sm:$0xff]
        %v1751 = vld [vmem:[#allocation19 + $0x740] sm:$0xff]
        %v1752 = vld [vmem:[#allocation19 + $0x748] sm:$0xff]
        %v1753 = vld [vmem:[#allocation19 + $0x750] sm:$0xff]
        %v1754 = vld [vmem:[#allocation19 + $0x758] sm:$0xff]
        %v1755 = vld [vmem:[#allocation19 + $0x760] sm:$0xff]
        %v1756 = vld [vmem:[#allocation19 + $0x768] sm:$0xff]
        %v1757 = vld [vmem:[#allocation19 + $0x770] sm:$0xff]
        %v1758 = vld [vmem:[#allocation19 + $0x778] sm:$0xff]
        %v1759 = vld [vmem:[#allocation19 + $0x780] sm:$0xff]
        %v1760 = vld [vmem:[#allocation19 + $0x788] sm:$0xff]
        %v1761 = vld [vmem:[#allocation19 + $0x790] sm:$0xff]
        %v1762 = vld [vmem:[#allocation19 + $0x798] sm:$0xff]
        %v1763 = vld [vmem:[#allocation19 + $0x7a0] sm:$0xff]
        %v1764 = vld [vmem:[#allocation19 + $0x7a8] sm:$0xff]
        %v1765 = vld [vmem:[#allocation19 + $0x7b0] sm:$0xff]
        %v1766 = vld [vmem:[#allocation19 + $0x7b8] sm:$0xff]
        %v1767 = vld [vmem:[#allocation19 + $0x7c0] sm:$0xff]
        %v1768 = vld [vmem:[#allocation19 + $0x7c8] sm:$0xff]
        %v1769 = vld [vmem:[#allocation19 + $0x7d0] sm:$0xff]
        %v1770 = vld [vmem:[#allocation19 + $0x7d8] sm:$0xff]
        %v1771 = vld [vmem:[#allocation19 + $0x7e0] sm:$0xff]
        %v1772 = vld [vmem:[#allocation19 + $0x7e8] sm:$0xff]
        %v1773 = vld [vmem:[#allocation19 + $0x7f0] sm:$0xff]
        %v1774 = vld [vmem:[#allocation19 + $0x7f8] sm:$0xff]
        %v1775 = vunpack.c.l.bf16 %v1519
        %v1776 = vunpack.c.h.bf16 %v1519
        %v1777 = vunpack.c.l.bf16 %v1520
        %v1778 = vunpack.c.h.bf16 %v1520
        %v1779 = vunpack.c.l.bf16 %v1521
        %v1780 = vunpack.c.h.bf16 %v1521
        %v1781 = vunpack.c.l.bf16 %v1522
        %v1782 = vunpack.c.h.bf16 %v1522
        %v1783 = vunpack.c.l.bf16 %v1523
        %v1784 = vunpack.c.h.bf16 %v1523
        %v1785 = vunpack.c.l.bf16 %v1524
        %v1786 = vunpack.c.h.bf16 %v1524
        %v1787 = vunpack.c.l.bf16 %v1525
        %v1788 = vunpack.c.h.bf16 %v1525
        %v1789 = vunpack.c.l.bf16 %v1526
        %v1790 = vunpack.c.h.bf16 %v1526
        %v1791 = vunpack.c.l.bf16 %v1527
        %v1792 = vunpack.c.h.bf16 %v1527
        %v1793 = vunpack.c.l.bf16 %v1528
        %v1794 = vunpack.c.h.bf16 %v1528
        %v1795 = vunpack.c.l.bf16 %v1529
        %v1796 = vunpack.c.h.bf16 %v1529
        %v1797 = vunpack.c.l.bf16 %v1530
        %v1798 = vunpack.c.h.bf16 %v1530
        %v1799 = vunpack.c.l.bf16 %v1531
        %v1800 = vunpack.c.h.bf16 %v1531
        %v1801 = vunpack.c.l.bf16 %v1532
        %v1802 = vunpack.c.h.bf16 %v1532
        %v1803 = vunpack.c.l.bf16 %v1533
        %v1804 = vunpack.c.h.bf16 %v1533
        %v1805 = vunpack.c.l.bf16 %v1534
        %v1806 = vunpack.c.h.bf16 %v1534
        %v1807 = vunpack.c.l.bf16 %v1535
        %v1808 = vunpack.c.h.bf16 %v1535
        %v1809 = vunpack.c.l.bf16 %v1536
        %v1810 = vunpack.c.h.bf16 %v1536
        %v1811 = vunpack.c.l.bf16 %v1537
        %v1812 = vunpack.c.h.bf16 %v1537
        %v1813 = vunpack.c.l.bf16 %v1538
        %v1814 = vunpack.c.h.bf16 %v1538
        %v1815 = vunpack.c.l.bf16 %v1539
        %v1816 = vunpack.c.h.bf16 %v1539
        %v1817 = vunpack.c.l.bf16 %v1540
        %v1818 = vunpack.c.h.bf16 %v1540
        %v1819 = vunpack.c.l.bf16 %v1541
        %v1820 = vunpack.c.h.bf16 %v1541
        %v1821 = vunpack.c.l.bf16 %v1542
        %v1822 = vunpack.c.h.bf16 %v1542
        %v1823 = vunpack.c.l.bf16 %v1543
        %v1824 = vunpack.c.h.bf16 %v1543
        %v1825 = vunpack.c.l.bf16 %v1544
        %v1826 = vunpack.c.h.bf16 %v1544
        %v1827 = vunpack.c.l.bf16 %v1545
        %v1828 = vunpack.c.h.bf16 %v1545
        %v1829 = vunpack.c.l.bf16 %v1546
        %v1830 = vunpack.c.h.bf16 %v1546
        %v1831 = vunpack.c.l.bf16 %v1547
        %v1832 = vunpack.c.h.bf16 %v1547
        %v1833 = vunpack.c.l.bf16 %v1548
        %v1834 = vunpack.c.h.bf16 %v1548
        %v1835 = vunpack.c.l.bf16 %v1549
        %v1836 = vunpack.c.h.bf16 %v1549
        %v1837 = vunpack.c.l.bf16 %v1550
        %v1838 = vunpack.c.h.bf16 %v1550
        %v1839 = vunpack.c.l.bf16 %v1551
        %v1840 = vunpack.c.h.bf16 %v1551
        %v1841 = vunpack.c.l.bf16 %v1552
        %v1842 = vunpack.c.h.bf16 %v1552
        %v1843 = vunpack.c.l.bf16 %v1553
        %v1844 = vunpack.c.h.bf16 %v1553
        %v1845 = vunpack.c.l.bf16 %v1554
        %v1846 = vunpack.c.h.bf16 %v1554
        %v1847 = vunpack.c.l.bf16 %v1555
        %v1848 = vunpack.c.h.bf16 %v1555
        %v1849 = vunpack.c.l.bf16 %v1556
        %v1850 = vunpack.c.h.bf16 %v1556
        %v1851 = vunpack.c.l.bf16 %v1557
        %v1852 = vunpack.c.h.bf16 %v1557
        %v1853 = vunpack.c.l.bf16 %v1558
        %v1854 = vunpack.c.h.bf16 %v1558
        %v1855 = vunpack.c.l.bf16 %v1559
        %v1856 = vunpack.c.h.bf16 %v1559
        %v1857 = vunpack.c.l.bf16 %v1560
        %v1858 = vunpack.c.h.bf16 %v1560
        %v1859 = vunpack.c.l.bf16 %v1561
        %v1860 = vunpack.c.h.bf16 %v1561
        %v1861 = vunpack.c.l.bf16 %v1562
        %v1862 = vunpack.c.h.bf16 %v1562
        %v1863 = vunpack.c.l.bf16 %v1563
        %v1864 = vunpack.c.h.bf16 %v1563
        %v1865 = vunpack.c.l.bf16 %v1564
        %v1866 = vunpack.c.h.bf16 %v1564
        %v1867 = vunpack.c.l.bf16 %v1565
        %v1868 = vunpack.c.h.bf16 %v1565
        %v1869 = vunpack.c.l.bf16 %v1566
        %v1870 = vunpack.c.h.bf16 %v1566
        %v1871 = vunpack.c.l.bf16 %v1567
        %v1872 = vunpack.c.h.bf16 %v1567
        %v1873 = vunpack.c.l.bf16 %v1568
        %v1874 = vunpack.c.h.bf16 %v1568
        %v1875 = vunpack.c.l.bf16 %v1569
        %v1876 = vunpack.c.h.bf16 %v1569
        %v1877 = vunpack.c.l.bf16 %v1570
        %v1878 = vunpack.c.h.bf16 %v1570
        %v1879 = vunpack.c.l.bf16 %v1571
        %v1880 = vunpack.c.h.bf16 %v1571
        %v1881 = vunpack.c.l.bf16 %v1572
        %v1882 = vunpack.c.h.bf16 %v1572
        %v1883 = vunpack.c.l.bf16 %v1573
        %v1884 = vunpack.c.h.bf16 %v1573
        %v1885 = vunpack.c.l.bf16 %v1574
        %v1886 = vunpack.c.h.bf16 %v1574
        %v1887 = vunpack.c.l.bf16 %v1575
        %v1888 = vunpack.c.h.bf16 %v1575
        %v1889 = vunpack.c.l.bf16 %v1576
        %v1890 = vunpack.c.h.bf16 %v1576
        %v1891 = vunpack.c.l.bf16 %v1577
        %v1892 = vunpack.c.h.bf16 %v1577
        %v1893 = vunpack.c.l.bf16 %v1578
        %v1894 = vunpack.c.h.bf16 %v1578
        %v1895 = vunpack.c.l.bf16 %v1579
        %v1896 = vunpack.c.h.bf16 %v1579
        %v1897 = vunpack.c.l.bf16 %v1580
        %v1898 = vunpack.c.h.bf16 %v1580
        %v1899 = vunpack.c.l.bf16 %v1581
        %v1900 = vunpack.c.h.bf16 %v1581
        %v1901 = vunpack.c.l.bf16 %v1582
        %v1902 = vunpack.c.h.bf16 %v1582
        %v1903 = vunpack.c.l.bf16 %v1583
        %v1904 = vunpack.c.h.bf16 %v1583
        %v1905 = vunpack.c.l.bf16 %v1584
        %v1906 = vunpack.c.h.bf16 %v1584
        %v1907 = vunpack.c.l.bf16 %v1585
        %v1908 = vunpack.c.h.bf16 %v1585
        %v1909 = vunpack.c.l.bf16 %v1586
        %v1910 = vunpack.c.h.bf16 %v1586
        %v1911 = vunpack.c.l.bf16 %v1587
        %v1912 = vunpack.c.h.bf16 %v1587
        %v1913 = vunpack.c.l.bf16 %v1588
        %v1914 = vunpack.c.h.bf16 %v1588
        %v1915 = vunpack.c.l.bf16 %v1589
        %v1916 = vunpack.c.h.bf16 %v1589
        %v1917 = vunpack.c.l.bf16 %v1590
        %v1918 = vunpack.c.h.bf16 %v1590
        %v1919 = vunpack.c.l.bf16 %v1591
        %v1920 = vunpack.c.h.bf16 %v1591
        %v1921 = vunpack.c.l.bf16 %v1592
        %v1922 = vunpack.c.h.bf16 %v1592
        %v1923 = vunpack.c.l.bf16 %v1593
        %v1924 = vunpack.c.h.bf16 %v1593
        %v1925 = vunpack.c.l.bf16 %v1594
        %v1926 = vunpack.c.h.bf16 %v1594
        %v1927 = vunpack.c.l.bf16 %v1595
        %v1928 = vunpack.c.h.bf16 %v1595
        %v1929 = vunpack.c.l.bf16 %v1596
        %v1930 = vunpack.c.h.bf16 %v1596
        %v1931 = vunpack.c.l.bf16 %v1597
        %v1932 = vunpack.c.h.bf16 %v1597
        %v1933 = vunpack.c.l.bf16 %v1598
        %v1934 = vunpack.c.h.bf16 %v1598
        %v1935 = vunpack.c.l.bf16 %v1599
        %v1936 = vunpack.c.h.bf16 %v1599
        %v1937 = vunpack.c.l.bf16 %v1600
        %v1938 = vunpack.c.h.bf16 %v1600
        %v1939 = vunpack.c.l.bf16 %v1601
        %v1940 = vunpack.c.h.bf16 %v1601
        %v1941 = vunpack.c.l.bf16 %v1602
        %v1942 = vunpack.c.h.bf16 %v1602
        %v1943 = vunpack.c.l.bf16 %v1603
        %v1944 = vunpack.c.h.bf16 %v1603
        %v1945 = vunpack.c.l.bf16 %v1604
        %v1946 = vunpack.c.h.bf16 %v1604
        %v1947 = vunpack.c.l.bf16 %v1605
        %v1948 = vunpack.c.h.bf16 %v1605
        %v1949 = vunpack.c.l.bf16 %v1606
        %v1950 = vunpack.c.h.bf16 %v1606
        %v1951 = vunpack.c.l.bf16 %v1607
        %v1952 = vunpack.c.h.bf16 %v1607
        %v1953 = vunpack.c.l.bf16 %v1608
        %v1954 = vunpack.c.h.bf16 %v1608
        %v1955 = vunpack.c.l.bf16 %v1609
        %v1956 = vunpack.c.h.bf16 %v1609
        %v1957 = vunpack.c.l.bf16 %v1610
        %v1958 = vunpack.c.h.bf16 %v1610
        %v1959 = vunpack.c.l.bf16 %v1611
        %v1960 = vunpack.c.h.bf16 %v1611
        %v1961 = vunpack.c.l.bf16 %v1612
        %v1962 = vunpack.c.h.bf16 %v1612
        %v1963 = vunpack.c.l.bf16 %v1613
        %v1964 = vunpack.c.h.bf16 %v1613
        %v1965 = vunpack.c.l.bf16 %v1614
        %v1966 = vunpack.c.h.bf16 %v1614
        %v1967 = vunpack.c.l.bf16 %v1615
        %v1968 = vunpack.c.h.bf16 %v1615
        %v1969 = vunpack.c.l.bf16 %v1616
        %v1970 = vunpack.c.h.bf16 %v1616
        %v1971 = vunpack.c.l.bf16 %v1617
        %v1972 = vunpack.c.h.bf16 %v1617
        %v1973 = vunpack.c.l.bf16 %v1618
        %v1974 = vunpack.c.h.bf16 %v1618
        %v1975 = vunpack.c.l.bf16 %v1619
        %v1976 = vunpack.c.h.bf16 %v1619
        %v1977 = vunpack.c.l.bf16 %v1620
        %v1978 = vunpack.c.h.bf16 %v1620
        %v1979 = vunpack.c.l.bf16 %v1621
        %v1980 = vunpack.c.h.bf16 %v1621
        %v1981 = vunpack.c.l.bf16 %v1622
        %v1982 = vunpack.c.h.bf16 %v1622
        %v1983 = vunpack.c.l.bf16 %v1623
        %v1984 = vunpack.c.h.bf16 %v1623
        %v1985 = vunpack.c.l.bf16 %v1624
        %v1986 = vunpack.c.h.bf16 %v1624
        %v1987 = vunpack.c.l.bf16 %v1625
        %v1988 = vunpack.c.h.bf16 %v1625
        %v1989 = vunpack.c.l.bf16 %v1626
        %v1990 = vunpack.c.h.bf16 %v1626
        %v1991 = vunpack.c.l.bf16 %v1627
        %v1992 = vunpack.c.h.bf16 %v1627
        %v1993 = vunpack.c.l.bf16 %v1628
        %v1994 = vunpack.c.h.bf16 %v1628
        %v1995 = vunpack.c.l.bf16 %v1629
        %v1996 = vunpack.c.h.bf16 %v1629
        %v1997 = vunpack.c.l.bf16 %v1630
        %v1998 = vunpack.c.h.bf16 %v1630
        %v1999 = vunpack.c.l.bf16 %v1631
        %v2000 = vunpack.c.h.bf16 %v1631
        %v2001 = vunpack.c.l.bf16 %v1632
        %v2002 = vunpack.c.h.bf16 %v1632
        %v2003 = vunpack.c.l.bf16 %v1633
        %v2004 = vunpack.c.h.bf16 %v1633
        %v2005 = vunpack.c.l.bf16 %v1634
        %v2006 = vunpack.c.h.bf16 %v1634
        %v2007 = vunpack.c.l.bf16 %v1635
        %v2008 = vunpack.c.h.bf16 %v1635
        %v2009 = vunpack.c.l.bf16 %v1636
        %v2010 = vunpack.c.h.bf16 %v1636
        %v2011 = vunpack.c.l.bf16 %v1637
        %v2012 = vunpack.c.h.bf16 %v1637
        %v2013 = vunpack.c.l.bf16 %v1638
        %v2014 = vunpack.c.h.bf16 %v1638
        %v2015 = vunpack.c.l.bf16 %v1639
        %v2016 = vunpack.c.h.bf16 %v1639
        %v2017 = vunpack.c.l.bf16 %v1640
        %v2018 = vunpack.c.h.bf16 %v1640
        %v2019 = vunpack.c.l.bf16 %v1641
        %v2020 = vunpack.c.h.bf16 %v1641
        %v2021 = vunpack.c.l.bf16 %v1642
        %v2022 = vunpack.c.h.bf16 %v1642
        %v2023 = vunpack.c.l.bf16 %v1643
        %v2024 = vunpack.c.h.bf16 %v1643
        %v2025 = vunpack.c.l.bf16 %v1644
        %v2026 = vunpack.c.h.bf16 %v1644
        %v2027 = vunpack.c.l.bf16 %v1645
        %v2028 = vunpack.c.h.bf16 %v1645
        %v2029 = vunpack.c.l.bf16 %v1646
        %v2030 = vunpack.c.h.bf16 %v1646
        %v2031 = vunpack.c.l.bf16 %v1647
        %v2032 = vunpack.c.h.bf16 %v1647
        %v2033 = vunpack.c.l.bf16 %v1648
        %v2034 = vunpack.c.h.bf16 %v1648
        %v2035 = vunpack.c.l.bf16 %v1649
        %v2036 = vunpack.c.h.bf16 %v1649
        %v2037 = vunpack.c.l.bf16 %v1650
        %v2038 = vunpack.c.h.bf16 %v1650
        %v2039 = vunpack.c.l.bf16 %v1651
        %v2040 = vunpack.c.h.bf16 %v1651
        %v2041 = vunpack.c.l.bf16 %v1652
        %v2042 = vunpack.c.h.bf16 %v1652
        %v2043 = vunpack.c.l.bf16 %v1653
        %v2044 = vunpack.c.h.bf16 %v1653
        %v2045 = vunpack.c.l.bf16 %v1654
        %v2046 = vunpack.c.h.bf16 %v1654
        %v2047 = vunpack.c.l.bf16 %v1655
        %v2048 = vunpack.c.h.bf16 %v1655
        %v2049 = vunpack.c.l.bf16 %v1656
        %v2050 = vunpack.c.h.bf16 %v1656
        %v2051 = vunpack.c.l.bf16 %v1657
        %v2052 = vunpack.c.h.bf16 %v1657
        %v2053 = vunpack.c.l.bf16 %v1658
        %v2054 = vunpack.c.h.bf16 %v1658
        %v2055 = vunpack.c.l.bf16 %v1659
        %v2056 = vunpack.c.h.bf16 %v1659
        %v2057 = vunpack.c.l.bf16 %v1660
        %v2058 = vunpack.c.h.bf16 %v1660
        %v2059 = vunpack.c.l.bf16 %v1661
        %v2060 = vunpack.c.h.bf16 %v1661
        %v2061 = vunpack.c.l.bf16 %v1662
        %v2062 = vunpack.c.h.bf16 %v1662
        %v2063 = vunpack.c.l.bf16 %v1663
        %v2064 = vunpack.c.h.bf16 %v1663
        %v2065 = vunpack.c.l.bf16 %v1664
        %v2066 = vunpack.c.h.bf16 %v1664
        %v2067 = vunpack.c.l.bf16 %v1665
        %v2068 = vunpack.c.h.bf16 %v1665
        %v2069 = vunpack.c.l.bf16 %v1666
        %v2070 = vunpack.c.h.bf16 %v1666
        %v2071 = vunpack.c.l.bf16 %v1667
        %v2072 = vunpack.c.h.bf16 %v1667
        %v2073 = vunpack.c.l.bf16 %v1668
        %v2074 = vunpack.c.h.bf16 %v1668
        %v2075 = vunpack.c.l.bf16 %v1669
        %v2076 = vunpack.c.h.bf16 %v1669
        %v2077 = vunpack.c.l.bf16 %v1670
        %v2078 = vunpack.c.h.bf16 %v1670
        %v2079 = vunpack.c.l.bf16 %v1671
        %v2080 = vunpack.c.h.bf16 %v1671
        %v2081 = vunpack.c.l.bf16 %v1672
        %v2082 = vunpack.c.h.bf16 %v1672
        %v2083 = vunpack.c.l.bf16 %v1673
        %v2084 = vunpack.c.h.bf16 %v1673
        %v2085 = vunpack.c.l.bf16 %v1674
        %v2086 = vunpack.c.h.bf16 %v1674
        %v2087 = vunpack.c.l.bf16 %v1675
        %v2088 = vunpack.c.h.bf16 %v1675
        %v2089 = vunpack.c.l.bf16 %v1676
        %v2090 = vunpack.c.h.bf16 %v1676
        %v2091 = vunpack.c.l.bf16 %v1677
        %v2092 = vunpack.c.h.bf16 %v1677
        %v2093 = vunpack.c.l.bf16 %v1678
        %v2094 = vunpack.c.h.bf16 %v1678
        %v2095 = vunpack.c.l.bf16 %v1679
        %v2096 = vunpack.c.h.bf16 %v1679
        %v2097 = vunpack.c.l.bf16 %v1680
        %v2098 = vunpack.c.h.bf16 %v1680
        %v2099 = vunpack.c.l.bf16 %v1681
        %v2100 = vunpack.c.h.bf16 %v1681
        %v2101 = vunpack.c.l.bf16 %v1682
        %v2102 = vunpack.c.h.bf16 %v1682
        %v2103 = vunpack.c.l.bf16 %v1683
        %v2104 = vunpack.c.h.bf16 %v1683
        %v2105 = vunpack.c.l.bf16 %v1684
        %v2106 = vunpack.c.h.bf16 %v1684
        %v2107 = vunpack.c.l.bf16 %v1685
        %v2108 = vunpack.c.h.bf16 %v1685
        %v2109 = vunpack.c.l.bf16 %v1686
        %v2110 = vunpack.c.h.bf16 %v1686
        %v2111 = vunpack.c.l.bf16 %v1687
        %v2112 = vunpack.c.h.bf16 %v1687
        %v2113 = vunpack.c.l.bf16 %v1688
        %v2114 = vunpack.c.h.bf16 %v1688
        %v2115 = vunpack.c.l.bf16 %v1689
        %v2116 = vunpack.c.h.bf16 %v1689
        %v2117 = vunpack.c.l.bf16 %v1690
        %v2118 = vunpack.c.h.bf16 %v1690
        %v2119 = vunpack.c.l.bf16 %v1691
        %v2120 = vunpack.c.h.bf16 %v1691
        %v2121 = vunpack.c.l.bf16 %v1692
        %v2122 = vunpack.c.h.bf16 %v1692
        %v2123 = vunpack.c.l.bf16 %v1693
        %v2124 = vunpack.c.h.bf16 %v1693
        %v2125 = vunpack.c.l.bf16 %v1694
        %v2126 = vunpack.c.h.bf16 %v1694
        %v2127 = vunpack.c.l.bf16 %v1695
        %v2128 = vunpack.c.h.bf16 %v1695
        %v2129 = vunpack.c.l.bf16 %v1696
        %v2130 = vunpack.c.h.bf16 %v1696
        %v2131 = vunpack.c.l.bf16 %v1697
        %v2132 = vunpack.c.h.bf16 %v1697
        %v2133 = vunpack.c.l.bf16 %v1698
        %v2134 = vunpack.c.h.bf16 %v1698
        %v2135 = vunpack.c.l.bf16 %v1699
        %v2136 = vunpack.c.h.bf16 %v1699
        %v2137 = vunpack.c.l.bf16 %v1700
        %v2138 = vunpack.c.h.bf16 %v1700
        %v2139 = vunpack.c.l.bf16 %v1701
        %v2140 = vunpack.c.h.bf16 %v1701
        %v2141 = vunpack.c.l.bf16 %v1702
        %v2142 = vunpack.c.h.bf16 %v1702
        %v2143 = vunpack.c.l.bf16 %v1703
        %v2144 = vunpack.c.h.bf16 %v1703
        %v2145 = vunpack.c.l.bf16 %v1704
        %v2146 = vunpack.c.h.bf16 %v1704
        %v2147 = vunpack.c.l.bf16 %v1705
        %v2148 = vunpack.c.h.bf16 %v1705
        %v2149 = vunpack.c.l.bf16 %v1706
        %v2150 = vunpack.c.h.bf16 %v1706
        %v2151 = vunpack.c.l.bf16 %v1707
        %v2152 = vunpack.c.h.bf16 %v1707
        %v2153 = vunpack.c.l.bf16 %v1708
        %v2154 = vunpack.c.h.bf16 %v1708
        %v2155 = vunpack.c.l.bf16 %v1709
        %v2156 = vunpack.c.h.bf16 %v1709
        %v2157 = vunpack.c.l.bf16 %v1710
        %v2158 = vunpack.c.h.bf16 %v1710
        %v2159 = vunpack.c.l.bf16 %v1711
        %v2160 = vunpack.c.h.bf16 %v1711
        %v2161 = vunpack.c.l.bf16 %v1712
        %v2162 = vunpack.c.h.bf16 %v1712
        %v2163 = vunpack.c.l.bf16 %v1713
        %v2164 = vunpack.c.h.bf16 %v1713
        %v2165 = vunpack.c.l.bf16 %v1714
        %v2166 = vunpack.c.h.bf16 %v1714
        %v2167 = vunpack.c.l.bf16 %v1715
        %v2168 = vunpack.c.h.bf16 %v1715
        %v2169 = vunpack.c.l.bf16 %v1716
        %v2170 = vunpack.c.h.bf16 %v1716
        %v2171 = vunpack.c.l.bf16 %v1717
        %v2172 = vunpack.c.h.bf16 %v1717
        %v2173 = vunpack.c.l.bf16 %v1718
        %v2174 = vunpack.c.h.bf16 %v1718
        %v2175 = vunpack.c.l.bf16 %v1719
        %v2176 = vunpack.c.h.bf16 %v1719
        %v2177 = vunpack.c.l.bf16 %v1720
        %v2178 = vunpack.c.h.bf16 %v1720
        %v2179 = vunpack.c.l.bf16 %v1721
        %v2180 = vunpack.c.h.bf16 %v1721
        %v2181 = vunpack.c.l.bf16 %v1722
        %v2182 = vunpack.c.h.bf16 %v1722
        %v2183 = vunpack.c.l.bf16 %v1723
        %v2184 = vunpack.c.h.bf16 %v1723
        %v2185 = vunpack.c.l.bf16 %v1724
        %v2186 = vunpack.c.h.bf16 %v1724
        %v2187 = vunpack.c.l.bf16 %v1725
        %v2188 = vunpack.c.h.bf16 %v1725
        %v2189 = vunpack.c.l.bf16 %v1726
        %v2190 = vunpack.c.h.bf16 %v1726
        %v2191 = vunpack.c.l.bf16 %v1727
        %v2192 = vunpack.c.h.bf16 %v1727
        %v2193 = vunpack.c.l.bf16 %v1728
        %v2194 = vunpack.c.h.bf16 %v1728
        %v2195 = vunpack.c.l.bf16 %v1729
        %v2196 = vunpack.c.h.bf16 %v1729
        %v2197 = vunpack.c.l.bf16 %v1730
        %v2198 = vunpack.c.h.bf16 %v1730
        %v2199 = vunpack.c.l.bf16 %v1731
        %v2200 = vunpack.c.h.bf16 %v1731
        %v2201 = vunpack.c.l.bf16 %v1732
        %v2202 = vunpack.c.h.bf16 %v1732
        %v2203 = vunpack.c.l.bf16 %v1733
        %v2204 = vunpack.c.h.bf16 %v1733
        %v2205 = vunpack.c.l.bf16 %v1734
        %v2206 = vunpack.c.h.bf16 %v1734
        %v2207 = vunpack.c.l.bf16 %v1735
        %v2208 = vunpack.c.h.bf16 %v1735
        %v2209 = vunpack.c.l.bf16 %v1736
        %v2210 = vunpack.c.h.bf16 %v1736
        %v2211 = vunpack.c.l.bf16 %v1737
        %v2212 = vunpack.c.h.bf16 %v1737
        %v2213 = vunpack.c.l.bf16 %v1738
        %v2214 = vunpack.c.h.bf16 %v1738
        %v2215 = vunpack.c.l.bf16 %v1739
        %v2216 = vunpack.c.h.bf16 %v1739
        %v2217 = vunpack.c.l.bf16 %v1740
        %v2218 = vunpack.c.h.bf16 %v1740
        %v2219 = vunpack.c.l.bf16 %v1741
        %v2220 = vunpack.c.h.bf16 %v1741
        %v2221 = vunpack.c.l.bf16 %v1742
        %v2222 = vunpack.c.h.bf16 %v1742
        %v2223 = vunpack.c.l.bf16 %v1743
        %v2224 = vunpack.c.h.bf16 %v1743
        %v2225 = vunpack.c.l.bf16 %v1744
        %v2226 = vunpack.c.h.bf16 %v1744
        %v2227 = vunpack.c.l.bf16 %v1745
        %v2228 = vunpack.c.h.bf16 %v1745
        %v2229 = vunpack.c.l.bf16 %v1746
        %v2230 = vunpack.c.h.bf16 %v1746
        %v2231 = vunpack.c.l.bf16 %v1747
        %v2232 = vunpack.c.h.bf16 %v1747
        %v2233 = vunpack.c.l.bf16 %v1748
        %v2234 = vunpack.c.h.bf16 %v1748
        %v2235 = vunpack.c.l.bf16 %v1749
        %v2236 = vunpack.c.h.bf16 %v1749
        %v2237 = vunpack.c.l.bf16 %v1750
        %v2238 = vunpack.c.h.bf16 %v1750
        %v2239 = vunpack.c.l.bf16 %v1751
        %v2240 = vunpack.c.h.bf16 %v1751
        %v2241 = vunpack.c.l.bf16 %v1752
        %v2242 = vunpack.c.h.bf16 %v1752
        %v2243 = vunpack.c.l.bf16 %v1753
        %v2244 = vunpack.c.h.bf16 %v1753
        %v2245 = vunpack.c.l.bf16 %v1754
        %v2246 = vunpack.c.h.bf16 %v1754
        %v2247 = vunpack.c.l.bf16 %v1755
        %v2248 = vunpack.c.h.bf16 %v1755
        %v2249 = vunpack.c.l.bf16 %v1756
        %v2250 = vunpack.c.h.bf16 %v1756
        %v2251 = vunpack.c.l.bf16 %v1757
        %v2252 = vunpack.c.h.bf16 %v1757
        %v2253 = vunpack.c.l.bf16 %v1758
        %v2254 = vunpack.c.h.bf16 %v1758
        %v2255 = vunpack.c.l.bf16 %v1759
        %v2256 = vunpack.c.h.bf16 %v1759
        %v2257 = vunpack.c.l.bf16 %v1760
        %v2258 = vunpack.c.h.bf16 %v1760
        %v2259 = vunpack.c.l.bf16 %v1761
        %v2260 = vunpack.c.h.bf16 %v1761
        %v2261 = vunpack.c.l.bf16 %v1762
        %v2262 = vunpack.c.h.bf16 %v1762
        %v2263 = vunpack.c.l.bf16 %v1763
        %v2264 = vunpack.c.h.bf16 %v1763
        %v2265 = vunpack.c.l.bf16 %v1764
        %v2266 = vunpack.c.h.bf16 %v1764
        %v2267 = vunpack.c.l.bf16 %v1765
        %v2268 = vunpack.c.h.bf16 %v1765
        %v2269 = vunpack.c.l.bf16 %v1766
        %v2270 = vunpack.c.h.bf16 %v1766
        %v2271 = vunpack.c.l.bf16 %v1767
        %v2272 = vunpack.c.h.bf16 %v1767
        %v2273 = vunpack.c.l.bf16 %v1768
        %v2274 = vunpack.c.h.bf16 %v1768
        %v2275 = vunpack.c.l.bf16 %v1769
        %v2276 = vunpack.c.h.bf16 %v1769
        %v2277 = vunpack.c.l.bf16 %v1770
        %v2278 = vunpack.c.h.bf16 %v1770
        %v2279 = vunpack.c.l.bf16 %v1771
        %v2280 = vunpack.c.h.bf16 %v1771
        %v2281 = vunpack.c.l.bf16 %v1772
        %v2282 = vunpack.c.h.bf16 %v1772
        %v2283 = vunpack.c.l.bf16 %v1773
        %v2284 = vunpack.c.h.bf16 %v1773
        %v2285 = vunpack.c.l.bf16 %v1774
        %v2286 = vunpack.c.h.bf16 %v1774
        %2287 = vmatprep.subr.mxu0 %v1896
        %2288 = vmatpush1.msra.mxu0 %v1895
        %2289 = vmatprep.subr.mxu0 %v1888
        %2290 = vmatpush1.msra.mxu0 %v1887
        %2291 = vmatprep.subr.mxu0 %v1880
        %2292 = vmatpush1.msra.mxu0 %v1879
        %2293 = vmatprep.subr.mxu0 %v1872
        %2294 = vmatpush1.msra.mxu0 %v1871
        %2295 = vmatprep.subr.mxu0 %v1864
        %2296 = vmatpush1.msra.mxu0 %v1863
        %2297 = vmatprep.subr.mxu0 %v1856
        %2298 = vmatpush1.msra.mxu0 %v1855
        %2299 = vmatprep.subr.mxu0 %v1848
        %2300 = vmatpush1.msra.mxu0 %v1847
        %2301 = vmatprep.subr.mxu0 %v1840
        %2302 = vmatpush1.msra.mxu0 %v1839
        %2303 = vmatprep.subr.mxu0 %v1832
        %2304 = vmatpush1.msra.mxu0 %v1831
        %2305 = vmatprep.subr.mxu0 %v1824
        %2306 = vmatpush1.msra.mxu0 %v1823
        %2307 = vmatprep.subr.mxu0 %v1816
        %2308 = vmatpush1.msra.mxu0 %v1815
        %2309 = vmatprep.subr.mxu0 %v1808
        %2310 = vmatpush1.msra.mxu0 %v1807
        %2311 = vmatprep.subr.mxu0 %v1800
        %2312 = vmatpush1.msra.mxu0 %v1799
        %2313 = vmatprep.subr.mxu0 %v1792
        %2314 = vmatpush1.msra.mxu0 %v1791
        %2315 = vmatprep.subr.mxu0 %v1784
        %2316 = vmatpush1.msra.mxu0 %v1783
        %2317 = vmatprep.subr.mxu0 %v1776
        %2318 = vmatpush1.msra.mxu0 %v1775
        %2319 = vmatprep.subr.mxu0 %v2024
        %2320 = vmatpush2.msra.mxu0 %v2023
        %2321 = vmatprep.subr.mxu0 %v2016
        %2322 = vmatpush2.msra.mxu0 %v2015
        %2323 = vmatprep.subr.mxu0 %v2008
        %2324 = vmatpush2.msra.mxu0 %v2007
        %2325 = vmatprep.subr.mxu0 %v2000
        %2326 = vmatpush2.msra.mxu0 %v1999
        %2327 = vmatprep.subr.mxu0 %v1992
        %2328 = vmatpush2.msra.mxu0 %v1991
        %2329 = vmatprep.subr.mxu0 %v1984
        %2330 = vmatpush2.msra.mxu0 %v1983
        %2331 = vmatprep.subr.mxu0 %v1976
        %2332 = vmatpush2.msra.mxu0 %v1975
        %2333 = vmatprep.subr.mxu0 %v1968
        %2334 = vmatpush2.msra.mxu0 %v1967
        %2335 = vmatprep.subr.mxu0 %v1960
        %2336 = vmatpush2.msra.mxu0 %v1959
        %2337 = vmatprep.subr.mxu0 %v1952
        %2338 = vmatpush2.msra.mxu0 %v1951
        %2339 = vmatprep.subr.mxu0 %v1944
        %2340 = vmatpush2.msra.mxu0 %v1943
        %2341 = vmatprep.subr.mxu0 %v1936
        %2342 = vmatpush2.msra.mxu0 %v1935
        %2343 = vmatprep.subr.mxu0 %v1928
        %2344 = vmatpush2.msra.mxu0 %v1927
        %2345 = vmatprep.subr.mxu0 %v1920
        %2346 = vmatpush2.msra.mxu0 %v1919
        %2347 = vmatprep.subr.mxu0 %v1912
        %2348 = vmatpush2.msra.mxu0 %v1911
        %2349 = vmatprep.subr.mxu0 %v1904
        %2350 = vmatpush2.msra.mxu0 %v1903
        %2351 = vmatprep.mubr.f32.mxu0 %v1516
        %2352 = vmatmul.mubr.f32.gmra.mxu0 %v1515
        %v2353 = vpop.f32.mrf.mxu0
        %v2354 = vadd.f32 0.0, %v2353
        %v2355 = vpop.f32.mrf.mxu0
        %v2356 = vadd.f32 0.0, %v2355
        %2357 = vdwg.mxu0
        %2358 = vmatprep.subr.mxu0 %v2152
        %2359 = vmatpush1.msra.mxu0 %v2151
        %2360 = vmatprep.subr.mxu0 %v2144
        %2361 = vmatpush1.msra.mxu0 %v2143
        %2362 = vmatprep.subr.mxu0 %v2136
        %2363 = vmatpush1.msra.mxu0 %v2135
        %2364 = vmatprep.subr.mxu0 %v2128
        %2365 = vmatpush1.msra.mxu0 %v2127
        %2366 = vmatprep.subr.mxu0 %v2120
        %2367 = vmatpush1.msra.mxu0 %v2119
        %2368 = vmatprep.subr.mxu0 %v2112
        %2369 = vmatpush1.msra.mxu0 %v2111
        %2370 = vmatprep.subr.mxu0 %v2104
        %2371 = vmatpush1.msra.mxu0 %v2103
        %2372 = vmatprep.subr.mxu0 %v2096
        %2373 = vmatpush1.msra.mxu0 %v2095
        %2374 = vmatprep.subr.mxu0 %v2088
        %2375 = vmatpush1.msra.mxu0 %v2087
        %2376 = vmatprep.subr.mxu0 %v2080
        %2377 = vmatpush1.msra.mxu0 %v2079
        %2378 = vmatprep.subr.mxu0 %v2072
        %2379 = vmatpush1.msra.mxu0 %v2071
        %2380 = vmatprep.subr.mxu0 %v2064
        %2381 = vmatpush1.msra.mxu0 %v2063
        %2382 = vmatprep.subr.mxu0 %v2056
        %2383 = vmatpush1.msra.mxu0 %v2055
        %2384 = vmatprep.subr.mxu0 %v2048
        %2385 = vmatpush1.msra.mxu0 %v2047
        %2386 = vmatprep.subr.mxu0 %v2040
        %2387 = vmatpush1.msra.mxu0 %v2039
        %2388 = vmatprep.subr.mxu0 %v2032
        %2389 = vmatpush1.msra.mxu0 %v2031
        %2390 = vmatprep.subr.mxu0 %v2280
        %2391 = vmatpush2.msra.mxu0 %v2279
        %2392 = vmatprep.subr.mxu0 %v2272
        %2393 = vmatpush2.msra.mxu0 %v2271
        %2394 = vmatprep.subr.mxu0 %v2264
        %2395 = vmatpush2.msra.mxu0 %v2263
        %2396 = vmatprep.subr.mxu0 %v2256
        %2397 = vmatpush2.msra.mxu0 %v2255
        %2398 = vmatprep.subr.mxu0 %v2248
        %2399 = vmatpush2.msra.mxu0 %v2247
        %2400 = vmatprep.subr.mxu0 %v2240
        %2401 = vmatpush2.msra.mxu0 %v2239
        %2402 = vmatprep.subr.mxu0 %v2232
        %2403 = vmatpush2.msra.mxu0 %v2231
        %2404 = vmatprep.subr.mxu0 %v2224
        %2405 = vmatpush2.msra.mxu0 %v2223
        %2406 = vmatprep.subr.mxu0 %v2216
        %2407 = vmatpush2.msra.mxu0 %v2215
        %2408 = vmatprep.subr.mxu0 %v2208
        %2409 = vmatpush2.msra.mxu0 %v2207
        %2410 = vmatprep.subr.mxu0 %v2200
        %2411 = vmatpush2.msra.mxu0 %v2199
        %2412 = vmatprep.subr.mxu0 %v2192
        %2413 = vmatpush2.msra.mxu0 %v2191
        %2414 = vmatprep.subr.mxu0 %v2184
        %2415 = vmatpush2.msra.mxu0 %v2183
        %2416 = vmatprep.subr.mxu0 %v2176
        %2417 = vmatpush2.msra.mxu0 %v2175
        %2418 = vmatprep.subr.mxu0 %v2168
        %2419 = vmatpush2.msra.mxu0 %v2167
        %2420 = vmatprep.subr.mxu0 %v2160
        %2421 = vmatpush2.msra.mxu0 %v2159
        %2422 = vmatprep.mubr.f32.mxu0 %v1518
        %2423 = vmatmul.mubr.f32.gmra.mxu0 %v1517
        %v2424 = vpop.f32.mrf.mxu0
        %v2425 = vadd.f32 %v2354, %v2424
        %v2426 = vpop.f32.mrf.mxu0
        %v2427 = vadd.f32 %v2356, %v2426
        %2428 = vdwg.mxu0
        %2429 = vmatprep.subr.mxu0 %v1898
        %2430 = vmatpush1.msra.mxu0 %v1897
        %2431 = vmatprep.subr.mxu0 %v1890
        %2432 = vmatpush1.msra.mxu0 %v1889
        %2433 = vmatprep.subr.mxu0 %v1882
        %2434 = vmatpush1.msra.mxu0 %v1881
        %2435 = vmatprep.subr.mxu0 %v1874
        %2436 = vmatpush1.msra.mxu0 %v1873
        %2437 = vmatprep.subr.mxu0 %v1866
        %2438 = vmatpush1.msra.mxu0 %v1865
        %2439 = vmatprep.subr.mxu0 %v1858
        %2440 = vmatpush1.msra.mxu0 %v1857
        %2441 = vmatprep.subr.mxu0 %v1850
        %2442 = vmatpush1.msra.mxu0 %v1849
        %2443 = vmatprep.subr.mxu0 %v1842
        %2444 = vmatpush1.msra.mxu0 %v1841
        %2445 = vmatprep.subr.mxu0 %v1834
        %2446 = vmatpush1.msra.mxu0 %v1833
        %2447 = vmatprep.subr.mxu0 %v1826
        %2448 = vmatpush1.msra.mxu0 %v1825
        %2449 = vmatprep.subr.mxu0 %v1818
        %2450 = vmatpush1.msra.mxu0 %v1817
        %2451 = vmatprep.subr.mxu0 %v1810
        %2452 = vmatpush1.msra.mxu0 %v1809
        %2453 = vmatprep.subr.mxu0 %v1802
        %2454 = vmatpush1.msra.mxu0 %v1801
        %2455 = vmatprep.subr.mxu0 %v1794
        %2456 = vmatpush1.msra.mxu0 %v1793
        %2457 = vmatprep.subr.mxu0 %v1786
        %2458 = vmatpush1.msra.mxu0 %v1785
        %2459 = vmatprep.subr.mxu0 %v1778
        %2460 = vmatpush1.msra.mxu0 %v1777
        %2461 = vmatprep.subr.mxu0 %v2026
        %2462 = vmatpush2.msra.mxu0 %v2025
        %2463 = vmatprep.subr.mxu0 %v2018
        %2464 = vmatpush2.msra.mxu0 %v2017
        %2465 = vmatprep.subr.mxu0 %v2010
        %2466 = vmatpush2.msra.mxu0 %v2009
        %2467 = vmatprep.subr.mxu0 %v2002
        %2468 = vmatpush2.msra.mxu0 %v2001
        %2469 = vmatprep.subr.mxu0 %v1994
        %2470 = vmatpush2.msra.mxu0 %v1993
        %2471 = vmatprep.subr.mxu0 %v1986
        %2472 = vmatpush2.msra.mxu0 %v1985
        %2473 = vmatprep.subr.mxu0 %v1978
        %2474 = vmatpush2.msra.mxu0 %v1977
        %2475 = vmatprep.subr.mxu0 %v1970
        %2476 = vmatpush2.msra.mxu0 %v1969
        %2477 = vmatprep.subr.mxu0 %v1962
        %2478 = vmatpush2.msra.mxu0 %v1961
        %2479 = vmatprep.subr.mxu0 %v1954
        %2480 = vmatpush2.msra.mxu0 %v1953
        %2481 = vmatprep.subr.mxu0 %v1946
        %2482 = vmatpush2.msra.mxu0 %v1945
        %2483 = vmatprep.subr.mxu0 %v1938
        %2484 = vmatpush2.msra.mxu0 %v1937
        %2485 = vmatprep.subr.mxu0 %v1930
        %2486 = vmatpush2.msra.mxu0 %v1929
        %2487 = vmatprep.subr.mxu0 %v1922
        %2488 = vmatpush2.msra.mxu0 %v1921
        %2489 = vmatprep.subr.mxu0 %v1914
        %2490 = vmatpush2.msra.mxu0 %v1913
        %2491 = vmatprep.subr.mxu0 %v1906
        %2492 = vmatpush2.msra.mxu0 %v1905
        %2493 = vmatprep.mubr.f32.mxu0 %v1516
        %2494 = vmatmul.mubr.f32.gmra.mxu0 %v1515
        %v2495 = vpop.f32.mrf.mxu0
        %v2496 = vadd.f32 0.0, %v2495
        %v2497 = vpop.f32.mrf.mxu0
        %v2498 = vadd.f32 0.0, %v2497
        %2499 = vdwg.mxu0
        %2500 = vmatprep.subr.mxu0 %v2154
        %2501 = vmatpush1.msra.mxu0 %v2153
        %2502 = vmatprep.subr.mxu0 %v2146
        %2503 = vmatpush1.msra.mxu0 %v2145
        %2504 = vmatprep.subr.mxu0 %v2138
        %2505 = vmatpush1.msra.mxu0 %v2137
        %2506 = vmatprep.subr.mxu0 %v2130
        %2507 = vmatpush1.msra.mxu0 %v2129
        %2508 = vmatprep.subr.mxu0 %v2122
        %2509 = vmatpush1.msra.mxu0 %v2121
        %2510 = vmatprep.subr.mxu0 %v2114
        %2511 = vmatpush1.msra.mxu0 %v2113
        %2512 = vmatprep.subr.mxu0 %v2106
        %2513 = vmatpush1.msra.mxu0 %v2105
        %2514 = vmatprep.subr.mxu0 %v2098
        %2515 = vmatpush1.msra.mxu0 %v2097
        %2516 = vmatprep.subr.mxu0 %v2090
        %2517 = vmatpush1.msra.mxu0 %v2089
        %2518 = vmatprep.subr.mxu0 %v2082
        %2519 = vmatpush1.msra.mxu0 %v2081
        %2520 = vmatprep.subr.mxu0 %v2074
        %2521 = vmatpush1.msra.mxu0 %v2073
        %2522 = vmatprep.subr.mxu0 %v2066
        %2523 = vmatpush1.msra.mxu0 %v2065
        %2524 = vmatprep.subr.mxu0 %v2058
        %2525 = vmatpush1.msra.mxu0 %v2057
        %2526 = vmatprep.subr.mxu0 %v2050
        %2527 = vmatpush1.msra.mxu0 %v2049
        %2528 = vmatprep.subr.mxu0 %v2042
        %2529 = vmatpush1.msra.mxu0 %v2041
        %2530 = vmatprep.subr.mxu0 %v2034
        %2531 = vmatpush1.msra.mxu0 %v2033
        %2532 = vmatprep.subr.mxu0 %v2282
        %2533 = vmatpush2.msra.mxu0 %v2281
        %2534 = vmatprep.subr.mxu0 %v2274
        %2535 = vmatpush2.msra.mxu0 %v2273
        %2536 = vmatprep.subr.mxu0 %v2266
        %2537 = vmatpush2.msra.mxu0 %v2265
        %2538 = vmatprep.subr.mxu0 %v2258
        %2539 = vmatpush2.msra.mxu0 %v2257
        %2540 = vmatprep.subr.mxu0 %v2250
        %2541 = vmatpush2.msra.mxu0 %v2249
        %2542 = vmatprep.subr.mxu0 %v2242
        %2543 = vmatpush2.msra.mxu0 %v2241
        %2544 = vmatprep.subr.mxu0 %v2234
        %2545 = vmatpush2.msra.mxu0 %v2233
        %2546 = vmatprep.subr.mxu0 %v2226
        %2547 = vmatpush2.msra.mxu0 %v2225
        %2548 = vmatprep.subr.mxu0 %v2218
        %2549 = vmatpush2.msra.mxu0 %v2217
        %2550 = vmatprep.subr.mxu0 %v2210
        %2551 = vmatpush2.msra.mxu0 %v2209
        %2552 = vmatprep.subr.mxu0 %v2202
        %2553 = vmatpush2.msra.mxu0 %v2201
        %2554 = vmatprep.subr.mxu0 %v2194
        %2555 = vmatpush2.msra.mxu0 %v2193
        %2556 = vmatprep.subr.mxu0 %v2186
        %2557 = vmatpush2.msra.mxu0 %v2185
        %2558 = vmatprep.subr.mxu0 %v2178
        %2559 = vmatpush2.msra.mxu0 %v2177
        %2560 = vmatprep.subr.mxu0 %v2170
        %2561 = vmatpush2.msra.mxu0 %v2169
        %2562 = vmatprep.subr.mxu0 %v2162
        %2563 = vmatpush2.msra.mxu0 %v2161
        %2564 = vmatprep.mubr.f32.mxu0 %v1518
        %2565 = vmatmul.mubr.f32.gmra.mxu0 %v1517
        %v2566 = vpop.f32.mrf.mxu0
        %v2567 = vadd.f32 %v2496, %v2566
        %v2568 = vpop.f32.mrf.mxu0
        %v2569 = vadd.f32 %v2498, %v2568
        %2570 = vdwg.mxu0
        %2571 = vmatprep.subr.mxu0 %v1900
        %2572 = vmatpush1.msra.mxu0 %v1899
        %2573 = vmatprep.subr.mxu0 %v1892
        %2574 = vmatpush1.msra.mxu0 %v1891
        %2575 = vmatprep.subr.mxu0 %v1884
        %2576 = vmatpush1.msra.mxu0 %v1883
        %2577 = vmatprep.subr.mxu0 %v1876
        %2578 = vmatpush1.msra.mxu0 %v1875
        %2579 = vmatprep.subr.mxu0 %v1868
        %2580 = vmatpush1.msra.mxu0 %v1867
        %2581 = vmatprep.subr.mxu0 %v1860
        %2582 = vmatpush1.msra.mxu0 %v1859
        %2583 = vmatprep.subr.mxu0 %v1852
        %2584 = vmatpush1.msra.mxu0 %v1851
        %2585 = vmatprep.subr.mxu0 %v1844
        %2586 = vmatpush1.msra.mxu0 %v1843
        %2587 = vmatprep.subr.mxu0 %v1836
        %2588 = vmatpush1.msra.mxu0 %v1835
        %2589 = vmatprep.subr.mxu0 %v1828
        %2590 = vmatpush1.msra.mxu0 %v1827
        %2591 = vmatprep.subr.mxu0 %v1820
        %2592 = vmatpush1.msra.mxu0 %v1819
        %2593 = vmatprep.subr.mxu0 %v1812
        %2594 = vmatpush1.msra.mxu0 %v1811
        %2595 = vmatprep.subr.mxu0 %v1804
        %2596 = vmatpush1.msra.mxu0 %v1803
        %2597 = vmatprep.subr.mxu0 %v1796
        %2598 = vmatpush1.msra.mxu0 %v1795
        %2599 = vmatprep.subr.mxu0 %v1788
        %2600 = vmatpush1.msra.mxu0 %v1787
        %2601 = vmatprep.subr.mxu0 %v1780
        %2602 = vmatpush1.msra.mxu0 %v1779
        %2603 = vmatprep.subr.mxu0 %v2028
        %2604 = vmatpush2.msra.mxu0 %v2027
        %2605 = vmatprep.subr.mxu0 %v2020
        %2606 = vmatpush2.msra.mxu0 %v2019
        %2607 = vmatprep.subr.mxu0 %v2012
        %2608 = vmatpush2.msra.mxu0 %v2011
        %2609 = vmatprep.subr.mxu0 %v2004
        %2610 = vmatpush2.msra.mxu0 %v2003
        %2611 = vmatprep.subr.mxu0 %v1996
        %2612 = vmatpush2.msra.mxu0 %v1995
        %2613 = vmatprep.subr.mxu0 %v1988
        %2614 = vmatpush2.msra.mxu0 %v1987
        %2615 = vmatprep.subr.mxu0 %v1980
        %2616 = vmatpush2.msra.mxu0 %v1979
        %2617 = vmatprep.subr.mxu0 %v1972
        %2618 = vmatpush2.msra.mxu0 %v1971
        %2619 = vmatprep.subr.mxu0 %v1964
        %2620 = vmatpush2.msra.mxu0 %v1963
        %2621 = vmatprep.subr.mxu0 %v1956
        %2622 = vmatpush2.msra.mxu0 %v1955
        %2623 = vmatprep.subr.mxu0 %v1948
        %2624 = vmatpush2.msra.mxu0 %v1947
        %2625 = vmatprep.subr.mxu0 %v1940
        %2626 = vmatpush2.msra.mxu0 %v1939
        %2627 = vmatprep.subr.mxu0 %v1932
        %2628 = vmatpush2.msra.mxu0 %v1931
        %2629 = vmatprep.subr.mxu0 %v1924
        %2630 = vmatpush2.msra.mxu0 %v1923
        %2631 = vmatprep.subr.mxu0 %v1916
        %2632 = vmatpush2.msra.mxu0 %v1915
        %2633 = vmatprep.subr.mxu0 %v1908
        %2634 = vmatpush2.msra.mxu0 %v1907
        %2635 = vmatprep.mubr.f32.mxu0 %v1516
        %2636 = vmatmul.mubr.f32.gmra.mxu0 %v1515
        %v2637 = vpop.f32.mrf.mxu0
        %v2638 = vadd.f32 0.0, %v2637
        %v2639 = vpop.f32.mrf.mxu0
        %v2640 = vadd.f32 0.0, %v2639
        %2641 = vdwg.mxu0
        %2642 = vmatprep.subr.mxu0 %v2156
        %2643 = vmatpush1.msra.mxu0 %v2155
        %2644 = vmatprep.subr.mxu0 %v2148
        %2645 = vmatpush1.msra.mxu0 %v2147
        %2646 = vmatprep.subr.mxu0 %v2140
        %2647 = vmatpush1.msra.mxu0 %v2139
        %2648 = vmatprep.subr.mxu0 %v2132
        %2649 = vmatpush1.msra.mxu0 %v2131
        %2650 = vmatprep.subr.mxu0 %v2124
        %2651 = vmatpush1.msra.mxu0 %v2123
        %2652 = vmatprep.subr.mxu0 %v2116
        %2653 = vmatpush1.msra.mxu0 %v2115
        %2654 = vmatprep.subr.mxu0 %v2108
        %2655 = vmatpush1.msra.mxu0 %v2107
        %2656 = vmatprep.subr.mxu0 %v2100
        %2657 = vmatpush1.msra.mxu0 %v2099
        %2658 = vmatprep.subr.mxu0 %v2092
        %2659 = vmatpush1.msra.mxu0 %v2091
        %2660 = vmatprep.subr.mxu0 %v2084
        %2661 = vmatpush1.msra.mxu0 %v2083
        %2662 = vmatprep.subr.mxu0 %v2076
        %2663 = vmatpush1.msra.mxu0 %v2075
        %2664 = vmatprep.subr.mxu0 %v2068
        %2665 = vmatpush1.msra.mxu0 %v2067
        %2666 = vmatprep.subr.mxu0 %v2060
        %2667 = vmatpush1.msra.mxu0 %v2059
        %2668 = vmatprep.subr.mxu0 %v2052
        %2669 = vmatpush1.msra.mxu0 %v2051
        %2670 = vmatprep.subr.mxu0 %v2044
        %2671 = vmatpush1.msra.mxu0 %v2043
        %2672 = vmatprep.subr.mxu0 %v2036
        %2673 = vmatpush1.msra.mxu0 %v2035
        %2674 = vmatprep.subr.mxu0 %v2284
        %2675 = vmatpush2.msra.mxu0 %v2283
        %2676 = vmatprep.subr.mxu0 %v2276
        %2677 = vmatpush2.msra.mxu0 %v2275
        %2678 = vmatprep.subr.mxu0 %v2268
        %2679 = vmatpush2.msra.mxu0 %v2267
        %2680 = vmatprep.subr.mxu0 %v2260
        %2681 = vmatpush2.msra.mxu0 %v2259
        %2682 = vmatprep.subr.mxu0 %v2252
        %2683 = vmatpush2.msra.mxu0 %v2251
        %2684 = vmatprep.subr.mxu0 %v2244
        %2685 = vmatpush2.msra.mxu0 %v2243
        %2686 = vmatprep.subr.mxu0 %v2236
        %2687 = vmatpush2.msra.mxu0 %v2235
        %2688 = vmatprep.subr.mxu0 %v2228
        %2689 = vmatpush2.msra.mxu0 %v2227
        %2690 = vmatprep.subr.mxu0 %v2220
        %2691 = vmatpush2.msra.mxu0 %v2219
        %2692 = vmatprep.subr.mxu0 %v2212
        %2693 = vmatpush2.msra.mxu0 %v2211
        %2694 = vmatprep.subr.mxu0 %v2204
        %2695 = vmatpush2.msra.mxu0 %v2203
        %2696 = vmatprep.subr.mxu0 %v2196
        %2697 = vmatpush2.msra.mxu0 %v2195
        %2698 = vmatprep.subr.mxu0 %v2188
        %2699 = vmatpush2.msra.mxu0 %v2187
        %2700 = vmatprep.subr.mxu0 %v2180
        %2701 = vmatpush2.msra.mxu0 %v2179
        %2702 = vmatprep.subr.mxu0 %v2172
        %2703 = vmatpush2.msra.mxu0 %v2171
        %2704 = vmatprep.subr.mxu0 %v2164
        %2705 = vmatpush2.msra.mxu0 %v2163
        %2706 = vmatprep.mubr.f32.mxu0 %v1518
        %2707 = vmatmul.mubr.f32.gmra.mxu0 %v1517
        %v2708 = vpop.f32.mrf.mxu0
        %v2709 = vadd.f32 %v2638, %v2708
        %v2710 = vpop.f32.mrf.mxu0
        %v2711 = vadd.f32 %v2640, %v2710
        %2712 = vdwg.mxu0
        %2713 = vmatprep.subr.mxu0 %v1902
        %2714 = vmatpush1.msra.mxu0 %v1901
        %2715 = vmatprep.subr.mxu0 %v1894
        %2716 = vmatpush1.msra.mxu0 %v1893
        %2717 = vmatprep.subr.mxu0 %v1886
        %2718 = vmatpush1.msra.mxu0 %v1885
        %2719 = vmatprep.subr.mxu0 %v1878
        %2720 = vmatpush1.msra.mxu0 %v1877
        %2721 = vmatprep.subr.mxu0 %v1870
        %2722 = vmatpush1.msra.mxu0 %v1869
        %2723 = vmatprep.subr.mxu0 %v1862
        %2724 = vmatpush1.msra.mxu0 %v1861
        %2725 = vmatprep.subr.mxu0 %v1854
        %2726 = vmatpush1.msra.mxu0 %v1853
        %2727 = vmatprep.subr.mxu0 %v1846
        %2728 = vmatpush1.msra.mxu0 %v1845
        %2729 = vmatprep.subr.mxu0 %v1838
        %2730 = vmatpush1.msra.mxu0 %v1837
        %2731 = vmatprep.subr.mxu0 %v1830
        %2732 = vmatpush1.msra.mxu0 %v1829
        %2733 = vmatprep.subr.mxu0 %v1822
        %2734 = vmatpush1.msra.mxu0 %v1821
        %2735 = vmatprep.subr.mxu0 %v1814
        %2736 = vmatpush1.msra.mxu0 %v1813
        %2737 = vmatprep.subr.mxu0 %v1806
        %2738 = vmatpush1.msra.mxu0 %v1805
        %2739 = vmatprep.subr.mxu0 %v1798
        %2740 = vmatpush1.msra.mxu0 %v1797
        %2741 = vmatprep.subr.mxu0 %v1790
        %2742 = vmatpush1.msra.mxu0 %v1789
        %2743 = vmatprep.subr.mxu0 %v1782
        %2744 = vmatpush1.msra.mxu0 %v1781
        %2745 = vmatprep.subr.mxu0 %v2030
        %2746 = vmatpush2.msra.mxu0 %v2029
        %2747 = vmatprep.subr.mxu0 %v2022
        %2748 = vmatpush2.msra.mxu0 %v2021
        %2749 = vmatprep.subr.mxu0 %v2014
        %2750 = vmatpush2.msra.mxu0 %v2013
        %2751 = vmatprep.subr.mxu0 %v2006
        %2752 = vmatpush2.msra.mxu0 %v2005
        %2753 = vmatprep.subr.mxu0 %v1998
        %2754 = vmatpush2.msra.mxu0 %v1997
        %2755 = vmatprep.subr.mxu0 %v1990
        %2756 = vmatpush2.msra.mxu0 %v1989
        %2757 = vmatprep.subr.mxu0 %v1982
        %2758 = vmatpush2.msra.mxu0 %v1981
        %2759 = vmatprep.subr.mxu0 %v1974
        %2760 = vmatpush2.msra.mxu0 %v1973
        %2761 = vmatprep.subr.mxu0 %v1966
        %2762 = vmatpush2.msra.mxu0 %v1965
        %2763 = vmatprep.subr.mxu0 %v1958
        %2764 = vmatpush2.msra.mxu0 %v1957
        %2765 = vmatprep.subr.mxu0 %v1950
        %2766 = vmatpush2.msra.mxu0 %v1949
        %2767 = vmatprep.subr.mxu0 %v1942
        %2768 = vmatpush2.msra.mxu0 %v1941
        %2769 = vmatprep.subr.mxu0 %v1934
        %2770 = vmatpush2.msra.mxu0 %v1933
        %2771 = vmatprep.subr.mxu0 %v1926
        %2772 = vmatpush2.msra.mxu0 %v1925
        %2773 = vmatprep.subr.mxu0 %v1918
        %2774 = vmatpush2.msra.mxu0 %v1917
        %2775 = vmatprep.subr.mxu0 %v1910
        %2776 = vmatpush2.msra.mxu0 %v1909
        %2777 = vmatprep.mubr.f32.mxu0 %v1516
        %2778 = vmatmul.mubr.f32.gmra.mxu0 %v1515
        %v2779 = vpop.f32.mrf.mxu0
        %v2780 = vadd.f32 0.0, %v2779
        %v2781 = vpop.f32.mrf.mxu0
        %v2782 = vadd.f32 0.0, %v2781
        %2783 = vdwg.mxu0
        %2784 = vmatprep.subr.mxu0 %v2158
        %2785 = vmatpush1.msra.mxu0 %v2157
        %2786 = vmatprep.subr.mxu0 %v2150
        %2787 = vmatpush1.msra.mxu0 %v2149
        %2788 = vmatprep.subr.mxu0 %v2142
        %2789 = vmatpush1.msra.mxu0 %v2141
        %2790 = vmatprep.subr.mxu0 %v2134
        %2791 = vmatpush1.msra.mxu0 %v2133
        %2792 = vmatprep.subr.mxu0 %v2126
        %2793 = vmatpush1.msra.mxu0 %v2125
        %2794 = vmatprep.subr.mxu0 %v2118
        %2795 = vmatpush1.msra.mxu0 %v2117
        %2796 = vmatprep.subr.mxu0 %v2110
        %2797 = vmatpush1.msra.mxu0 %v2109
        %2798 = vmatprep.subr.mxu0 %v2102
        %2799 = vmatpush1.msra.mxu0 %v2101
        %2800 = vmatprep.subr.mxu0 %v2094
        %2801 = vmatpush1.msra.mxu0 %v2093
        %2802 = vmatprep.subr.mxu0 %v2086
        %2803 = vmatpush1.msra.mxu0 %v2085
        %2804 = vmatprep.subr.mxu0 %v2078
        %2805 = vmatpush1.msra.mxu0 %v2077
        %2806 = vmatprep.subr.mxu0 %v2070
        %2807 = vmatpush1.msra.mxu0 %v2069
        %2808 = vmatprep.subr.mxu0 %v2062
        %2809 = vmatpush1.msra.mxu0 %v2061
        %2810 = vmatprep.subr.mxu0 %v2054
        %2811 = vmatpush1.msra.mxu0 %v2053
        %2812 = vmatprep.subr.mxu0 %v2046
        %2813 = vmatpush1.msra.mxu0 %v2045
        %2814 = vmatprep.subr.mxu0 %v2038
        %2815 = vmatpush1.msra.mxu0 %v2037
        %2816 = vmatprep.subr.mxu0 %v2286
        %2817 = vmatpush2.msra.mxu0 %v2285
        %2818 = vmatprep.subr.mxu0 %v2278
        %2819 = vmatpush2.msra.mxu0 %v2277
        %2820 = vmatprep.subr.mxu0 %v2270
        %2821 = vmatpush2.msra.mxu0 %v2269
        %2822 = vmatprep.subr.mxu0 %v2262
        %2823 = vmatpush2.msra.mxu0 %v2261
        %2824 = vmatprep.subr.mxu0 %v2254
        %2825 = vmatpush2.msra.mxu0 %v2253
        %2826 = vmatprep.subr.mxu0 %v2246
        %2827 = vmatpush2.msra.mxu0 %v2245
        %2828 = vmatprep.subr.mxu0 %v2238
        %2829 = vmatpush2.msra.mxu0 %v2237
        %2830 = vmatprep.subr.mxu0 %v2230
        %2831 = vmatpush2.msra.mxu0 %v2229
        %2832 = vmatprep.subr.mxu0 %v2222
        %2833 = vmatpush2.msra.mxu0 %v2221
        %2834 = vmatprep.subr.mxu0 %v2214
        %2835 = vmatpush2.msra.mxu0 %v2213
        %2836 = vmatprep.subr.mxu0 %v2206
        %2837 = vmatpush2.msra.mxu0 %v2205
        %2838 = vmatprep.subr.mxu0 %v2198
        %2839 = vmatpush2.msra.mxu0 %v2197
        %2840 = vmatprep.subr.mxu0 %v2190
        %2841 = vmatpush2.msra.mxu0 %v2189
        %2842 = vmatprep.subr.mxu0 %v2182
        %2843 = vmatpush2.msra.mxu0 %v2181
        %2844 = vmatprep.subr.mxu0 %v2174
        %2845 = vmatpush2.msra.mxu0 %v2173
        %2846 = vmatprep.subr.mxu0 %v2166
        %2847 = vmatpush2.msra.mxu0 %v2165
        %2848 = vmatprep.mubr.f32.mxu0 %v1518
        %2849 = vmatmul.mubr.f32.gmra.mxu0 %v1517
        %v2850 = vpop.f32.mrf.mxu0
        %v2851 = vadd.f32 %v2780, %v2850
        %v2852 = vpop.f32.mrf.mxu0
        %v2853 = vadd.f32 %v2782, %v2852
        %2854 = vdwg.mxu0
        %v2855 = vrot.slane %v2425, 4
        %v2856 = vadd.f32 %v2425, %v2855
        %v2857 = vrot.slane %v2856, 2
        %v2858 = vadd.f32 %v2856, %v2857
        %v2859 = vrot.slane %v2858, 1
        %v2860 = vadd.f32 %v2858, %v2859
        %v2861 = vrot.slane %v2427, 4
        %v2862 = vadd.f32 %v2427, %v2861
        %v2863 = vrot.slane %v2862, 2
        %v2864 = vadd.f32 %v2862, %v2863
        %v2865 = vrot.slane %v2864, 1
        %v2866 = vadd.f32 %v2864, %v2865
        %v2867 = vrot.slane %v2567, 4
        %v2868 = vadd.f32 %v2567, %v2867
        %v2869 = vrot.slane %v2868, 2
        %v2870 = vadd.f32 %v2868, %v2869
        %v2871 = vrot.slane %v2870, 1
        %v2872 = vadd.f32 %v2870, %v2871
        %v2873 = vrot.slane %v2569, 4
        %v2874 = vadd.f32 %v2569, %v2873
        %v2875 = vrot.slane %v2874, 2
        %v2876 = vadd.f32 %v2874, %v2875
        %v2877 = vrot.slane %v2876, 1
        %v2878 = vadd.f32 %v2876, %v2877
        %v2879 = vrot.slane %v2709, 4
        %v2880 = vadd.f32 %v2709, %v2879
        %v2881 = vrot.slane %v2880, 2
        %v2882 = vadd.f32 %v2880, %v2881
        %v2883 = vrot.slane %v2882, 1
        %v2884 = vadd.f32 %v2882, %v2883
        %v2885 = vrot.slane %v2711, 4
        %v2886 = vadd.f32 %v2711, %v2885
        %v2887 = vrot.slane %v2886, 2
        %v2888 = vadd.f32 %v2886, %v2887
        %v2889 = vrot.slane %v2888, 1
        %v2890 = vadd.f32 %v2888, %v2889
        %v2891 = vrot.slane %v2851, 4
        %v2892 = vadd.f32 %v2851, %v2891
        %v2893 = vrot.slane %v2892, 2
        %v2894 = vadd.f32 %v2892, %v2893
        %v2895 = vrot.slane %v2894, 1
        %v2896 = vadd.f32 %v2894, %v2895
        %v2897 = vrot.slane %v2853, 4
        %v2898 = vadd.f32 %v2853, %v2897
        %v2899 = vrot.slane %v2898, 2
        %v2900 = vadd.f32 %v2898, %v2899
        %v2901 = vrot.slane %v2900, 1
        %v2902 = vadd.f32 %v2900, %v2901
        %v2903 = vmul.f32 %v2860, %v792
        %v2904 = vmul.f32 %v2866, %v792
        %v2905 = vmul.f32 %v2872, %v792
        %v2906 = vmul.f32 %v2878, %v792
        %v2907 = vmul.f32 %v2884, %v792
        %v2908 = vmul.f32 %v2890, %v792
        %v2909 = vmul.f32 %v2896, %v792
        %v2910 = vmul.f32 %v2902, %v792
        %v2911 = vsub.f32 %v2425, %v2903
        %v2912 = vsub.f32 %v2427, %v2904
        %v2913 = vsub.f32 %v2567, %v2905
        %v2914 = vsub.f32 %v2569, %v2906
        %v2915 = vsub.f32 %v2709, %v2907
        %v2916 = vsub.f32 %v2711, %v2908
        %v2917 = vsub.f32 %v2851, %v2909
        %v2918 = vsub.f32 %v2853, %v2910
        %v2919 = vmul.f32 %v2911, %v2911
        %v2920 = vmul.f32 %v2912, %v2912
        %v2921 = vmul.f32 %v2913, %v2913
        %v2922 = vmul.f32 %v2914, %v2914
        %v2923 = vmul.f32 %v2915, %v2915
        %v2924 = vmul.f32 %v2916, %v2916
        %v2925 = vmul.f32 %v2917, %v2917
        %v2926 = vmul.f32 %v2918, %v2918
        %v2927 = vrot.slane %v2919, 4
        %v2928 = vadd.f32 %v2919, %v2927
        %v2929 = vrot.slane %v2928, 2
        %v2930 = vadd.f32 %v2928, %v2929
        %v2931 = vrot.slane %v2930, 1
        %v2932 = vadd.f32 %v2930, %v2931
        %v2933 = vrot.slane %v2920, 4
        %v2934 = vadd.f32 %v2920, %v2933
        %v2935 = vrot.slane %v2934, 2
        %v2936 = vadd.f32 %v2934, %v2935
        %v2937 = vrot.slane %v2936, 1
        %v2938 = vadd.f32 %v2936, %v2937
        %v2939 = vrot.slane %v2921, 4
        %v2940 = vadd.f32 %v2921, %v2939
        %v2941 = vrot.slane %v2940, 2
        %v2942 = vadd.f32 %v2940, %v2941
        %v2943 = vrot.slane %v2942, 1
        %v2944 = vadd.f32 %v2942, %v2943
        %v2945 = vrot.slane %v2922, 4
        %v2946 = vadd.f32 %v2922, %v2945
        %v2947 = vrot.slane %v2946, 2
        %v2948 = vadd.f32 %v2946, %v2947
        %v2949 = vrot.slane %v2948, 1
        %v2950 = vadd.f32 %v2948, %v2949
        %v2951 = vrot.slane %v2923, 4
        %v2952 = vadd.f32 %v2923, %v2951
        %v2953 = vrot.slane %v2952, 2
        %v2954 = vadd.f32 %v2952, %v2953
        %v2955 = vrot.slane %v2954, 1
        %v2956 = vadd.f32 %v2954, %v2955
        %v2957 = vrot.slane %v2924, 4
        %v2958 = vadd.f32 %v2924, %v2957
        %v2959 = vrot.slane %v2958, 2
        %v2960 = vadd.f32 %v2958, %v2959
        %v2961 = vrot.slane %v2960, 1
        %v2962 = vadd.f32 %v2960, %v2961
        %v2963 = vrot.slane %v2925, 4
        %v2964 = vadd.f32 %v2925, %v2963
        %v2965 = vrot.slane %v2964, 2
        %v2966 = vadd.f32 %v2964, %v2965
        %v2967 = vrot.slane %v2966, 1
        %v2968 = vadd.f32 %v2966, %v2967
        %v2969 = vrot.slane %v2926, 4
        %v2970 = vadd.f32 %v2926, %v2969
        %v2971 = vrot.slane %v2970, 2
        %v2972 = vadd.f32 %v2970, %v2971
        %v2973 = vrot.slane %v2972, 1
        %v2974 = vadd.f32 %v2972, %v2973
        %v2975 = vmul.f32 %v2932, %v792
        %v2976 = vmul.f32 %v2938, %v792
        %v2977 = vmul.f32 %v2944, %v792
        %v2978 = vmul.f32 %v2950, %v792
        %v2979 = vmul.f32 %v2956, %v792
        %v2980 = vmul.f32 %v2962, %v792
        %v2981 = vmul.f32 %v2968, %v792
        %v2982 = vmul.f32 %v2974, %v792
        %v2983 = vld [vmem:[#allocation20] sm:$0xff]
        %v2984 = vadd.f32 %v2975, 1e-05
        %v2985 = vadd.f32 %v2976, 1e-05
        %v2986 = vadd.f32 %v2977, 1e-05
        %v2987 = vadd.f32 %v2978, 1e-05
        %v2988 = vadd.f32 %v2979, 1e-05
        %v2989 = vadd.f32 %v2980, 1e-05
        %v2990 = vadd.f32 %v2981, 1e-05
        %v2991 = vadd.f32 %v2982, 1e-05
        %v2992 = vrsqrt.pop %v2984
        %v2993 = vrsqrt.pop %v2985
        %v2994 = vrsqrt.pop %v2986
        %v2995 = vrsqrt.pop %v2987
        %v2996 = vrsqrt.pop %v2988
        %v2997 = vrsqrt.pop %v2989
        %v2998 = vrsqrt.pop %v2990
        %v2999 = vrsqrt.pop %v2991
        %v3008 = vcombine.low %v2992, %v2993
        %v3009 = vcombine.low %v2994, %v2995
        %v3010 = vcombine.low %v2996, %v2997
        %v3011 = vcombine.low %v2998, %v2999
        %v3013 = vunpack.c.l.s4 1966171168
        %v3014 = vunpack.c.0.s8 %v3013
        %v3015 = vlaneseq
        %v3016 = vshrl.u32 %v3015, 7
        %v3017 = vsub.s32 %v3014, %v3016
        %v3018 = vrot.slane %v3008, %v3017
        %v3020 = vunpack.c.l.s4 1966171168
        %v3021 = vunpack.c.0.s8 %v3020
        %v3022 = vlaneseq
        %v3023 = vshrl.u32 %v3022, 7
        %v3024 = vsub.s32 %v3021, %v3023
        %v3025 = vrot.slane %v3009, %v3024
        %v3027 = vunpack.c.l.s4 1966171168
        %v3028 = vunpack.c.0.s8 %v3027
        %v3029 = vlaneseq
        %v3030 = vshrl.u32 %v3029, 7
        %v3031 = vsub.s32 %v3028, %v3030
        %v3032 = vrot.slane %v3010, %v3031
        %v3034 = vunpack.c.l.s4 1966171168
        %v3035 = vunpack.c.0.s8 %v3034
        %v3036 = vlaneseq
        %v3037 = vshrl.u32 %v3036, 7
        %v3038 = vsub.s32 %v3035, %v3037
        %v3039 = vrot.slane %v3011, %v3038
        %v3040 = vcombine.low %v3018, %v3025
        %v3041 = vcombine.low %v3032, %v3039
        %v3043 = vunpack.c.l.s4 1966171168
        %v3044 = vunpack.c.0.s8 %v3043
        %v3045 = vlaneseq
        %v3046 = vshrl.u32 %v3045, 7
        %v3047 = vsub.s32 %v3044, %v3046
        %v3048 = vrot.slane %v3040, %v3047
        %v3050 = vunpack.c.l.s4 1966171168
        %v3051 = vunpack.c.0.s8 %v3050
        %v3052 = vlaneseq
        %v3053 = vshrl.u32 %v3052, 7
        %v3054 = vsub.s32 %v3051, %v3053
        %v3055 = vrot.slane %v3041, %v3054
        %v3056 = vcombine.low %v3048, %v3055
        %v3058 = vmul.f32 %v2983, %v3056
        %v3060 = vlaneseq
        %v3061 = vshrl.u32 %v3060, 7
        %v3062 = vsub.s32 0, %v3061
        %v3063 = vrot.slane %v3058, %v3062
        %v3064 = vlaneseq
        %v3065 = vshrl.u32 %v3064, 7
        %v3066 = vsub.s32 1, %v3065
        %v3067 = vrot.slane %v3058, %v3066
        %v3068 = vlaneseq
        %v3069 = vshrl.u32 %v3068, 7
        %v3070 = vsub.s32 2, %v3069
        %v3071 = vrot.slane %v3058, %v3070
        %v3072 = vlaneseq
        %v3073 = vshrl.u32 %v3072, 7
        %v3074 = vsub.s32 3, %v3073
        %v3075 = vrot.slane %v3058, %v3074
        %v3076 = vlaneseq
        %v3077 = vshrl.u32 %v3076, 7
        %v3078 = vsub.s32 4, %v3077
        %v3079 = vrot.slane %v3058, %v3078
        %v3080 = vlaneseq
        %v3081 = vshrl.u32 %v3080, 7
        %v3082 = vsub.s32 5, %v3081
        %v3083 = vrot.slane %v3058, %v3082
        %v3084 = vlaneseq
        %v3085 = vshrl.u32 %v3084, 7
        %v3086 = vsub.s32 6, %v3085
        %v3087 = vrot.slane %v3058, %v3086
        %v3088 = vlaneseq
        %v3089 = vshrl.u32 %v3088, 7
        %v3090 = vsub.s32 7, %v3089
        %v3091 = vrot.slane %v3058, %v3090
        %v3100 = vmul.f32 %v2911, %v3063
        %v3101 = vmul.f32 %v2912, %v3067
        %v3102 = vmul.f32 %v2913, %v3071
        %v3103 = vmul.f32 %v2914, %v3075
        %v3104 = vmul.f32 %v2915, %v3079
        %v3105 = vmul.f32 %v2916, %v3083
        %v3106 = vmul.f32 %v2917, %v3087
        %v3107 = vmul.f32 %v2918, %v3091
        %v3108 = vld [vmem:[#allocation22] sm:$0xff]
        %v3110 = vlaneseq
        %v3111 = vshrl.u32 %v3110, 7
        %v3112 = vsub.s32 0, %v3111
        %v3113 = vrot.slane %v3108, %v3112
        %v3114 = vlaneseq
        %v3115 = vshrl.u32 %v3114, 7
        %v3116 = vsub.s32 1, %v3115
        %v3117 = vrot.slane %v3108, %v3116
        %v3118 = vlaneseq
        %v3119 = vshrl.u32 %v3118, 7
        %v3120 = vsub.s32 2, %v3119
        %v3121 = vrot.slane %v3108, %v3120
        %v3122 = vlaneseq
        %v3123 = vshrl.u32 %v3122, 7
        %v3124 = vsub.s32 3, %v3123
        %v3125 = vrot.slane %v3108, %v3124
        %v3126 = vlaneseq
        %v3127 = vshrl.u32 %v3126, 7
        %v3128 = vsub.s32 4, %v3127
        %v3129 = vrot.slane %v3108, %v3128
        %v3130 = vlaneseq
        %v3131 = vshrl.u32 %v3130, 7
        %v3132 = vsub.s32 5, %v3131
        %v3133 = vrot.slane %v3108, %v3132
        %v3134 = vlaneseq
        %v3135 = vshrl.u32 %v3134, 7
        %v3136 = vsub.s32 6, %v3135
        %v3137 = vrot.slane %v3108, %v3136
        %v3138 = vlaneseq
        %v3139 = vshrl.u32 %v3138, 7
        %v3140 = vsub.s32 7, %v3139
        %v3141 = vrot.slane %v3108, %v3140
        %v3150 = vadd.f32 %v3100, %v3113
        %v3151 = vadd.f32 %v3101, %v3117
        %v3152 = vadd.f32 %v3102, %v3121
        %v3153 = vadd.f32 %v3103, %v3125
        %v3154 = vadd.f32 %v3104, %v3129
        %v3155 = vadd.f32 %v3105, %v3133
        %v3156 = vadd.f32 %v3106, %v3137
        %v3157 = vadd.f32 %v3107, %v3141
        %v3158 = vmax.f32 %v3150, 0.0
        %v3159 = vmax.f32 %v3151, 0.0
        %v3160 = vmax.f32 %v3152, 0.0
        %v3161 = vmax.f32 %v3153, 0.0
        %v3162 = vmax.f32 %v3154, 0.0
        %v3163 = vmax.f32 %v3155, 0.0
        %v3164 = vmax.f32 %v3156, 0.0
        %v3165 = vmax.f32 %v3157, 0.0
        %v3166 = vld [vmem:[#allocation23] sm:$0xff]
        %v3167 = vld [vmem:[#allocation23 + $0x8] sm:$0xff]
        %v3168 = vld [vmem:[#allocation23 + $0x10] sm:$0xff]
        %v3169 = vld [vmem:[#allocation23 + $0x18] sm:$0xf]
        %v3170 = vld [vmem:[#allocation23 + $0x1c] sm:$0xff]
        %v3171 = vld [vmem:[#allocation23 + $0x24] sm:$0xff]
        %v3172 = vld [vmem:[#allocation23 + $0x2c] sm:$0xff]
        %v3173 = vld [vmem:[#allocation23 + $0x34] sm:$0xf]
        %v3174 = vld [vmem:[#allocation23 + $0x38] sm:$0xff]
        %v3175 = vld [vmem:[#allocation23 + $0x40] sm:$0xff]
        %v3176 = vld [vmem:[#allocation23 + $0x48] sm:$0xff]
        %v3177 = vld [vmem:[#allocation23 + $0x50] sm:$0xf]
        %v3178 = vld [vmem:[#allocation23 + $0x54] sm:$0xff]
        %v3179 = vld [vmem:[#allocation23 + $0x5c] sm:$0xff]
        %v3180 = vld [vmem:[#allocation23 + $0x64] sm:$0xff]
        %v3181 = vld [vmem:[#allocation23 + $0x6c] sm:$0xf]
        %v3182 = vld [vmem:[#allocation23 + $0x70] sm:$0xff]
        %v3183 = vld [vmem:[#allocation23 + $0x78] sm:$0xff]
        %v3184 = vld [vmem:[#allocation23 + $0x80] sm:$0xff]
        %v3185 = vld [vmem:[#allocation23 + $0x88] sm:$0xf]
        %v3186 = vld [vmem:[#allocation23 + $0x8c] sm:$0xff]
        %v3187 = vld [vmem:[#allocation23 + $0x94] sm:$0xff]
        %v3188 = vld [vmem:[#allocation23 + $0x9c] sm:$0xff]
        %v3189 = vld [vmem:[#allocation23 + $0xa4] sm:$0xf]
        %v3190 = vld [vmem:[#allocation23 + $0xa8] sm:$0xff]
        %v3191 = vld [vmem:[#allocation23 + $0xb0] sm:$0xff]
        %v3192 = vld [vmem:[#allocation23 + $0xb8] sm:$0xff]
        %v3193 = vld [vmem:[#allocation23 + $0xc0] sm:$0xf]
        %v3194 = vld [vmem:[#allocation23 + $0xc4] sm:$0xff]
        %v3195 = vld [vmem:[#allocation23 + $0xcc] sm:$0xff]
        %v3196 = vld [vmem:[#allocation23 + $0xd4] sm:$0xff]
        %v3197 = vld [vmem:[#allocation23 + $0xdc] sm:$0xf]
        %v3198 = vld [vmem:[#allocation23 + $0xe0] sm:$0xff]
        %v3199 = vld [vmem:[#allocation23 + $0xe8] sm:$0xff]
        %v3200 = vld [vmem:[#allocation23 + $0xf0] sm:$0xff]
        %v3201 = vld [vmem:[#allocation23 + $0xf8] sm:$0xf]
        %v3202 = vld [vmem:[#allocation23 + $0xfc] sm:$0xff]
        %v3203 = vld [vmem:[#allocation23 + $0x104] sm:$0xff]
        %v3204 = vld [vmem:[#allocation23 + $0x10c] sm:$0xff]
        %v3205 = vld [vmem:[#allocation23 + $0x114] sm:$0xf]
        %v3206 = vld [vmem:[#allocation23 + $0x118] sm:$0xff]
        %v3207 = vld [vmem:[#allocation23 + $0x120] sm:$0xff]
        %v3208 = vld [vmem:[#allocation23 + $0x128] sm:$0xff]
        %v3209 = vld [vmem:[#allocation23 + $0x130] sm:$0xf]
        %v3210 = vld [vmem:[#allocation23 + $0x134] sm:$0xff]
        %v3211 = vld [vmem:[#allocation23 + $0x13c] sm:$0xff]
        %v3212 = vld [vmem:[#allocation23 + $0x144] sm:$0xff]
        %v3213 = vld [vmem:[#allocation23 + $0x14c] sm:$0xf]
        %v3214 = vld [vmem:[#allocation23 + $0x150] sm:$0xff]
        %v3215 = vld [vmem:[#allocation23 + $0x158] sm:$0xff]
        %v3216 = vld [vmem:[#allocation23 + $0x160] sm:$0xff]
        %v3217 = vld [vmem:[#allocation23 + $0x168] sm:$0xf]
        %v3218 = vld [vmem:[#allocation23 + $0x16c] sm:$0xff]
        %v3219 = vld [vmem:[#allocation23 + $0x174] sm:$0xff]
        %v3220 = vld [vmem:[#allocation23 + $0x17c] sm:$0xff]
        %v3221 = vld [vmem:[#allocation23 + $0x184] sm:$0xf]
        %v3222 = vld [vmem:[#allocation23 + $0x188] sm:$0xff]
        %v3223 = vld [vmem:[#allocation23 + $0x190] sm:$0xff]
        %v3224 = vld [vmem:[#allocation23 + $0x198] sm:$0xff]
        %v3225 = vld [vmem:[#allocation23 + $0x1a0] sm:$0xf]
        %v3226 = vld [vmem:[#allocation23 + $0x1a4] sm:$0xff]
        %v3227 = vld [vmem:[#allocation23 + $0x1ac] sm:$0xff]
        %v3228 = vld [vmem:[#allocation23 + $0x1b4] sm:$0xff]
        %v3229 = vld [vmem:[#allocation23 + $0x1bc] sm:$0xf]
        %v3230 = vld [vmem:[#allocation23 + $0x1c0] sm:$0xff]
        %v3231 = vld [vmem:[#allocation23 + $0x1c8] sm:$0xff]
        %v3232 = vld [vmem:[#allocation23 + $0x1d0] sm:$0xff]
        %v3233 = vld [vmem:[#allocation23 + $0x1d8] sm:$0xf]
        %v3234 = vld [vmem:[#allocation23 + $0x1dc] sm:$0xff]
        %v3235 = vld [vmem:[#allocation23 + $0x1e4] sm:$0xff]
        %v3236 = vld [vmem:[#allocation23 + $0x1ec] sm:$0xff]
        %v3237 = vld [vmem:[#allocation23 + $0x1f4] sm:$0xf]
        %v3238 = vld [vmem:[#allocation23 + $0x1f8] sm:$0xff]
        %v3239 = vld [vmem:[#allocation23 + $0x200] sm:$0xff]
        %v3240 = vld [vmem:[#allocation23 + $0x208] sm:$0xff]
        %v3241 = vld [vmem:[#allocation23 + $0x210] sm:$0xf]
        %v3242 = vld [vmem:[#allocation23 + $0x214] sm:$0xff]
        %v3243 = vld [vmem:[#allocation23 + $0x21c] sm:$0xff]
        %v3244 = vld [vmem:[#allocation23 + $0x224] sm:$0xff]
        %v3245 = vld [vmem:[#allocation23 + $0x22c] sm:$0xf]
        %v3246 = vld [vmem:[#allocation23 + $0x230] sm:$0xff]
        %v3247 = vld [vmem:[#allocation23 + $0x238] sm:$0xff]
        %v3248 = vld [vmem:[#allocation23 + $0x240] sm:$0xff]
        %v3249 = vld [vmem:[#allocation23 + $0x248] sm:$0xf]
        %v3250 = vld [vmem:[#allocation23 + $0x24c] sm:$0xff]
        %v3251 = vld [vmem:[#allocation23 + $0x254] sm:$0xff]
        %v3252 = vld [vmem:[#allocation23 + $0x25c] sm:$0xff]
        %v3253 = vld [vmem:[#allocation23 + $0x264] sm:$0xf]
        %v3254 = vld [vmem:[#allocation23 + $0x268] sm:$0xff]
        %v3255 = vld [vmem:[#allocation23 + $0x270] sm:$0xff]
        %v3256 = vld [vmem:[#allocation23 + $0x278] sm:$0xff]
        %v3257 = vld [vmem:[#allocation23 + $0x280] sm:$0xf]
        %v3258 = vld [vmem:[#allocation23 + $0x284] sm:$0xff]
        %v3259 = vld [vmem:[#allocation23 + $0x28c] sm:$0xff]
        %v3260 = vld [vmem:[#allocation23 + $0x294] sm:$0xff]
        %v3261 = vld [vmem:[#allocation23 + $0x29c] sm:$0xf]
        %v3262 = vld [vmem:[#allocation23 + $0x2a0] sm:$0xff]
        %v3263 = vld [vmem:[#allocation23 + $0x2a8] sm:$0xff]
        %v3264 = vld [vmem:[#allocation23 + $0x2b0] sm:$0xff]
        %v3265 = vld [vmem:[#allocation23 + $0x2b8] sm:$0xf]
        %v3266 = vld [vmem:[#allocation23 + $0x2bc] sm:$0xff]
        %v3267 = vld [vmem:[#allocation23 + $0x2c4] sm:$0xff]
        %v3268 = vld [vmem:[#allocation23 + $0x2cc] sm:$0xff]
        %v3269 = vld [vmem:[#allocation23 + $0x2d4] sm:$0xf]
        %v3270 = vld [vmem:[#allocation23 + $0x2d8] sm:$0xff]
        %v3271 = vld [vmem:[#allocation23 + $0x2e0] sm:$0xff]
        %v3272 = vld [vmem:[#allocation23 + $0x2e8] sm:$0xff]
        %v3273 = vld [vmem:[#allocation23 + $0x2f0] sm:$0xf]
        %v3274 = vld [vmem:[#allocation23 + $0x2f4] sm:$0xff]
        %v3275 = vld [vmem:[#allocation23 + $0x2fc] sm:$0xff]
        %v3276 = vld [vmem:[#allocation23 + $0x304] sm:$0xff]
        %v3277 = vld [vmem:[#allocation23 + $0x30c] sm:$0xf]
        %v3278 = vld [vmem:[#allocation23 + $0x310] sm:$0xff]
        %v3279 = vld [vmem:[#allocation23 + $0x318] sm:$0xff]
        %v3280 = vld [vmem:[#allocation23 + $0x320] sm:$0xff]
        %v3281 = vld [vmem:[#allocation23 + $0x328] sm:$0xf]
        %v3282 = vld [vmem:[#allocation23 + $0x32c] sm:$0xff]
        %v3283 = vld [vmem:[#allocation23 + $0x334] sm:$0xff]
        %v3284 = vld [vmem:[#allocation23 + $0x33c] sm:$0xff]
        %v3285 = vld [vmem:[#allocation23 + $0x344] sm:$0xf]
        %v3286 = vld [vmem:[#allocation23 + $0x348] sm:$0xff]
        %v3287 = vld [vmem:[#allocation23 + $0x350] sm:$0xff]
        %v3288 = vld [vmem:[#allocation23 + $0x358] sm:$0xff]
        %v3289 = vld [vmem:[#allocation23 + $0x360] sm:$0xf]
        %v3290 = vld [vmem:[#allocation23 + $0x364] sm:$0xff]
        %v3291 = vld [vmem:[#allocation23 + $0x36c] sm:$0xff]
        %v3292 = vld [vmem:[#allocation23 + $0x374] sm:$0xff]
        %v3293 = vld [vmem:[#allocation23 + $0x37c] sm:$0xf]
        %v3294 = vld [vmem:[#allocation23 + $0x380] sm:$0xff]
        %v3295 = vld [vmem:[#allocation23 + $0x388] sm:$0xff]
        %v3296 = vld [vmem:[#allocation23 + $0x390] sm:$0xff]
        %v3297 = vld [vmem:[#allocation23 + $0x398] sm:$0xf]
        %v3298 = vld [vmem:[#allocation23 + $0x39c] sm:$0xff]
        %v3299 = vld [vmem:[#allocation23 + $0x3a4] sm:$0xff]
        %v3300 = vld [vmem:[#allocation23 + $0x3ac] sm:$0xff]
        %v3301 = vld [vmem:[#allocation23 + $0x3b4] sm:$0xf]
        %v3302 = vld [vmem:[#allocation23 + $0x3b8] sm:$0xff]
        %v3303 = vld [vmem:[#allocation23 + $0x3c0] sm:$0xff]
        %v3304 = vld [vmem:[#allocation23 + $0x3c8] sm:$0xff]
        %v3305 = vld [vmem:[#allocation23 + $0x3d0] sm:$0xf]
        %v3306 = vld [vmem:[#allocation23 + $0x3d4] sm:$0xff]
        %v3307 = vld [vmem:[#allocation23 + $0x3dc] sm:$0xff]
        %v3308 = vld [vmem:[#allocation23 + $0x3e4] sm:$0xff]
        %v3309 = vld [vmem:[#allocation23 + $0x3ec] sm:$0xf]
        %v3310 = vld [vmem:[#allocation23 + $0x3f0] sm:$0xff]
        %v3311 = vld [vmem:[#allocation23 + $0x3f8] sm:$0xff]
        %v3312 = vld [vmem:[#allocation23 + $0x400] sm:$0xff]
        %v3313 = vld [vmem:[#allocation23 + $0x408] sm:$0xf]
        %v3314 = vld [vmem:[#allocation23 + $0x40c] sm:$0xff]
        %v3315 = vld [vmem:[#allocation23 + $0x414] sm:$0xff]
        %v3316 = vld [vmem:[#allocation23 + $0x41c] sm:$0xff]
        %v3317 = vld [vmem:[#allocation23 + $0x424] sm:$0xf]
        %v3318 = vld [vmem:[#allocation23 + $0x428] sm:$0xff]
        %v3319 = vld [vmem:[#allocation23 + $0x430] sm:$0xff]
        %v3320 = vld [vmem:[#allocation23 + $0x438] sm:$0xff]
        %v3321 = vld [vmem:[#allocation23 + $0x440] sm:$0xf]
        %v3322 = vld [vmem:[#allocation23 + $0x444] sm:$0xff]
        %v3323 = vld [vmem:[#allocation23 + $0x44c] sm:$0xff]
        %v3324 = vld [vmem:[#allocation23 + $0x454] sm:$0xff]
        %v3325 = vld [vmem:[#allocation23 + $0x45c] sm:$0xf]
        %v3326 = vld [vmem:[#allocation23 + $0x460] sm:$0xff]
        %v3327 = vld [vmem:[#allocation23 + $0x468] sm:$0xff]
        %v3328 = vld [vmem:[#allocation23 + $0x470] sm:$0xff]
        %v3329 = vld [vmem:[#allocation23 + $0x478] sm:$0xf]
        %v3330 = vld [vmem:[#allocation23 + $0x47c] sm:$0xff]
        %v3331 = vld [vmem:[#allocation23 + $0x484] sm:$0xff]
        %v3332 = vld [vmem:[#allocation23 + $0x48c] sm:$0xff]
        %v3333 = vld [vmem:[#allocation23 + $0x494] sm:$0xf]
        %v3334 = vld [vmem:[#allocation23 + $0x498] sm:$0xff]
        %v3335 = vld [vmem:[#allocation23 + $0x4a0] sm:$0xff]
        %v3336 = vld [vmem:[#allocation23 + $0x4a8] sm:$0xff]
        %v3337 = vld [vmem:[#allocation23 + $0x4b0] sm:$0xf]
        %v3338 = vld [vmem:[#allocation23 + $0x4b4] sm:$0xff]
        %v3339 = vld [vmem:[#allocation23 + $0x4bc] sm:$0xff]
        %v3340 = vld [vmem:[#allocation23 + $0x4c4] sm:$0xff]
        %v3341 = vld [vmem:[#allocation23 + $0x4cc] sm:$0xf]
        %v3342 = vld [vmem:[#allocation23 + $0x4d0] sm:$0xff]
        %v3343 = vld [vmem:[#allocation23 + $0x4d8] sm:$0xff]
        %v3344 = vld [vmem:[#allocation23 + $0x4e0] sm:$0xff]
        %v3345 = vld [vmem:[#allocation23 + $0x4e8] sm:$0xf]
        %v3346 = vld [vmem:[#allocation23 + $0x4ec] sm:$0xff]
        %v3347 = vld [vmem:[#allocation23 + $0x4f4] sm:$0xff]
        %v3348 = vld [vmem:[#allocation23 + $0x4fc] sm:$0xff]
        %v3349 = vld [vmem:[#allocation23 + $0x504] sm:$0xf]
        %v3350 = vld [vmem:[#allocation23 + $0x508] sm:$0xff]
        %v3351 = vld [vmem:[#allocation23 + $0x510] sm:$0xff]
        %v3352 = vld [vmem:[#allocation23 + $0x518] sm:$0xff]
        %v3353 = vld [vmem:[#allocation23 + $0x520] sm:$0xf]
        %v3354 = vld [vmem:[#allocation23 + $0x524] sm:$0xff]
        %v3355 = vld [vmem:[#allocation23 + $0x52c] sm:$0xff]
        %v3356 = vld [vmem:[#allocation23 + $0x534] sm:$0xff]
        %v3357 = vld [vmem:[#allocation23 + $0x53c] sm:$0xf]
        %v3358 = vld [vmem:[#allocation23 + $0x540] sm:$0xff]
        %v3359 = vld [vmem:[#allocation23 + $0x548] sm:$0xff]
        %v3360 = vld [vmem:[#allocation23 + $0x550] sm:$0xff]
        %v3361 = vld [vmem:[#allocation23 + $0x558] sm:$0xf]
        %v3362 = vld [vmem:[#allocation23 + $0x55c] sm:$0xff]
        %v3363 = vld [vmem:[#allocation23 + $0x564] sm:$0xff]
        %v3364 = vld [vmem:[#allocation23 + $0x56c] sm:$0xff]
        %v3365 = vld [vmem:[#allocation23 + $0x574] sm:$0xf]
        %v3366 = vld [vmem:[#allocation23 + $0x578] sm:$0xff]
        %v3367 = vld [vmem:[#allocation23 + $0x580] sm:$0xff]
        %v3368 = vld [vmem:[#allocation23 + $0x588] sm:$0xff]
        %v3369 = vld [vmem:[#allocation23 + $0x590] sm:$0xf]
        %v3370 = vld [vmem:[#allocation23 + $0x594] sm:$0xff]
        %v3371 = vld [vmem:[#allocation23 + $0x59c] sm:$0xff]
        %v3372 = vld [vmem:[#allocation23 + $0x5a4] sm:$0xff]
        %v3373 = vld [vmem:[#allocation23 + $0x5ac] sm:$0xf]
        %v3374 = vld [vmem:[#allocation23 + $0x5b0] sm:$0xff]
        %v3375 = vld [vmem:[#allocation23 + $0x5b8] sm:$0xff]
        %v3376 = vld [vmem:[#allocation23 + $0x5c0] sm:$0xff]
        %v3377 = vld [vmem:[#allocation23 + $0x5c8] sm:$0xf]
        %v3378 = vld [vmem:[#allocation23 + $0x5cc] sm:$0xff]
        %v3379 = vld [vmem:[#allocation23 + $0x5d4] sm:$0xff]
        %v3380 = vld [vmem:[#allocation23 + $0x5dc] sm:$0xff]
        %v3381 = vld [vmem:[#allocation23 + $0x5e4] sm:$0xf]
        %v3382 = vld [vmem:[#allocation23 + $0x5e8] sm:$0xff]
        %v3383 = vld [vmem:[#allocation23 + $0x5f0] sm:$0xff]
        %v3384 = vld [vmem:[#allocation23 + $0x5f8] sm:$0xff]
        %v3385 = vld [vmem:[#allocation23 + $0x600] sm:$0xf]
        %v3386 = vld [vmem:[#allocation23 + $0x604] sm:$0xff]
        %v3387 = vld [vmem:[#allocation23 + $0x60c] sm:$0xff]
        %v3388 = vld [vmem:[#allocation23 + $0x614] sm:$0xff]
        %v3389 = vld [vmem:[#allocation23 + $0x61c] sm:$0xf]
        %v3390 = vld [vmem:[#allocation23 + $0x620] sm:$0xff]
        %v3391 = vld [vmem:[#allocation23 + $0x628] sm:$0xff]
        %v3392 = vld [vmem:[#allocation23 + $0x630] sm:$0xff]
        %v3393 = vld [vmem:[#allocation23 + $0x638] sm:$0xf]
        %v3394 = vld [vmem:[#allocation23 + $0x63c] sm:$0xff]
        %v3395 = vld [vmem:[#allocation23 + $0x644] sm:$0xff]
        %v3396 = vld [vmem:[#allocation23 + $0x64c] sm:$0xff]
        %v3397 = vld [vmem:[#allocation23 + $0x654] sm:$0xf]
        %v3398 = vld [vmem:[#allocation23 + $0x658] sm:$0xff]
        %v3399 = vld [vmem:[#allocation23 + $0x660] sm:$0xff]
        %v3400 = vld [vmem:[#allocation23 + $0x668] sm:$0xff]
        %v3401 = vld [vmem:[#allocation23 + $0x670] sm:$0xf]
        %v3402 = vld [vmem:[#allocation23 + $0x674] sm:$0xff]
        %v3403 = vld [vmem:[#allocation23 + $0x67c] sm:$0xff]
        %v3404 = vld [vmem:[#allocation23 + $0x684] sm:$0xff]
        %v3405 = vld [vmem:[#allocation23 + $0x68c] sm:$0xf]
        %v3406 = vld [vmem:[#allocation23 + $0x690] sm:$0xff]
        %v3407 = vld [vmem:[#allocation23 + $0x698] sm:$0xff]
        %v3408 = vld [vmem:[#allocation23 + $0x6a0] sm:$0xff]
        %v3409 = vld [vmem:[#allocation23 + $0x6a8] sm:$0xf]
        %v3410 = vld [vmem:[#allocation23 + $0x6ac] sm:$0xff]
        %v3411 = vld [vmem:[#allocation23 + $0x6b4] sm:$0xff]
        %v3412 = vld [vmem:[#allocation23 + $0x6bc] sm:$0xff]
        %v3413 = vld [vmem:[#allocation23 + $0x6c4] sm:$0xf]
        %v3414 = vld [vmem:[#allocation23 + $0x6c8] sm:$0xff]
        %v3415 = vld [vmem:[#allocation23 + $0x6d0] sm:$0xff]
        %v3416 = vld [vmem:[#allocation23 + $0x6d8] sm:$0xff]
        %v3417 = vld [vmem:[#allocation23 + $0x6e0] sm:$0xf]
        %v3418 = vld [vmem:[#allocation23 + $0x6e4] sm:$0xff]
        %v3419 = vld [vmem:[#allocation23 + $0x6ec] sm:$0xff]
        %v3420 = vld [vmem:[#allocation23 + $0x6f4] sm:$0xff]
        %v3421 = vld [vmem:[#allocation23 + $0x6fc] sm:$0xf]
        %v3422 = vld [vmem:[#allocation23 + $0x700] sm:$0xff]
        %v3423 = vld [vmem:[#allocation23 + $0x708] sm:$0xff]
        %v3424 = vld [vmem:[#allocation23 + $0x710] sm:$0xff]
        %v3425 = vld [vmem:[#allocation23 + $0x718] sm:$0xf]
        %v3426 = vld [vmem:[#allocation23 + $0x71c] sm:$0xff]
        %v3427 = vld [vmem:[#allocation23 + $0x724] sm:$0xff]
        %v3428 = vld [vmem:[#allocation23 + $0x72c] sm:$0xff]
        %v3429 = vld [vmem:[#allocation23 + $0x734] sm:$0xf]
        %v3430 = vld [vmem:[#allocation23 + $0x738] sm:$0xff]
        %v3431 = vld [vmem:[#allocation23 + $0x740] sm:$0xff]
        %v3432 = vld [vmem:[#allocation23 + $0x748] sm:$0xff]
        %v3433 = vld [vmem:[#allocation23 + $0x750] sm:$0xf]
        %v3434 = vld [vmem:[#allocation23 + $0x754] sm:$0xff]
        %v3435 = vld [vmem:[#allocation23 + $0x75c] sm:$0xff]
        %v3436 = vld [vmem:[#allocation23 + $0x764] sm:$0xff]
        %v3437 = vld [vmem:[#allocation23 + $0x76c] sm:$0xf]
        %v3438 = vld [vmem:[#allocation23 + $0x770] sm:$0xff]
        %v3439 = vld [vmem:[#allocation23 + $0x778] sm:$0xff]
        %v3440 = vld [vmem:[#allocation23 + $0x780] sm:$0xff]
        %v3441 = vld [vmem:[#allocation23 + $0x788] sm:$0xf]
        %v3442 = vld [vmem:[#allocation23 + $0x78c] sm:$0xff]
        %v3443 = vld [vmem:[#allocation23 + $0x794] sm:$0xff]
        %v3444 = vld [vmem:[#allocation23 + $0x79c] sm:$0xff]
        %v3445 = vld [vmem:[#allocation23 + $0x7a4] sm:$0xf]
        %v3446 = vld [vmem:[#allocation23 + $0x7a8] sm:$0xff]
        %v3447 = vld [vmem:[#allocation23 + $0x7b0] sm:$0xff]
        %v3448 = vld [vmem:[#allocation23 + $0x7b8] sm:$0xff]
        %v3449 = vld [vmem:[#allocation23 + $0x7c0] sm:$0xf]
        %v3450 = vld [vmem:[#allocation23 + $0x7c4] sm:$0xff]
        %v3451 = vld [vmem:[#allocation23 + $0x7cc] sm:$0xff]
        %v3452 = vld [vmem:[#allocation23 + $0x7d4] sm:$0xff]
        %v3453 = vld [vmem:[#allocation23 + $0x7dc] sm:$0xf]
        %v3454 = vld [vmem:[#allocation23 + $0x7e0] sm:$0xff]
        %v3455 = vld [vmem:[#allocation23 + $0x7e8] sm:$0xff]
        %v3456 = vld [vmem:[#allocation23 + $0x7f0] sm:$0xff]
        %v3457 = vld [vmem:[#allocation23 + $0x7f8] sm:$0xf]
        %v3458 = vld [vmem:[#allocation23 + $0x7fc] sm:$0xff]
        %v3459 = vld [vmem:[#allocation23 + $0x804] sm:$0xff]
        %v3460 = vld [vmem:[#allocation23 + $0x80c] sm:$0xff]
        %v3461 = vld [vmem:[#allocation23 + $0x814] sm:$0xf]
        %v3462 = vld [vmem:[#allocation23 + $0x818] sm:$0xff]
        %v3463 = vld [vmem:[#allocation23 + $0x820] sm:$0xff]
        %v3464 = vld [vmem:[#allocation23 + $0x828] sm:$0xff]
        %v3465 = vld [vmem:[#allocation23 + $0x830] sm:$0xf]
        %v3466 = vld [vmem:[#allocation23 + $0x834] sm:$0xff]
        %v3467 = vld [vmem:[#allocation23 + $0x83c] sm:$0xff]
        %v3468 = vld [vmem:[#allocation23 + $0x844] sm:$0xff]
        %v3469 = vld [vmem:[#allocation23 + $0x84c] sm:$0xf]
        %v3470 = vld [vmem:[#allocation23 + $0x850] sm:$0xff]
        %v3471 = vld [vmem:[#allocation23 + $0x858] sm:$0xff]
        %v3472 = vld [vmem:[#allocation23 + $0x860] sm:$0xff]
        %v3473 = vld [vmem:[#allocation23 + $0x868] sm:$0xf]
        %v3474 = vld [vmem:[#allocation23 + $0x86c] sm:$0xff]
        %v3475 = vld [vmem:[#allocation23 + $0x874] sm:$0xff]
        %v3476 = vld [vmem:[#allocation23 + $0x87c] sm:$0xff]
        %v3477 = vld [vmem:[#allocation23 + $0x884] sm:$0xf]
        %v3478 = vld [vmem:[#allocation23 + $0x888] sm:$0xff]
        %v3479 = vld [vmem:[#allocation23 + $0x890] sm:$0xff]
        %v3480 = vld [vmem:[#allocation23 + $0x898] sm:$0xff]
        %v3481 = vld [vmem:[#allocation23 + $0x8a0] sm:$0xf]
        %v3482 = vld [vmem:[#allocation23 + $0x8a4] sm:$0xff]
        %v3483 = vld [vmem:[#allocation23 + $0x8ac] sm:$0xff]
        %v3484 = vld [vmem:[#allocation23 + $0x8b4] sm:$0xff]
        %v3485 = vld [vmem:[#allocation23 + $0x8bc] sm:$0xf]
        %v3486 = vld [vmem:[#allocation23 + $0x8c0] sm:$0xff]
        %v3487 = vld [vmem:[#allocation23 + $0x8c8] sm:$0xff]
        %v3488 = vld [vmem:[#allocation23 + $0x8d0] sm:$0xff]
        %v3489 = vld [vmem:[#allocation23 + $0x8d8] sm:$0xf]
        %v3490 = vld [vmem:[#allocation23 + $0x8dc] sm:$0xff]
        %v3491 = vld [vmem:[#allocation23 + $0x8e4] sm:$0xff]
        %v3492 = vld [vmem:[#allocation23 + $0x8ec] sm:$0xff]
        %v3493 = vld [vmem:[#allocation23 + $0x8f4] sm:$0xf]
        %v3494 = vld [vmem:[#allocation23 + $0x8f8] sm:$0xff]
        %v3495 = vld [vmem:[#allocation23 + $0x900] sm:$0xff]
        %v3496 = vld [vmem:[#allocation23 + $0x908] sm:$0xff]
        %v3497 = vld [vmem:[#allocation23 + $0x910] sm:$0xf]
        %v3498 = vld [vmem:[#allocation23 + $0x914] sm:$0xff]
        %v3499 = vld [vmem:[#allocation23 + $0x91c] sm:$0xff]
        %v3500 = vld [vmem:[#allocation23 + $0x924] sm:$0xff]
        %v3501 = vld [vmem:[#allocation23 + $0x92c] sm:$0xf]
        %v3502 = vld [vmem:[#allocation23 + $0x930] sm:$0xff]
        %v3503 = vld [vmem:[#allocation23 + $0x938] sm:$0xff]
        %v3504 = vld [vmem:[#allocation23 + $0x940] sm:$0xff]
        %v3505 = vld [vmem:[#allocation23 + $0x948] sm:$0xf]
        %v3506 = vld [vmem:[#allocation23 + $0x94c] sm:$0xff]
        %v3507 = vld [vmem:[#allocation23 + $0x954] sm:$0xff]
        %v3508 = vld [vmem:[#allocation23 + $0x95c] sm:$0xff]
        %v3509 = vld [vmem:[#allocation23 + $0x964] sm:$0xf]
        %v3510 = vld [vmem:[#allocation23 + $0x968] sm:$0xff]
        %v3511 = vld [vmem:[#allocation23 + $0x970] sm:$0xff]
        %v3512 = vld [vmem:[#allocation23 + $0x978] sm:$0xff]
        %v3513 = vld [vmem:[#allocation23 + $0x980] sm:$0xf]
        %v3514 = vld [vmem:[#allocation23 + $0x984] sm:$0xff]
        %v3515 = vld [vmem:[#allocation23 + $0x98c] sm:$0xff]
        %v3516 = vld [vmem:[#allocation23 + $0x994] sm:$0xff]
        %v3517 = vld [vmem:[#allocation23 + $0x99c] sm:$0xf]
        %v3518 = vld [vmem:[#allocation23 + $0x9a0] sm:$0xff]
        %v3519 = vld [vmem:[#allocation23 + $0x9a8] sm:$0xff]
        %v3520 = vld [vmem:[#allocation23 + $0x9b0] sm:$0xff]
        %v3521 = vld [vmem:[#allocation23 + $0x9b8] sm:$0xf]
        %v3522 = vld [vmem:[#allocation23 + $0x9bc] sm:$0xff]
        %v3523 = vld [vmem:[#allocation23 + $0x9c4] sm:$0xff]
        %v3524 = vld [vmem:[#allocation23 + $0x9cc] sm:$0xff]
        %v3525 = vld [vmem:[#allocation23 + $0x9d4] sm:$0xf]
        %v3526 = vld [vmem:[#allocation23 + $0x9d8] sm:$0xff]
        %v3527 = vld [vmem:[#allocation23 + $0x9e0] sm:$0xff]
        %v3528 = vld [vmem:[#allocation23 + $0x9e8] sm:$0xff]
        %v3529 = vld [vmem:[#allocation23 + $0x9f0] sm:$0xf]
        %v3530 = vld [vmem:[#allocation23 + $0x9f4] sm:$0xff]
        %v3531 = vld [vmem:[#allocation23 + $0x9fc] sm:$0xff]
        %v3532 = vld [vmem:[#allocation23 + $0xa04] sm:$0xff]
        %v3533 = vld [vmem:[#allocation23 + $0xa0c] sm:$0xf]
        %v3534 = vld [vmem:[#allocation23 + $0xa10] sm:$0xff]
        %v3535 = vld [vmem:[#allocation23 + $0xa18] sm:$0xff]
        %v3536 = vld [vmem:[#allocation23 + $0xa20] sm:$0xff]
        %v3537 = vld [vmem:[#allocation23 + $0xa28] sm:$0xf]
        %v3538 = vld [vmem:[#allocation23 + $0xa2c] sm:$0xff]
        %v3539 = vld [vmem:[#allocation23 + $0xa34] sm:$0xff]
        %v3540 = vld [vmem:[#allocation23 + $0xa3c] sm:$0xff]
        %v3541 = vld [vmem:[#allocation23 + $0xa44] sm:$0xf]
        %v3542 = vld [vmem:[#allocation23 + $0xa48] sm:$0xff]
        %v3543 = vld [vmem:[#allocation23 + $0xa50] sm:$0xff]
        %v3544 = vld [vmem:[#allocation23 + $0xa58] sm:$0xff]
        %v3545 = vld [vmem:[#allocation23 + $0xa60] sm:$0xf]
        %v3546 = vld [vmem:[#allocation23 + $0xa64] sm:$0xff]
        %v3547 = vld [vmem:[#allocation23 + $0xa6c] sm:$0xff]
        %v3548 = vld [vmem:[#allocation23 + $0xa74] sm:$0xff]
        %v3549 = vld [vmem:[#allocation23 + $0xa7c] sm:$0xf]
        %v3550 = vld [vmem:[#allocation23 + $0xa80] sm:$0xff]
        %v3551 = vld [vmem:[#allocation23 + $0xa88] sm:$0xff]
        %v3552 = vld [vmem:[#allocation23 + $0xa90] sm:$0xff]
        %v3553 = vld [vmem:[#allocation23 + $0xa98] sm:$0xf]
        %v3554 = vld [vmem:[#allocation23 + $0xa9c] sm:$0xff]
        %v3555 = vld [vmem:[#allocation23 + $0xaa4] sm:$0xff]
        %v3556 = vld [vmem:[#allocation23 + $0xaac] sm:$0xff]
        %v3557 = vld [vmem:[#allocation23 + $0xab4] sm:$0xf]
        %v3558 = vld [vmem:[#allocation23 + $0xab8] sm:$0xff]
        %v3559 = vld [vmem:[#allocation23 + $0xac0] sm:$0xff]
        %v3560 = vld [vmem:[#allocation23 + $0xac8] sm:$0xff]
        %v3561 = vld [vmem:[#allocation23 + $0xad0] sm:$0xf]
        %v3562 = vld [vmem:[#allocation23 + $0xad4] sm:$0xff]
        %v3563 = vld [vmem:[#allocation23 + $0xadc] sm:$0xff]
        %v3564 = vld [vmem:[#allocation23 + $0xae4] sm:$0xff]
        %v3565 = vld [vmem:[#allocation23 + $0xaec] sm:$0xf]
        %v3566 = vld [vmem:[#allocation23 + $0xaf0] sm:$0xff]
        %v3567 = vld [vmem:[#allocation23 + $0xaf8] sm:$0xff]
        %v3568 = vld [vmem:[#allocation23 + $0xb00] sm:$0xff]
        %v3569 = vld [vmem:[#allocation23 + $0xb08] sm:$0xf]
        %v3570 = vld [vmem:[#allocation23 + $0xb0c] sm:$0xff]
        %v3571 = vld [vmem:[#allocation23 + $0xb14] sm:$0xff]
        %v3572 = vld [vmem:[#allocation23 + $0xb1c] sm:$0xff]
        %v3573 = vld [vmem:[#allocation23 + $0xb24] sm:$0xf]
        %v3574 = vld [vmem:[#allocation23 + $0xb28] sm:$0xff]
        %v3575 = vld [vmem:[#allocation23 + $0xb30] sm:$0xff]
        %v3576 = vld [vmem:[#allocation23 + $0xb38] sm:$0xff]
        %v3577 = vld [vmem:[#allocation23 + $0xb40] sm:$0xf]
        %v3578 = vld [vmem:[#allocation23 + $0xb44] sm:$0xff]
        %v3579 = vld [vmem:[#allocation23 + $0xb4c] sm:$0xff]
        %v3580 = vld [vmem:[#allocation23 + $0xb54] sm:$0xff]
        %v3581 = vld [vmem:[#allocation23 + $0xb5c] sm:$0xf]
        %v3582 = vld [vmem:[#allocation23 + $0xb60] sm:$0xff]
        %v3583 = vld [vmem:[#allocation23 + $0xb68] sm:$0xff]
        %v3584 = vld [vmem:[#allocation23 + $0xb70] sm:$0xff]
        %v3585 = vld [vmem:[#allocation23 + $0xb78] sm:$0xf]
        %v3586 = vld [vmem:[#allocation23 + $0xb7c] sm:$0xff]
        %v3587 = vld [vmem:[#allocation23 + $0xb84] sm:$0xff]
        %v3588 = vld [vmem:[#allocation23 + $0xb8c] sm:$0xff]
        %v3589 = vld [vmem:[#allocation23 + $0xb94] sm:$0xf]
        %v3590 = vld [vmem:[#allocation23 + $0xb98] sm:$0xff]
        %v3591 = vld [vmem:[#allocation23 + $0xba0] sm:$0xff]
        %v3592 = vld [vmem:[#allocation23 + $0xba8] sm:$0xff]
        %v3593 = vld [vmem:[#allocation23 + $0xbb0] sm:$0xf]
        %v3594 = vld [vmem:[#allocation23 + $0xbb4] sm:$0xff]
        %v3595 = vld [vmem:[#allocation23 + $0xbbc] sm:$0xff]
        %v3596 = vld [vmem:[#allocation23 + $0xbc4] sm:$0xff]
        %v3597 = vld [vmem:[#allocation23 + $0xbcc] sm:$0xf]
        %v3598 = vld [vmem:[#allocation23 + $0xbd0] sm:$0xff]
        %v3599 = vld [vmem:[#allocation23 + $0xbd8] sm:$0xff]
        %v3600 = vld [vmem:[#allocation23 + $0xbe0] sm:$0xff]
        %v3601 = vld [vmem:[#allocation23 + $0xbe8] sm:$0xf]
        %v3602 = vld [vmem:[#allocation23 + $0xbec] sm:$0xff]
        %v3603 = vld [vmem:[#allocation23 + $0xbf4] sm:$0xff]
        %v3604 = vld [vmem:[#allocation23 + $0xbfc] sm:$0xff]
        %v3605 = vld [vmem:[#allocation23 + $0xc04] sm:$0xf]
        %v3606 = vld [vmem:[#allocation23 + $0xc08] sm:$0xff]
        %v3607 = vld [vmem:[#allocation23 + $0xc10] sm:$0xff]
        %v3608 = vld [vmem:[#allocation23 + $0xc18] sm:$0xff]
        %v3609 = vld [vmem:[#allocation23 + $0xc20] sm:$0xf]
        %v3610 = vld [vmem:[#allocation23 + $0xc24] sm:$0xff]
        %v3611 = vld [vmem:[#allocation23 + $0xc2c] sm:$0xff]
        %v3612 = vld [vmem:[#allocation23 + $0xc34] sm:$0xff]
        %v3613 = vld [vmem:[#allocation23 + $0xc3c] sm:$0xf]
        %v3614 = vld [vmem:[#allocation23 + $0xc40] sm:$0xff]
        %v3615 = vld [vmem:[#allocation23 + $0xc48] sm:$0xff]
        %v3616 = vld [vmem:[#allocation23 + $0xc50] sm:$0xff]
        %v3617 = vld [vmem:[#allocation23 + $0xc58] sm:$0xf]
        %v3618 = vld [vmem:[#allocation23 + $0xc5c] sm:$0xff]
        %v3619 = vld [vmem:[#allocation23 + $0xc64] sm:$0xff]
        %v3620 = vld [vmem:[#allocation23 + $0xc6c] sm:$0xff]
        %v3621 = vld [vmem:[#allocation23 + $0xc74] sm:$0xf]
        %v3622 = vld [vmem:[#allocation23 + $0xc78] sm:$0xff]
        %v3623 = vld [vmem:[#allocation23 + $0xc80] sm:$0xff]
        %v3624 = vld [vmem:[#allocation23 + $0xc88] sm:$0xff]
        %v3625 = vld [vmem:[#allocation23 + $0xc90] sm:$0xf]
        %v3626 = vld [vmem:[#allocation23 + $0xc94] sm:$0xff]
        %v3627 = vld [vmem:[#allocation23 + $0xc9c] sm:$0xff]
        %v3628 = vld [vmem:[#allocation23 + $0xca4] sm:$0xff]
        %v3629 = vld [vmem:[#allocation23 + $0xcac] sm:$0xf]
        %v3630 = vld [vmem:[#allocation23 + $0xcb0] sm:$0xff]
        %v3631 = vld [vmem:[#allocation23 + $0xcb8] sm:$0xff]
        %v3632 = vld [vmem:[#allocation23 + $0xcc0] sm:$0xff]
        %v3633 = vld [vmem:[#allocation23 + $0xcc8] sm:$0xf]
        %v3634 = vld [vmem:[#allocation23 + $0xccc] sm:$0xff]
        %v3635 = vld [vmem:[#allocation23 + $0xcd4] sm:$0xff]
        %v3636 = vld [vmem:[#allocation23 + $0xcdc] sm:$0xff]
        %v3637 = vld [vmem:[#allocation23 + $0xce4] sm:$0xf]
        %v3638 = vld [vmem:[#allocation23 + $0xce8] sm:$0xff]
        %v3639 = vld [vmem:[#allocation23 + $0xcf0] sm:$0xff]
        %v3640 = vld [vmem:[#allocation23 + $0xcf8] sm:$0xff]
        %v3641 = vld [vmem:[#allocation23 + $0xd00] sm:$0xf]
        %v3642 = vld [vmem:[#allocation23 + $0xd04] sm:$0xff]
        %v3643 = vld [vmem:[#allocation23 + $0xd0c] sm:$0xff]
        %v3644 = vld [vmem:[#allocation23 + $0xd14] sm:$0xff]
        %v3645 = vld [vmem:[#allocation23 + $0xd1c] sm:$0xf]
        %v3646 = vld [vmem:[#allocation23 + $0xd20] sm:$0xff]
        %v3647 = vld [vmem:[#allocation23 + $0xd28] sm:$0xff]
        %v3648 = vld [vmem:[#allocation23 + $0xd30] sm:$0xff]
        %v3649 = vld [vmem:[#allocation23 + $0xd38] sm:$0xf]
        %v3650 = vld [vmem:[#allocation23 + $0xd3c] sm:$0xff]
        %v3651 = vld [vmem:[#allocation23 + $0xd44] sm:$0xff]
        %v3652 = vld [vmem:[#allocation23 + $0xd4c] sm:$0xff]
        %v3653 = vld [vmem:[#allocation23 + $0xd54] sm:$0xf]
        %v3654 = vld [vmem:[#allocation23 + $0xd58] sm:$0xff]
        %v3655 = vld [vmem:[#allocation23 + $0xd60] sm:$0xff]
        %v3656 = vld [vmem:[#allocation23 + $0xd68] sm:$0xff]
        %v3657 = vld [vmem:[#allocation23 + $0xd70] sm:$0xf]
        %v3658 = vld [vmem:[#allocation23 + $0xd74] sm:$0xff]
        %v3659 = vld [vmem:[#allocation23 + $0xd7c] sm:$0xff]
        %v3660 = vld [vmem:[#allocation23 + $0xd84] sm:$0xff]
        %v3661 = vld [vmem:[#allocation23 + $0xd8c] sm:$0xf]
        %v3662 = vld [vmem:[#allocation23 + $0xd90] sm:$0xff]
        %v3663 = vld [vmem:[#allocation23 + $0xd98] sm:$0xff]
        %v3664 = vld [vmem:[#allocation23 + $0xda0] sm:$0xff]
        %v3665 = vld [vmem:[#allocation23 + $0xda8] sm:$0xf]
        %v3666 = vld [vmem:[#allocation23 + $0xdac] sm:$0xff]
        %v3667 = vld [vmem:[#allocation23 + $0xdb4] sm:$0xff]
        %v3668 = vld [vmem:[#allocation23 + $0xdbc] sm:$0xff]
        %v3669 = vld [vmem:[#allocation23 + $0xdc4] sm:$0xf]
        %v3670 = vld [vmem:[#allocation23 + $0xdc8] sm:$0xff]
        %v3671 = vld [vmem:[#allocation23 + $0xdd0] sm:$0xff]
        %v3672 = vld [vmem:[#allocation23 + $0xdd8] sm:$0xff]
        %v3673 = vld [vmem:[#allocation23 + $0xde0] sm:$0xf]
        %v3674 = vld [vmem:[#allocation23 + $0xde4] sm:$0xff]
        %v3675 = vld [vmem:[#allocation23 + $0xdec] sm:$0xff]
        %v3676 = vld [vmem:[#allocation23 + $0xdf4] sm:$0xff]
        %v3677 = vld [vmem:[#allocation23 + $0xdfc] sm:$0xf]
        %v3678 = vunpack.c.l.bf16 %v3166
        %v3679 = vunpack.c.h.bf16 %v3166
        %v3680 = vunpack.c.l.bf16 %v3167
        %v3681 = vunpack.c.h.bf16 %v3167
        %v3682 = vunpack.c.l.bf16 %v3168
        %v3683 = vunpack.c.h.bf16 %v3168
        %v3684 = vunpack.c.l.bf16 %v3169
        %v3685 = vunpack.c.l.bf16 %v3170
        %v3686 = vunpack.c.h.bf16 %v3170
        %v3687 = vunpack.c.l.bf16 %v3171
        %v3688 = vunpack.c.h.bf16 %v3171
        %v3689 = vunpack.c.l.bf16 %v3172
        %v3690 = vunpack.c.h.bf16 %v3172
        %v3691 = vunpack.c.l.bf16 %v3173
        %v3692 = vunpack.c.l.bf16 %v3174
        %v3693 = vunpack.c.h.bf16 %v3174
        %v3694 = vunpack.c.l.bf16 %v3175
        %v3695 = vunpack.c.h.bf16 %v3175
        %v3696 = vunpack.c.l.bf16 %v3176
        %v3697 = vunpack.c.h.bf16 %v3176
        %v3698 = vunpack.c.l.bf16 %v3177
        %v3699 = vunpack.c.l.bf16 %v3178
        %v3700 = vunpack.c.h.bf16 %v3178
        %v3701 = vunpack.c.l.bf16 %v3179
        %v3702 = vunpack.c.h.bf16 %v3179
        %v3703 = vunpack.c.l.bf16 %v3180
        %v3704 = vunpack.c.h.bf16 %v3180
        %v3705 = vunpack.c.l.bf16 %v3181
        %v3706 = vunpack.c.l.bf16 %v3182
        %v3707 = vunpack.c.h.bf16 %v3182
        %v3708 = vunpack.c.l.bf16 %v3183
        %v3709 = vunpack.c.h.bf16 %v3183
        %v3710 = vunpack.c.l.bf16 %v3184
        %v3711 = vunpack.c.h.bf16 %v3184
        %v3712 = vunpack.c.l.bf16 %v3185
        %v3713 = vunpack.c.l.bf16 %v3186
        %v3714 = vunpack.c.h.bf16 %v3186
        %v3715 = vunpack.c.l.bf16 %v3187
        %v3716 = vunpack.c.h.bf16 %v3187
        %v3717 = vunpack.c.l.bf16 %v3188
        %v3718 = vunpack.c.h.bf16 %v3188
        %v3719 = vunpack.c.l.bf16 %v3189
        %v3720 = vunpack.c.l.bf16 %v3190
        %v3721 = vunpack.c.h.bf16 %v3190
        %v3722 = vunpack.c.l.bf16 %v3191
        %v3723 = vunpack.c.h.bf16 %v3191
        %v3724 = vunpack.c.l.bf16 %v3192
        %v3725 = vunpack.c.h.bf16 %v3192
        %v3726 = vunpack.c.l.bf16 %v3193
        %v3727 = vunpack.c.l.bf16 %v3194
        %v3728 = vunpack.c.h.bf16 %v3194
        %v3729 = vunpack.c.l.bf16 %v3195
        %v3730 = vunpack.c.h.bf16 %v3195
        %v3731 = vunpack.c.l.bf16 %v3196
        %v3732 = vunpack.c.h.bf16 %v3196
        %v3733 = vunpack.c.l.bf16 %v3197
        %v3734 = vunpack.c.l.bf16 %v3198
        %v3735 = vunpack.c.h.bf16 %v3198
        %v3736 = vunpack.c.l.bf16 %v3199
        %v3737 = vunpack.c.h.bf16 %v3199
        %v3738 = vunpack.c.l.bf16 %v3200
        %v3739 = vunpack.c.h.bf16 %v3200
        %v3740 = vunpack.c.l.bf16 %v3201
        %v3741 = vunpack.c.l.bf16 %v3202
        %v3742 = vunpack.c.h.bf16 %v3202
        %v3743 = vunpack.c.l.bf16 %v3203
        %v3744 = vunpack.c.h.bf16 %v3203
        %v3745 = vunpack.c.l.bf16 %v3204
        %v3746 = vunpack.c.h.bf16 %v3204
        %v3747 = vunpack.c.l.bf16 %v3205
        %v3748 = vunpack.c.l.bf16 %v3206
        %v3749 = vunpack.c.h.bf16 %v3206
        %v3750 = vunpack.c.l.bf16 %v3207
        %v3751 = vunpack.c.h.bf16 %v3207
        %v3752 = vunpack.c.l.bf16 %v3208
        %v3753 = vunpack.c.h.bf16 %v3208
        %v3754 = vunpack.c.l.bf16 %v3209
        %v3755 = vunpack.c.l.bf16 %v3210
        %v3756 = vunpack.c.h.bf16 %v3210
        %v3757 = vunpack.c.l.bf16 %v3211
        %v3758 = vunpack.c.h.bf16 %v3211
        %v3759 = vunpack.c.l.bf16 %v3212
        %v3760 = vunpack.c.h.bf16 %v3212
        %v3761 = vunpack.c.l.bf16 %v3213
        %v3762 = vunpack.c.l.bf16 %v3214
        %v3763 = vunpack.c.h.bf16 %v3214
        %v3764 = vunpack.c.l.bf16 %v3215
        %v3765 = vunpack.c.h.bf16 %v3215
        %v3766 = vunpack.c.l.bf16 %v3216
        %v3767 = vunpack.c.h.bf16 %v3216
        %v3768 = vunpack.c.l.bf16 %v3217
        %v3769 = vunpack.c.l.bf16 %v3218
        %v3770 = vunpack.c.h.bf16 %v3218
        %v3771 = vunpack.c.l.bf16 %v3219
        %v3772 = vunpack.c.h.bf16 %v3219
        %v3773 = vunpack.c.l.bf16 %v3220
        %v3774 = vunpack.c.h.bf16 %v3220
        %v3775 = vunpack.c.l.bf16 %v3221
        %v3776 = vunpack.c.l.bf16 %v3222
        %v3777 = vunpack.c.h.bf16 %v3222
        %v3778 = vunpack.c.l.bf16 %v3223
        %v3779 = vunpack.c.h.bf16 %v3223
        %v3780 = vunpack.c.l.bf16 %v3224
        %v3781 = vunpack.c.h.bf16 %v3224
        %v3782 = vunpack.c.l.bf16 %v3225
        %v3783 = vunpack.c.l.bf16 %v3226
        %v3784 = vunpack.c.h.bf16 %v3226
        %v3785 = vunpack.c.l.bf16 %v3227
        %v3786 = vunpack.c.h.bf16 %v3227
        %v3787 = vunpack.c.l.bf16 %v3228
        %v3788 = vunpack.c.h.bf16 %v3228
        %v3789 = vunpack.c.l.bf16 %v3229
        %v3790 = vunpack.c.l.bf16 %v3230
        %v3791 = vunpack.c.h.bf16 %v3230
        %v3792 = vunpack.c.l.bf16 %v3231
        %v3793 = vunpack.c.h.bf16 %v3231
        %v3794 = vunpack.c.l.bf16 %v3232
        %v3795 = vunpack.c.h.bf16 %v3232
        %v3796 = vunpack.c.l.bf16 %v3233
        %v3797 = vunpack.c.l.bf16 %v3234
        %v3798 = vunpack.c.h.bf16 %v3234
        %v3799 = vunpack.c.l.bf16 %v3235
        %v3800 = vunpack.c.h.bf16 %v3235
        %v3801 = vunpack.c.l.bf16 %v3236
        %v3802 = vunpack.c.h.bf16 %v3236
        %v3803 = vunpack.c.l.bf16 %v3237
        %v3804 = vunpack.c.l.bf16 %v3238
        %v3805 = vunpack.c.h.bf16 %v3238
        %v3806 = vunpack.c.l.bf16 %v3239
        %v3807 = vunpack.c.h.bf16 %v3239
        %v3808 = vunpack.c.l.bf16 %v3240
        %v3809 = vunpack.c.h.bf16 %v3240
        %v3810 = vunpack.c.l.bf16 %v3241
        %v3811 = vunpack.c.l.bf16 %v3242
        %v3812 = vunpack.c.h.bf16 %v3242
        %v3813 = vunpack.c.l.bf16 %v3243
        %v3814 = vunpack.c.h.bf16 %v3243
        %v3815 = vunpack.c.l.bf16 %v3244
        %v3816 = vunpack.c.h.bf16 %v3244
        %v3817 = vunpack.c.l.bf16 %v3245
        %v3818 = vunpack.c.l.bf16 %v3246
        %v3819 = vunpack.c.h.bf16 %v3246
        %v3820 = vunpack.c.l.bf16 %v3247
        %v3821 = vunpack.c.h.bf16 %v3247
        %v3822 = vunpack.c.l.bf16 %v3248
        %v3823 = vunpack.c.h.bf16 %v3248
        %v3824 = vunpack.c.l.bf16 %v3249
        %v3825 = vunpack.c.l.bf16 %v3250
        %v3826 = vunpack.c.h.bf16 %v3250
        %v3827 = vunpack.c.l.bf16 %v3251
        %v3828 = vunpack.c.h.bf16 %v3251
        %v3829 = vunpack.c.l.bf16 %v3252
        %v3830 = vunpack.c.h.bf16 %v3252
        %v3831 = vunpack.c.l.bf16 %v3253
        %v3832 = vunpack.c.l.bf16 %v3254
        %v3833 = vunpack.c.h.bf16 %v3254
        %v3834 = vunpack.c.l.bf16 %v3255
        %v3835 = vunpack.c.h.bf16 %v3255
        %v3836 = vunpack.c.l.bf16 %v3256
        %v3837 = vunpack.c.h.bf16 %v3256
        %v3838 = vunpack.c.l.bf16 %v3257
        %v3839 = vunpack.c.l.bf16 %v3258
        %v3840 = vunpack.c.h.bf16 %v3258
        %v3841 = vunpack.c.l.bf16 %v3259
        %v3842 = vunpack.c.h.bf16 %v3259
        %v3843 = vunpack.c.l.bf16 %v3260
        %v3844 = vunpack.c.h.bf16 %v3260
        %v3845 = vunpack.c.l.bf16 %v3261
        %v3846 = vunpack.c.l.bf16 %v3262
        %v3847 = vunpack.c.h.bf16 %v3262
        %v3848 = vunpack.c.l.bf16 %v3263
        %v3849 = vunpack.c.h.bf16 %v3263
        %v3850 = vunpack.c.l.bf16 %v3264
        %v3851 = vunpack.c.h.bf16 %v3264
        %v3852 = vunpack.c.l.bf16 %v3265
        %v3853 = vunpack.c.l.bf16 %v3266
        %v3854 = vunpack.c.h.bf16 %v3266
        %v3855 = vunpack.c.l.bf16 %v3267
        %v3856 = vunpack.c.h.bf16 %v3267
        %v3857 = vunpack.c.l.bf16 %v3268
        %v3858 = vunpack.c.h.bf16 %v3268
        %v3859 = vunpack.c.l.bf16 %v3269
        %v3860 = vunpack.c.l.bf16 %v3270
        %v3861 = vunpack.c.h.bf16 %v3270
        %v3862 = vunpack.c.l.bf16 %v3271
        %v3863 = vunpack.c.h.bf16 %v3271
        %v3864 = vunpack.c.l.bf16 %v3272
        %v3865 = vunpack.c.h.bf16 %v3272
        %v3866 = vunpack.c.l.bf16 %v3273
        %v3867 = vunpack.c.l.bf16 %v3274
        %v3868 = vunpack.c.h.bf16 %v3274
        %v3869 = vunpack.c.l.bf16 %v3275
        %v3870 = vunpack.c.h.bf16 %v3275
        %v3871 = vunpack.c.l.bf16 %v3276
        %v3872 = vunpack.c.h.bf16 %v3276
        %v3873 = vunpack.c.l.bf16 %v3277
        %v3874 = vunpack.c.l.bf16 %v3278
        %v3875 = vunpack.c.h.bf16 %v3278
        %v3876 = vunpack.c.l.bf16 %v3279
        %v3877 = vunpack.c.h.bf16 %v3279
        %v3878 = vunpack.c.l.bf16 %v3280
        %v3879 = vunpack.c.h.bf16 %v3280
        %v3880 = vunpack.c.l.bf16 %v3281
        %v3881 = vunpack.c.l.bf16 %v3282
        %v3882 = vunpack.c.h.bf16 %v3282
        %v3883 = vunpack.c.l.bf16 %v3283
        %v3884 = vunpack.c.h.bf16 %v3283
        %v3885 = vunpack.c.l.bf16 %v3284
        %v3886 = vunpack.c.h.bf16 %v3284
        %v3887 = vunpack.c.l.bf16 %v3285
        %v3888 = vunpack.c.l.bf16 %v3286
        %v3889 = vunpack.c.h.bf16 %v3286
        %v3890 = vunpack.c.l.bf16 %v3287
        %v3891 = vunpack.c.h.bf16 %v3287
        %v3892 = vunpack.c.l.bf16 %v3288
        %v3893 = vunpack.c.h.bf16 %v3288
        %v3894 = vunpack.c.l.bf16 %v3289
        %v3895 = vunpack.c.l.bf16 %v3290
        %v3896 = vunpack.c.h.bf16 %v3290
        %v3897 = vunpack.c.l.bf16 %v3291
        %v3898 = vunpack.c.h.bf16 %v3291
        %v3899 = vunpack.c.l.bf16 %v3292
        %v3900 = vunpack.c.h.bf16 %v3292
        %v3901 = vunpack.c.l.bf16 %v3293
        %v3902 = vunpack.c.l.bf16 %v3294
        %v3903 = vunpack.c.h.bf16 %v3294
        %v3904 = vunpack.c.l.bf16 %v3295
        %v3905 = vunpack.c.h.bf16 %v3295
        %v3906 = vunpack.c.l.bf16 %v3296
        %v3907 = vunpack.c.h.bf16 %v3296
        %v3908 = vunpack.c.l.bf16 %v3297
        %v3909 = vunpack.c.l.bf16 %v3298
        %v3910 = vunpack.c.h.bf16 %v3298
        %v3911 = vunpack.c.l.bf16 %v3299
        %v3912 = vunpack.c.h.bf16 %v3299
        %v3913 = vunpack.c.l.bf16 %v3300
        %v3914 = vunpack.c.h.bf16 %v3300
        %v3915 = vunpack.c.l.bf16 %v3301
        %v3916 = vunpack.c.l.bf16 %v3302
        %v3917 = vunpack.c.h.bf16 %v3302
        %v3918 = vunpack.c.l.bf16 %v3303
        %v3919 = vunpack.c.h.bf16 %v3303
        %v3920 = vunpack.c.l.bf16 %v3304
        %v3921 = vunpack.c.h.bf16 %v3304
        %v3922 = vunpack.c.l.bf16 %v3305
        %v3923 = vunpack.c.l.bf16 %v3306
        %v3924 = vunpack.c.h.bf16 %v3306
        %v3925 = vunpack.c.l.bf16 %v3307
        %v3926 = vunpack.c.h.bf16 %v3307
        %v3927 = vunpack.c.l.bf16 %v3308
        %v3928 = vunpack.c.h.bf16 %v3308
        %v3929 = vunpack.c.l.bf16 %v3309
        %v3930 = vunpack.c.l.bf16 %v3310
        %v3931 = vunpack.c.h.bf16 %v3310
        %v3932 = vunpack.c.l.bf16 %v3311
        %v3933 = vunpack.c.h.bf16 %v3311
        %v3934 = vunpack.c.l.bf16 %v3312
        %v3935 = vunpack.c.h.bf16 %v3312
        %v3936 = vunpack.c.l.bf16 %v3313
        %v3937 = vunpack.c.l.bf16 %v3314
        %v3938 = vunpack.c.h.bf16 %v3314
        %v3939 = vunpack.c.l.bf16 %v3315
        %v3940 = vunpack.c.h.bf16 %v3315
        %v3941 = vunpack.c.l.bf16 %v3316
        %v3942 = vunpack.c.h.bf16 %v3316
        %v3943 = vunpack.c.l.bf16 %v3317
        %v3944 = vunpack.c.l.bf16 %v3318
        %v3945 = vunpack.c.h.bf16 %v3318
        %v3946 = vunpack.c.l.bf16 %v3319
        %v3947 = vunpack.c.h.bf16 %v3319
        %v3948 = vunpack.c.l.bf16 %v3320
        %v3949 = vunpack.c.h.bf16 %v3320
        %v3950 = vunpack.c.l.bf16 %v3321
        %v3951 = vunpack.c.l.bf16 %v3322
        %v3952 = vunpack.c.h.bf16 %v3322
        %v3953 = vunpack.c.l.bf16 %v3323
        %v3954 = vunpack.c.h.bf16 %v3323
        %v3955 = vunpack.c.l.bf16 %v3324
        %v3956 = vunpack.c.h.bf16 %v3324
        %v3957 = vunpack.c.l.bf16 %v3325
        %v3958 = vunpack.c.l.bf16 %v3326
        %v3959 = vunpack.c.h.bf16 %v3326
        %v3960 = vunpack.c.l.bf16 %v3327
        %v3961 = vunpack.c.h.bf16 %v3327
        %v3962 = vunpack.c.l.bf16 %v3328
        %v3963 = vunpack.c.h.bf16 %v3328
        %v3964 = vunpack.c.l.bf16 %v3329
        %v3965 = vunpack.c.l.bf16 %v3330
        %v3966 = vunpack.c.h.bf16 %v3330
        %v3967 = vunpack.c.l.bf16 %v3331
        %v3968 = vunpack.c.h.bf16 %v3331
        %v3969 = vunpack.c.l.bf16 %v3332
        %v3970 = vunpack.c.h.bf16 %v3332
        %v3971 = vunpack.c.l.bf16 %v3333
        %v3972 = vunpack.c.l.bf16 %v3334
        %v3973 = vunpack.c.h.bf16 %v3334
        %v3974 = vunpack.c.l.bf16 %v3335
        %v3975 = vunpack.c.h.bf16 %v3335
        %v3976 = vunpack.c.l.bf16 %v3336
        %v3977 = vunpack.c.h.bf16 %v3336
        %v3978 = vunpack.c.l.bf16 %v3337
        %v3979 = vunpack.c.l.bf16 %v3338
        %v3980 = vunpack.c.h.bf16 %v3338
        %v3981 = vunpack.c.l.bf16 %v3339
        %v3982 = vunpack.c.h.bf16 %v3339
        %v3983 = vunpack.c.l.bf16 %v3340
        %v3984 = vunpack.c.h.bf16 %v3340
        %v3985 = vunpack.c.l.bf16 %v3341
        %v3986 = vunpack.c.l.bf16 %v3342
        %v3987 = vunpack.c.h.bf16 %v3342
        %v3988 = vunpack.c.l.bf16 %v3343
        %v3989 = vunpack.c.h.bf16 %v3343
        %v3990 = vunpack.c.l.bf16 %v3344
        %v3991 = vunpack.c.h.bf16 %v3344
        %v3992 = vunpack.c.l.bf16 %v3345
        %v3993 = vunpack.c.l.bf16 %v3346
        %v3994 = vunpack.c.h.bf16 %v3346
        %v3995 = vunpack.c.l.bf16 %v3347
        %v3996 = vunpack.c.h.bf16 %v3347
        %v3997 = vunpack.c.l.bf16 %v3348
        %v3998 = vunpack.c.h.bf16 %v3348
        %v3999 = vunpack.c.l.bf16 %v3349
        %v4000 = vunpack.c.l.bf16 %v3350
        %v4001 = vunpack.c.h.bf16 %v3350
        %v4002 = vunpack.c.l.bf16 %v3351
        %v4003 = vunpack.c.h.bf16 %v3351
        %v4004 = vunpack.c.l.bf16 %v3352
        %v4005 = vunpack.c.h.bf16 %v3352
        %v4006 = vunpack.c.l.bf16 %v3353
        %v4007 = vunpack.c.l.bf16 %v3354
        %v4008 = vunpack.c.h.bf16 %v3354
        %v4009 = vunpack.c.l.bf16 %v3355
        %v4010 = vunpack.c.h.bf16 %v3355
        %v4011 = vunpack.c.l.bf16 %v3356
        %v4012 = vunpack.c.h.bf16 %v3356
        %v4013 = vunpack.c.l.bf16 %v3357
        %v4014 = vunpack.c.l.bf16 %v3358
        %v4015 = vunpack.c.h.bf16 %v3358
        %v4016 = vunpack.c.l.bf16 %v3359
        %v4017 = vunpack.c.h.bf16 %v3359
        %v4018 = vunpack.c.l.bf16 %v3360
        %v4019 = vunpack.c.h.bf16 %v3360
        %v4020 = vunpack.c.l.bf16 %v3361
        %v4021 = vunpack.c.l.bf16 %v3362
        %v4022 = vunpack.c.h.bf16 %v3362
        %v4023 = vunpack.c.l.bf16 %v3363
        %v4024 = vunpack.c.h.bf16 %v3363
        %v4025 = vunpack.c.l.bf16 %v3364
        %v4026 = vunpack.c.h.bf16 %v3364
        %v4027 = vunpack.c.l.bf16 %v3365
        %v4028 = vunpack.c.l.bf16 %v3366
        %v4029 = vunpack.c.h.bf16 %v3366
        %v4030 = vunpack.c.l.bf16 %v3367
        %v4031 = vunpack.c.h.bf16 %v3367
        %v4032 = vunpack.c.l.bf16 %v3368
        %v4033 = vunpack.c.h.bf16 %v3368
        %v4034 = vunpack.c.l.bf16 %v3369
        %v4035 = vunpack.c.l.bf16 %v3370
        %v4036 = vunpack.c.h.bf16 %v3370
        %v4037 = vunpack.c.l.bf16 %v3371
        %v4038 = vunpack.c.h.bf16 %v3371
        %v4039 = vunpack.c.l.bf16 %v3372
        %v4040 = vunpack.c.h.bf16 %v3372
        %v4041 = vunpack.c.l.bf16 %v3373
        %v4042 = vunpack.c.l.bf16 %v3374
        %v4043 = vunpack.c.h.bf16 %v3374
        %v4044 = vunpack.c.l.bf16 %v3375
        %v4045 = vunpack.c.h.bf16 %v3375
        %v4046 = vunpack.c.l.bf16 %v3376
        %v4047 = vunpack.c.h.bf16 %v3376
        %v4048 = vunpack.c.l.bf16 %v3377
        %v4049 = vunpack.c.l.bf16 %v3378
        %v4050 = vunpack.c.h.bf16 %v3378
        %v4051 = vunpack.c.l.bf16 %v3379
        %v4052 = vunpack.c.h.bf16 %v3379
        %v4053 = vunpack.c.l.bf16 %v3380
        %v4054 = vunpack.c.h.bf16 %v3380
        %v4055 = vunpack.c.l.bf16 %v3381
        %v4056 = vunpack.c.l.bf16 %v3382
        %v4057 = vunpack.c.h.bf16 %v3382
        %v4058 = vunpack.c.l.bf16 %v3383
        %v4059 = vunpack.c.h.bf16 %v3383
        %v4060 = vunpack.c.l.bf16 %v3384
        %v4061 = vunpack.c.h.bf16 %v3384
        %v4062 = vunpack.c.l.bf16 %v3385
        %v4063 = vunpack.c.l.bf16 %v3386
        %v4064 = vunpack.c.h.bf16 %v3386
        %v4065 = vunpack.c.l.bf16 %v3387
        %v4066 = vunpack.c.h.bf16 %v3387
        %v4067 = vunpack.c.l.bf16 %v3388
        %v4068 = vunpack.c.h.bf16 %v3388
        %v4069 = vunpack.c.l.bf16 %v3389
        %v4070 = vunpack.c.l.bf16 %v3390
        %v4071 = vunpack.c.h.bf16 %v3390
        %v4072 = vunpack.c.l.bf16 %v3391
        %v4073 = vunpack.c.h.bf16 %v3391
        %v4074 = vunpack.c.l.bf16 %v3392
        %v4075 = vunpack.c.h.bf16 %v3392
        %v4076 = vunpack.c.l.bf16 %v3393
        %v4077 = vunpack.c.l.bf16 %v3394
        %v4078 = vunpack.c.h.bf16 %v3394
        %v4079 = vunpack.c.l.bf16 %v3395
        %v4080 = vunpack.c.h.bf16 %v3395
        %v4081 = vunpack.c.l.bf16 %v3396
        %v4082 = vunpack.c.h.bf16 %v3396
        %v4083 = vunpack.c.l.bf16 %v3397
        %v4084 = vunpack.c.l.bf16 %v3398
        %v4085 = vunpack.c.h.bf16 %v3398
        %v4086 = vunpack.c.l.bf16 %v3399
        %v4087 = vunpack.c.h.bf16 %v3399
        %v4088 = vunpack.c.l.bf16 %v3400
        %v4089 = vunpack.c.h.bf16 %v3400
        %v4090 = vunpack.c.l.bf16 %v3401
        %v4091 = vunpack.c.l.bf16 %v3402
        %v4092 = vunpack.c.h.bf16 %v3402
        %v4093 = vunpack.c.l.bf16 %v3403
        %v4094 = vunpack.c.h.bf16 %v3403
        %v4095 = vunpack.c.l.bf16 %v3404
        %v4096 = vunpack.c.h.bf16 %v3404
        %v4097 = vunpack.c.l.bf16 %v3405
        %v4098 = vunpack.c.l.bf16 %v3406
        %v4099 = vunpack.c.h.bf16 %v3406
        %v4100 = vunpack.c.l.bf16 %v3407
        %v4101 = vunpack.c.h.bf16 %v3407
        %v4102 = vunpack.c.l.bf16 %v3408
        %v4103 = vunpack.c.h.bf16 %v3408
        %v4104 = vunpack.c.l.bf16 %v3409
        %v4105 = vunpack.c.l.bf16 %v3410
        %v4106 = vunpack.c.h.bf16 %v3410
        %v4107 = vunpack.c.l.bf16 %v3411
        %v4108 = vunpack.c.h.bf16 %v3411
        %v4109 = vunpack.c.l.bf16 %v3412
        %v4110 = vunpack.c.h.bf16 %v3412
        %v4111 = vunpack.c.l.bf16 %v3413
        %v4112 = vunpack.c.l.bf16 %v3414
        %v4113 = vunpack.c.h.bf16 %v3414
        %v4114 = vunpack.c.l.bf16 %v3415
        %v4115 = vunpack.c.h.bf16 %v3415
        %v4116 = vunpack.c.l.bf16 %v3416
        %v4117 = vunpack.c.h.bf16 %v3416
        %v4118 = vunpack.c.l.bf16 %v3417
        %v4119 = vunpack.c.l.bf16 %v3418
        %v4120 = vunpack.c.h.bf16 %v3418
        %v4121 = vunpack.c.l.bf16 %v3419
        %v4122 = vunpack.c.h.bf16 %v3419
        %v4123 = vunpack.c.l.bf16 %v3420
        %v4124 = vunpack.c.h.bf16 %v3420
        %v4125 = vunpack.c.l.bf16 %v3421
        %v4126 = vunpack.c.l.bf16 %v3422
        %v4127 = vunpack.c.h.bf16 %v3422
        %v4128 = vunpack.c.l.bf16 %v3423
        %v4129 = vunpack.c.h.bf16 %v3423
        %v4130 = vunpack.c.l.bf16 %v3424
        %v4131 = vunpack.c.h.bf16 %v3424
        %v4132 = vunpack.c.l.bf16 %v3425
        %v4133 = vunpack.c.l.bf16 %v3426
        %v4134 = vunpack.c.h.bf16 %v3426
        %v4135 = vunpack.c.l.bf16 %v3427
        %v4136 = vunpack.c.h.bf16 %v3427
        %v4137 = vunpack.c.l.bf16 %v3428
        %v4138 = vunpack.c.h.bf16 %v3428
        %v4139 = vunpack.c.l.bf16 %v3429
        %v4140 = vunpack.c.l.bf16 %v3430
        %v4141 = vunpack.c.h.bf16 %v3430
        %v4142 = vunpack.c.l.bf16 %v3431
        %v4143 = vunpack.c.h.bf16 %v3431
        %v4144 = vunpack.c.l.bf16 %v3432
        %v4145 = vunpack.c.h.bf16 %v3432
        %v4146 = vunpack.c.l.bf16 %v3433
        %v4147 = vunpack.c.l.bf16 %v3434
        %v4148 = vunpack.c.h.bf16 %v3434
        %v4149 = vunpack.c.l.bf16 %v3435
        %v4150 = vunpack.c.h.bf16 %v3435
        %v4151 = vunpack.c.l.bf16 %v3436
        %v4152 = vunpack.c.h.bf16 %v3436
        %v4153 = vunpack.c.l.bf16 %v3437
        %v4154 = vunpack.c.l.bf16 %v3438
        %v4155 = vunpack.c.h.bf16 %v3438
        %v4156 = vunpack.c.l.bf16 %v3439
        %v4157 = vunpack.c.h.bf16 %v3439
        %v4158 = vunpack.c.l.bf16 %v3440
        %v4159 = vunpack.c.h.bf16 %v3440
        %v4160 = vunpack.c.l.bf16 %v3441
        %v4161 = vunpack.c.l.bf16 %v3442
        %v4162 = vunpack.c.h.bf16 %v3442
        %v4163 = vunpack.c.l.bf16 %v3443
        %v4164 = vunpack.c.h.bf16 %v3443
        %v4165 = vunpack.c.l.bf16 %v3444
        %v4166 = vunpack.c.h.bf16 %v3444
        %v4167 = vunpack.c.l.bf16 %v3445
        %v4168 = vunpack.c.l.bf16 %v3446
        %v4169 = vunpack.c.h.bf16 %v3446
        %v4170 = vunpack.c.l.bf16 %v3447
        %v4171 = vunpack.c.h.bf16 %v3447
        %v4172 = vunpack.c.l.bf16 %v3448
        %v4173 = vunpack.c.h.bf16 %v3448
        %v4174 = vunpack.c.l.bf16 %v3449
        %v4175 = vunpack.c.l.bf16 %v3450
        %v4176 = vunpack.c.h.bf16 %v3450
        %v4177 = vunpack.c.l.bf16 %v3451
        %v4178 = vunpack.c.h.bf16 %v3451
        %v4179 = vunpack.c.l.bf16 %v3452
        %v4180 = vunpack.c.h.bf16 %v3452
        %v4181 = vunpack.c.l.bf16 %v3453
        %v4182 = vunpack.c.l.bf16 %v3454
        %v4183 = vunpack.c.h.bf16 %v3454
        %v4184 = vunpack.c.l.bf16 %v3455
        %v4185 = vunpack.c.h.bf16 %v3455
        %v4186 = vunpack.c.l.bf16 %v3456
        %v4187 = vunpack.c.h.bf16 %v3456
        %v4188 = vunpack.c.l.bf16 %v3457
        %v4189 = vunpack.c.l.bf16 %v3458
        %v4190 = vunpack.c.h.bf16 %v3458
        %v4191 = vunpack.c.l.bf16 %v3459
        %v4192 = vunpack.c.h.bf16 %v3459
        %v4193 = vunpack.c.l.bf16 %v3460
        %v4194 = vunpack.c.h.bf16 %v3460
        %v4195 = vunpack.c.l.bf16 %v3461
        %v4196 = vunpack.c.l.bf16 %v3462
        %v4197 = vunpack.c.h.bf16 %v3462
        %v4198 = vunpack.c.l.bf16 %v3463
        %v4199 = vunpack.c.h.bf16 %v3463
        %v4200 = vunpack.c.l.bf16 %v3464
        %v4201 = vunpack.c.h.bf16 %v3464
        %v4202 = vunpack.c.l.bf16 %v3465
        %v4203 = vunpack.c.l.bf16 %v3466
        %v4204 = vunpack.c.h.bf16 %v3466
        %v4205 = vunpack.c.l.bf16 %v3467
        %v4206 = vunpack.c.h.bf16 %v3467
        %v4207 = vunpack.c.l.bf16 %v3468
        %v4208 = vunpack.c.h.bf16 %v3468
        %v4209 = vunpack.c.l.bf16 %v3469
        %v4210 = vunpack.c.l.bf16 %v3470
        %v4211 = vunpack.c.h.bf16 %v3470
        %v4212 = vunpack.c.l.bf16 %v3471
        %v4213 = vunpack.c.h.bf16 %v3471
        %v4214 = vunpack.c.l.bf16 %v3472
        %v4215 = vunpack.c.h.bf16 %v3472
        %v4216 = vunpack.c.l.bf16 %v3473
        %v4217 = vunpack.c.l.bf16 %v3474
        %v4218 = vunpack.c.h.bf16 %v3474
        %v4219 = vunpack.c.l.bf16 %v3475
        %v4220 = vunpack.c.h.bf16 %v3475
        %v4221 = vunpack.c.l.bf16 %v3476
        %v4222 = vunpack.c.h.bf16 %v3476
        %v4223 = vunpack.c.l.bf16 %v3477
        %v4224 = vunpack.c.l.bf16 %v3478
        %v4225 = vunpack.c.h.bf16 %v3478
        %v4226 = vunpack.c.l.bf16 %v3479
        %v4227 = vunpack.c.h.bf16 %v3479
        %v4228 = vunpack.c.l.bf16 %v3480
        %v4229 = vunpack.c.h.bf16 %v3480
        %v4230 = vunpack.c.l.bf16 %v3481
        %v4231 = vunpack.c.l.bf16 %v3482
        %v4232 = vunpack.c.h.bf16 %v3482
        %v4233 = vunpack.c.l.bf16 %v3483
        %v4234 = vunpack.c.h.bf16 %v3483
        %v4235 = vunpack.c.l.bf16 %v3484
        %v4236 = vunpack.c.h.bf16 %v3484
        %v4237 = vunpack.c.l.bf16 %v3485
        %v4238 = vunpack.c.l.bf16 %v3486
        %v4239 = vunpack.c.h.bf16 %v3486
        %v4240 = vunpack.c.l.bf16 %v3487
        %v4241 = vunpack.c.h.bf16 %v3487
        %v4242 = vunpack.c.l.bf16 %v3488
        %v4243 = vunpack.c.h.bf16 %v3488
        %v4244 = vunpack.c.l.bf16 %v3489
        %v4245 = vunpack.c.l.bf16 %v3490
        %v4246 = vunpack.c.h.bf16 %v3490
        %v4247 = vunpack.c.l.bf16 %v3491
        %v4248 = vunpack.c.h.bf16 %v3491
        %v4249 = vunpack.c.l.bf16 %v3492
        %v4250 = vunpack.c.h.bf16 %v3492
        %v4251 = vunpack.c.l.bf16 %v3493
        %v4252 = vunpack.c.l.bf16 %v3494
        %v4253 = vunpack.c.h.bf16 %v3494
        %v4254 = vunpack.c.l.bf16 %v3495
        %v4255 = vunpack.c.h.bf16 %v3495
        %v4256 = vunpack.c.l.bf16 %v3496
        %v4257 = vunpack.c.h.bf16 %v3496
        %v4258 = vunpack.c.l.bf16 %v3497
        %v4259 = vunpack.c.l.bf16 %v3498
        %v4260 = vunpack.c.h.bf16 %v3498
        %v4261 = vunpack.c.l.bf16 %v3499
        %v4262 = vunpack.c.h.bf16 %v3499
        %v4263 = vunpack.c.l.bf16 %v3500
        %v4264 = vunpack.c.h.bf16 %v3500
        %v4265 = vunpack.c.l.bf16 %v3501
        %v4266 = vunpack.c.l.bf16 %v3502
        %v4267 = vunpack.c.h.bf16 %v3502
        %v4268 = vunpack.c.l.bf16 %v3503
        %v4269 = vunpack.c.h.bf16 %v3503
        %v4270 = vunpack.c.l.bf16 %v3504
        %v4271 = vunpack.c.h.bf16 %v3504
        %v4272 = vunpack.c.l.bf16 %v3505
        %v4273 = vunpack.c.l.bf16 %v3506
        %v4274 = vunpack.c.h.bf16 %v3506
        %v4275 = vunpack.c.l.bf16 %v3507
        %v4276 = vunpack.c.h.bf16 %v3507
        %v4277 = vunpack.c.l.bf16 %v3508
        %v4278 = vunpack.c.h.bf16 %v3508
        %v4279 = vunpack.c.l.bf16 %v3509
        %v4280 = vunpack.c.l.bf16 %v3510
        %v4281 = vunpack.c.h.bf16 %v3510
        %v4282 = vunpack.c.l.bf16 %v3511
        %v4283 = vunpack.c.h.bf16 %v3511
        %v4284 = vunpack.c.l.bf16 %v3512
        %v4285 = vunpack.c.h.bf16 %v3512
        %v4286 = vunpack.c.l.bf16 %v3513
        %v4287 = vunpack.c.l.bf16 %v3514
        %v4288 = vunpack.c.h.bf16 %v3514
        %v4289 = vunpack.c.l.bf16 %v3515
        %v4290 = vunpack.c.h.bf16 %v3515
        %v4291 = vunpack.c.l.bf16 %v3516
        %v4292 = vunpack.c.h.bf16 %v3516
        %v4293 = vunpack.c.l.bf16 %v3517
        %v4294 = vunpack.c.l.bf16 %v3518
        %v4295 = vunpack.c.h.bf16 %v3518
        %v4296 = vunpack.c.l.bf16 %v3519
        %v4297 = vunpack.c.h.bf16 %v3519
        %v4298 = vunpack.c.l.bf16 %v3520
        %v4299 = vunpack.c.h.bf16 %v3520
        %v4300 = vunpack.c.l.bf16 %v3521
        %v4301 = vunpack.c.l.bf16 %v3522
        %v4302 = vunpack.c.h.bf16 %v3522
        %v4303 = vunpack.c.l.bf16 %v3523
        %v4304 = vunpack.c.h.bf16 %v3523
        %v4305 = vunpack.c.l.bf16 %v3524
        %v4306 = vunpack.c.h.bf16 %v3524
        %v4307 = vunpack.c.l.bf16 %v3525
        %v4308 = vunpack.c.l.bf16 %v3526
        %v4309 = vunpack.c.h.bf16 %v3526
        %v4310 = vunpack.c.l.bf16 %v3527
        %v4311 = vunpack.c.h.bf16 %v3527
        %v4312 = vunpack.c.l.bf16 %v3528
        %v4313 = vunpack.c.h.bf16 %v3528
        %v4314 = vunpack.c.l.bf16 %v3529
        %v4315 = vunpack.c.l.bf16 %v3530
        %v4316 = vunpack.c.h.bf16 %v3530
        %v4317 = vunpack.c.l.bf16 %v3531
        %v4318 = vunpack.c.h.bf16 %v3531
        %v4319 = vunpack.c.l.bf16 %v3532
        %v4320 = vunpack.c.h.bf16 %v3532
        %v4321 = vunpack.c.l.bf16 %v3533
        %v4322 = vunpack.c.l.bf16 %v3534
        %v4323 = vunpack.c.h.bf16 %v3534
        %v4324 = vunpack.c.l.bf16 %v3535
        %v4325 = vunpack.c.h.bf16 %v3535
        %v4326 = vunpack.c.l.bf16 %v3536
        %v4327 = vunpack.c.h.bf16 %v3536
        %v4328 = vunpack.c.l.bf16 %v3537
        %v4329 = vunpack.c.l.bf16 %v3538
        %v4330 = vunpack.c.h.bf16 %v3538
        %v4331 = vunpack.c.l.bf16 %v3539
        %v4332 = vunpack.c.h.bf16 %v3539
        %v4333 = vunpack.c.l.bf16 %v3540
        %v4334 = vunpack.c.h.bf16 %v3540
        %v4335 = vunpack.c.l.bf16 %v3541
        %v4336 = vunpack.c.l.bf16 %v3542
        %v4337 = vunpack.c.h.bf16 %v3542
        %v4338 = vunpack.c.l.bf16 %v3543
        %v4339 = vunpack.c.h.bf16 %v3543
        %v4340 = vunpack.c.l.bf16 %v3544
        %v4341 = vunpack.c.h.bf16 %v3544
        %v4342 = vunpack.c.l.bf16 %v3545
        %v4343 = vunpack.c.l.bf16 %v3546
        %v4344 = vunpack.c.h.bf16 %v3546
        %v4345 = vunpack.c.l.bf16 %v3547
        %v4346 = vunpack.c.h.bf16 %v3547
        %v4347 = vunpack.c.l.bf16 %v3548
        %v4348 = vunpack.c.h.bf16 %v3548
        %v4349 = vunpack.c.l.bf16 %v3549
        %v4350 = vunpack.c.l.bf16 %v3550
        %v4351 = vunpack.c.h.bf16 %v3550
        %v4352 = vunpack.c.l.bf16 %v3551
        %v4353 = vunpack.c.h.bf16 %v3551
        %v4354 = vunpack.c.l.bf16 %v3552
        %v4355 = vunpack.c.h.bf16 %v3552
        %v4356 = vunpack.c.l.bf16 %v3553
        %v4357 = vunpack.c.l.bf16 %v3554
        %v4358 = vunpack.c.h.bf16 %v3554
        %v4359 = vunpack.c.l.bf16 %v3555
        %v4360 = vunpack.c.h.bf16 %v3555
        %v4361 = vunpack.c.l.bf16 %v3556
        %v4362 = vunpack.c.h.bf16 %v3556
        %v4363 = vunpack.c.l.bf16 %v3557
        %v4364 = vunpack.c.l.bf16 %v3558
        %v4365 = vunpack.c.h.bf16 %v3558
        %v4366 = vunpack.c.l.bf16 %v3559
        %v4367 = vunpack.c.h.bf16 %v3559
        %v4368 = vunpack.c.l.bf16 %v3560
        %v4369 = vunpack.c.h.bf16 %v3560
        %v4370 = vunpack.c.l.bf16 %v3561
        %v4371 = vunpack.c.l.bf16 %v3562
        %v4372 = vunpack.c.h.bf16 %v3562
        %v4373 = vunpack.c.l.bf16 %v3563
        %v4374 = vunpack.c.h.bf16 %v3563
        %v4375 = vunpack.c.l.bf16 %v3564
        %v4376 = vunpack.c.h.bf16 %v3564
        %v4377 = vunpack.c.l.bf16 %v3565
        %v4378 = vunpack.c.l.bf16 %v3566
        %v4379 = vunpack.c.h.bf16 %v3566
        %v4380 = vunpack.c.l.bf16 %v3567
        %v4381 = vunpack.c.h.bf16 %v3567
        %v4382 = vunpack.c.l.bf16 %v3568
        %v4383 = vunpack.c.h.bf16 %v3568
        %v4384 = vunpack.c.l.bf16 %v3569
        %v4385 = vunpack.c.l.bf16 %v3570
        %v4386 = vunpack.c.h.bf16 %v3570
        %v4387 = vunpack.c.l.bf16 %v3571
        %v4388 = vunpack.c.h.bf16 %v3571
        %v4389 = vunpack.c.l.bf16 %v3572
        %v4390 = vunpack.c.h.bf16 %v3572
        %v4391 = vunpack.c.l.bf16 %v3573
        %v4392 = vunpack.c.l.bf16 %v3574
        %v4393 = vunpack.c.h.bf16 %v3574
        %v4394 = vunpack.c.l.bf16 %v3575
        %v4395 = vunpack.c.h.bf16 %v3575
        %v4396 = vunpack.c.l.bf16 %v3576
        %v4397 = vunpack.c.h.bf16 %v3576
        %v4398 = vunpack.c.l.bf16 %v3577
        %v4399 = vunpack.c.l.bf16 %v3578
        %v4400 = vunpack.c.h.bf16 %v3578
        %v4401 = vunpack.c.l.bf16 %v3579
        %v4402 = vunpack.c.h.bf16 %v3579
        %v4403 = vunpack.c.l.bf16 %v3580
        %v4404 = vunpack.c.h.bf16 %v3580
        %v4405 = vunpack.c.l.bf16 %v3581
        %v4406 = vunpack.c.l.bf16 %v3582
        %v4407 = vunpack.c.h.bf16 %v3582
        %v4408 = vunpack.c.l.bf16 %v3583
        %v4409 = vunpack.c.h.bf16 %v3583
        %v4410 = vunpack.c.l.bf16 %v3584
        %v4411 = vunpack.c.h.bf16 %v3584
        %v4412 = vunpack.c.l.bf16 %v3585
        %v4413 = vunpack.c.l.bf16 %v3586
        %v4414 = vunpack.c.h.bf16 %v3586
        %v4415 = vunpack.c.l.bf16 %v3587
        %v4416 = vunpack.c.h.bf16 %v3587
        %v4417 = vunpack.c.l.bf16 %v3588
        %v4418 = vunpack.c.h.bf16 %v3588
        %v4419 = vunpack.c.l.bf16 %v3589
        %v4420 = vunpack.c.l.bf16 %v3590
        %v4421 = vunpack.c.h.bf16 %v3590
        %v4422 = vunpack.c.l.bf16 %v3591
        %v4423 = vunpack.c.h.bf16 %v3591
        %v4424 = vunpack.c.l.bf16 %v3592
        %v4425 = vunpack.c.h.bf16 %v3592
        %v4426 = vunpack.c.l.bf16 %v3593
        %v4427 = vunpack.c.l.bf16 %v3594
        %v4428 = vunpack.c.h.bf16 %v3594
        %v4429 = vunpack.c.l.bf16 %v3595
        %v4430 = vunpack.c.h.bf16 %v3595
        %v4431 = vunpack.c.l.bf16 %v3596
        %v4432 = vunpack.c.h.bf16 %v3596
        %v4433 = vunpack.c.l.bf16 %v3597
        %v4434 = vunpack.c.l.bf16 %v3598
        %v4435 = vunpack.c.h.bf16 %v3598
        %v4436 = vunpack.c.l.bf16 %v3599
        %v4437 = vunpack.c.h.bf16 %v3599
        %v4438 = vunpack.c.l.bf16 %v3600
        %v4439 = vunpack.c.h.bf16 %v3600
        %v4440 = vunpack.c.l.bf16 %v3601
        %v4441 = vunpack.c.l.bf16 %v3602
        %v4442 = vunpack.c.h.bf16 %v3602
        %v4443 = vunpack.c.l.bf16 %v3603
        %v4444 = vunpack.c.h.bf16 %v3603
        %v4445 = vunpack.c.l.bf16 %v3604
        %v4446 = vunpack.c.h.bf16 %v3604
        %v4447 = vunpack.c.l.bf16 %v3605
        %v4448 = vunpack.c.l.bf16 %v3606
        %v4449 = vunpack.c.h.bf16 %v3606
        %v4450 = vunpack.c.l.bf16 %v3607
        %v4451 = vunpack.c.h.bf16 %v3607
        %v4452 = vunpack.c.l.bf16 %v3608
        %v4453 = vunpack.c.h.bf16 %v3608
        %v4454 = vunpack.c.l.bf16 %v3609
        %v4455 = vunpack.c.l.bf16 %v3610
        %v4456 = vunpack.c.h.bf16 %v3610
        %v4457 = vunpack.c.l.bf16 %v3611
        %v4458 = vunpack.c.h.bf16 %v3611
        %v4459 = vunpack.c.l.bf16 %v3612
        %v4460 = vunpack.c.h.bf16 %v3612
        %v4461 = vunpack.c.l.bf16 %v3613
        %v4462 = vunpack.c.l.bf16 %v3614
        %v4463 = vunpack.c.h.bf16 %v3614
        %v4464 = vunpack.c.l.bf16 %v3615
        %v4465 = vunpack.c.h.bf16 %v3615
        %v4466 = vunpack.c.l.bf16 %v3616
        %v4467 = vunpack.c.h.bf16 %v3616
        %v4468 = vunpack.c.l.bf16 %v3617
        %v4469 = vunpack.c.l.bf16 %v3618
        %v4470 = vunpack.c.h.bf16 %v3618
        %v4471 = vunpack.c.l.bf16 %v3619
        %v4472 = vunpack.c.h.bf16 %v3619
        %v4473 = vunpack.c.l.bf16 %v3620
        %v4474 = vunpack.c.h.bf16 %v3620
        %v4475 = vunpack.c.l.bf16 %v3621
        %v4476 = vunpack.c.l.bf16 %v3622
        %v4477 = vunpack.c.h.bf16 %v3622
        %v4478 = vunpack.c.l.bf16 %v3623
        %v4479 = vunpack.c.h.bf16 %v3623
        %v4480 = vunpack.c.l.bf16 %v3624
        %v4481 = vunpack.c.h.bf16 %v3624
        %v4482 = vunpack.c.l.bf16 %v3625
        %v4483 = vunpack.c.l.bf16 %v3626
        %v4484 = vunpack.c.h.bf16 %v3626
        %v4485 = vunpack.c.l.bf16 %v3627
        %v4486 = vunpack.c.h.bf16 %v3627
        %v4487 = vunpack.c.l.bf16 %v3628
        %v4488 = vunpack.c.h.bf16 %v3628
        %v4489 = vunpack.c.l.bf16 %v3629
        %v4490 = vunpack.c.l.bf16 %v3630
        %v4491 = vunpack.c.h.bf16 %v3630
        %v4492 = vunpack.c.l.bf16 %v3631
        %v4493 = vunpack.c.h.bf16 %v3631
        %v4494 = vunpack.c.l.bf16 %v3632
        %v4495 = vunpack.c.h.bf16 %v3632
        %v4496 = vunpack.c.l.bf16 %v3633
        %v4497 = vunpack.c.l.bf16 %v3634
        %v4498 = vunpack.c.h.bf16 %v3634
        %v4499 = vunpack.c.l.bf16 %v3635
        %v4500 = vunpack.c.h.bf16 %v3635
        %v4501 = vunpack.c.l.bf16 %v3636
        %v4502 = vunpack.c.h.bf16 %v3636
        %v4503 = vunpack.c.l.bf16 %v3637
        %v4504 = vunpack.c.l.bf16 %v3638
        %v4505 = vunpack.c.h.bf16 %v3638
        %v4506 = vunpack.c.l.bf16 %v3639
        %v4507 = vunpack.c.h.bf16 %v3639
        %v4508 = vunpack.c.l.bf16 %v3640
        %v4509 = vunpack.c.h.bf16 %v3640
        %v4510 = vunpack.c.l.bf16 %v3641
        %v4511 = vunpack.c.l.bf16 %v3642
        %v4512 = vunpack.c.h.bf16 %v3642
        %v4513 = vunpack.c.l.bf16 %v3643
        %v4514 = vunpack.c.h.bf16 %v3643
        %v4515 = vunpack.c.l.bf16 %v3644
        %v4516 = vunpack.c.h.bf16 %v3644
        %v4517 = vunpack.c.l.bf16 %v3645
        %v4518 = vunpack.c.l.bf16 %v3646
        %v4519 = vunpack.c.h.bf16 %v3646
        %v4520 = vunpack.c.l.bf16 %v3647
        %v4521 = vunpack.c.h.bf16 %v3647
        %v4522 = vunpack.c.l.bf16 %v3648
        %v4523 = vunpack.c.h.bf16 %v3648
        %v4524 = vunpack.c.l.bf16 %v3649
        %v4525 = vunpack.c.l.bf16 %v3650
        %v4526 = vunpack.c.h.bf16 %v3650
        %v4527 = vunpack.c.l.bf16 %v3651
        %v4528 = vunpack.c.h.bf16 %v3651
        %v4529 = vunpack.c.l.bf16 %v3652
        %v4530 = vunpack.c.h.bf16 %v3652
        %v4531 = vunpack.c.l.bf16 %v3653
        %v4532 = vunpack.c.l.bf16 %v3654
        %v4533 = vunpack.c.h.bf16 %v3654
        %v4534 = vunpack.c.l.bf16 %v3655
        %v4535 = vunpack.c.h.bf16 %v3655
        %v4536 = vunpack.c.l.bf16 %v3656
        %v4537 = vunpack.c.h.bf16 %v3656
        %v4538 = vunpack.c.l.bf16 %v3657
        %v4539 = vunpack.c.l.bf16 %v3658
        %v4540 = vunpack.c.h.bf16 %v3658
        %v4541 = vunpack.c.l.bf16 %v3659
        %v4542 = vunpack.c.h.bf16 %v3659
        %v4543 = vunpack.c.l.bf16 %v3660
        %v4544 = vunpack.c.h.bf16 %v3660
        %v4545 = vunpack.c.l.bf16 %v3661
        %v4546 = vunpack.c.l.bf16 %v3662
        %v4547 = vunpack.c.h.bf16 %v3662
        %v4548 = vunpack.c.l.bf16 %v3663
        %v4549 = vunpack.c.h.bf16 %v3663
        %v4550 = vunpack.c.l.bf16 %v3664
        %v4551 = vunpack.c.h.bf16 %v3664
        %v4552 = vunpack.c.l.bf16 %v3665
        %v4553 = vunpack.c.l.bf16 %v3666
        %v4554 = vunpack.c.h.bf16 %v3666
        %v4555 = vunpack.c.l.bf16 %v3667
        %v4556 = vunpack.c.h.bf16 %v3667
        %v4557 = vunpack.c.l.bf16 %v3668
        %v4558 = vunpack.c.h.bf16 %v3668
        %v4559 = vunpack.c.l.bf16 %v3669
        %v4560 = vunpack.c.l.bf16 %v3670
        %v4561 = vunpack.c.h.bf16 %v3670
        %v4562 = vunpack.c.l.bf16 %v3671
        %v4563 = vunpack.c.h.bf16 %v3671
        %v4564 = vunpack.c.l.bf16 %v3672
        %v4565 = vunpack.c.h.bf16 %v3672
        %v4566 = vunpack.c.l.bf16 %v3673
        %v4567 = vunpack.c.l.bf16 %v3674
        %v4568 = vunpack.c.h.bf16 %v3674
        %v4569 = vunpack.c.l.bf16 %v3675
        %v4570 = vunpack.c.h.bf16 %v3675
        %v4571 = vunpack.c.l.bf16 %v3676
        %v4572 = vunpack.c.h.bf16 %v3676
        %v4573 = vunpack.c.l.bf16 %v3677
        %v4574 = vld [vmem:[#allocation25] sm:$0xff]
        %v4576 = vlaneseq
        %v4577 = vshrl.u32 %v4576, 7
        %v4578 = vsub.s32 0, %v4577
        %v4579 = vrot.slane %v4574, %v4578
        %v4580 = vlaneseq
        %v4581 = vshrl.u32 %v4580, 7
        %v4582 = vsub.s32 1, %v4581
        %v4583 = vrot.slane %v4574, %v4582
        %v4584 = vlaneseq
        %v4585 = vshrl.u32 %v4584, 7
        %v4586 = vsub.s32 2, %v4585
        %v4587 = vrot.slane %v4574, %v4586
        %v4588 = vlaneseq
        %v4589 = vshrl.u32 %v4588, 7
        %v4590 = vsub.s32 3, %v4589
        %v4591 = vrot.slane %v4574, %v4590
        %v4592 = vlaneseq
        %v4593 = vshrl.u32 %v4592, 7
        %v4594 = vsub.s32 4, %v4593
        %v4595 = vrot.slane %v4574, %v4594
        %v4596 = vlaneseq
        %v4597 = vshrl.u32 %v4596, 7
        %v4598 = vsub.s32 5, %v4597
        %v4599 = vrot.slane %v4574, %v4598
        %v4600 = vlaneseq
        %v4601 = vshrl.u32 %v4600, 7
        %v4602 = vsub.s32 6, %v4601
        %v4603 = vrot.slane %v4574, %v4602
        %4611 = vmatprep.subr.mxu0 %v3784
        %4612 = vmatpush1.msra.mxu0 %v3783
        %4613 = vmatprep.subr.mxu0 %v3777
        %4614 = vmatpush1.msra.mxu0 %v3776
        %4615 = vmatprep.subr.mxu0 %v3770
        %4616 = vmatpush1.msra.mxu0 %v3769
        %4617 = vmatprep.subr.mxu0 %v3763
        %4618 = vmatpush1.msra.mxu0 %v3762
        %4619 = vmatprep.subr.mxu0 %v3756
        %4620 = vmatpush1.msra.mxu0 %v3755
        %4621 = vmatprep.subr.mxu0 %v3749
        %4622 = vmatpush1.msra.mxu0 %v3748
        %4623 = vmatprep.subr.mxu0 %v3742
        %4624 = vmatpush1.msra.mxu0 %v3741
        %4625 = vmatprep.subr.mxu0 %v3735
        %4626 = vmatpush1.msra.mxu0 %v3734
        %4627 = vmatprep.subr.mxu0 %v3728
        %4628 = vmatpush1.msra.mxu0 %v3727
        %4629 = vmatprep.subr.mxu0 %v3721
        %4630 = vmatpush1.msra.mxu0 %v3720
        %4631 = vmatprep.subr.mxu0 %v3714
        %4632 = vmatpush1.msra.mxu0 %v3713
        %4633 = vmatprep.subr.mxu0 %v3707
        %4634 = vmatpush1.msra.mxu0 %v3706
        %4635 = vmatprep.subr.mxu0 %v3700
        %4636 = vmatpush1.msra.mxu0 %v3699
        %4637 = vmatprep.subr.mxu0 %v3693
        %4638 = vmatpush1.msra.mxu0 %v3692
        %4639 = vmatprep.subr.mxu0 %v3686
        %4640 = vmatpush1.msra.mxu0 %v3685
        %4641 = vmatprep.subr.mxu0 %v3679
        %4642 = vmatpush1.msra.mxu0 %v3678
        %4643 = vmatprep.subr.mxu0 %v3896
        %4644 = vmatpush2.msra.mxu0 %v3895
        %4645 = vmatprep.subr.mxu0 %v3889
        %4646 = vmatpush2.msra.mxu0 %v3888
        %4647 = vmatprep.subr.mxu0 %v3882
        %4648 = vmatpush2.msra.mxu0 %v3881
        %4649 = vmatprep.subr.mxu0 %v3875
        %4650 = vmatpush2.msra.mxu0 %v3874
        %4651 = vmatprep.subr.mxu0 %v3868
        %4652 = vmatpush2.msra.mxu0 %v3867
        %4653 = vmatprep.subr.mxu0 %v3861
        %4654 = vmatpush2.msra.mxu0 %v3860
        %4655 = vmatprep.subr.mxu0 %v3854
        %4656 = vmatpush2.msra.mxu0 %v3853
        %4657 = vmatprep.subr.mxu0 %v3847
        %4658 = vmatpush2.msra.mxu0 %v3846
        %4659 = vmatprep.subr.mxu0 %v3840
        %4660 = vmatpush2.msra.mxu0 %v3839
        %4661 = vmatprep.subr.mxu0 %v3833
        %4662 = vmatpush2.msra.mxu0 %v3832
        %4663 = vmatprep.subr.mxu0 %v3826
        %4664 = vmatpush2.msra.mxu0 %v3825
        %4665 = vmatprep.subr.mxu0 %v3819
        %4666 = vmatpush2.msra.mxu0 %v3818
        %4667 = vmatprep.subr.mxu0 %v3812
        %4668 = vmatpush2.msra.mxu0 %v3811
        %4669 = vmatprep.subr.mxu0 %v3805
        %4670 = vmatpush2.msra.mxu0 %v3804
        %4671 = vmatprep.subr.mxu0 %v3798
        %4672 = vmatpush2.msra.mxu0 %v3797
        %4673 = vmatprep.subr.mxu0 %v3791
        %4674 = vmatpush2.msra.mxu0 %v3790
        %4675 = vmatprep.mubr.f32.mxu0 %v3159
        %4676 = vmatmul.mubr.f32.gmra.mxu0 %v3158
        %v4677 = vpop.f32.mrf.mxu0
        %v4678 = vadd.f32 %v4579, %v4677
        %v4679 = vpop.f32.mrf.mxu0
        %v4680 = vadd.f32 %v4583, %v4679
        %4681 = vdwg.mxu0
        %4682 = vmatprep.subr.mxu0 %v4008
        %4683 = vmatpush1.msra.mxu0 %v4007
        %4684 = vmatprep.subr.mxu0 %v4001
        %4685 = vmatpush1.msra.mxu0 %v4000
        %4686 = vmatprep.subr.mxu0 %v3994
        %4687 = vmatpush1.msra.mxu0 %v3993
        %4688 = vmatprep.subr.mxu0 %v3987
        %4689 = vmatpush1.msra.mxu0 %v3986
        %4690 = vmatprep.subr.mxu0 %v3980
        %4691 = vmatpush1.msra.mxu0 %v3979
        %4692 = vmatprep.subr.mxu0 %v3973
        %4693 = vmatpush1.msra.mxu0 %v3972
        %4694 = vmatprep.subr.mxu0 %v3966
        %4695 = vmatpush1.msra.mxu0 %v3965
        %4696 = vmatprep.subr.mxu0 %v3959
        %4697 = vmatpush1.msra.mxu0 %v3958
        %4698 = vmatprep.subr.mxu0 %v3952
        %4699 = vmatpush1.msra.mxu0 %v3951
        %4700 = vmatprep.subr.mxu0 %v3945
        %4701 = vmatpush1.msra.mxu0 %v3944
        %4702 = vmatprep.subr.mxu0 %v3938
        %4703 = vmatpush1.msra.mxu0 %v3937
        %4704 = vmatprep.subr.mxu0 %v3931
        %4705 = vmatpush1.msra.mxu0 %v3930
        %4706 = vmatprep.subr.mxu0 %v3924
        %4707 = vmatpush1.msra.mxu0 %v3923
        %4708 = vmatprep.subr.mxu0 %v3917
        %4709 = vmatpush1.msra.mxu0 %v3916
        %4710 = vmatprep.subr.mxu0 %v3910
        %4711 = vmatpush1.msra.mxu0 %v3909
        %4712 = vmatprep.subr.mxu0 %v3903
        %4713 = vmatpush1.msra.mxu0 %v3902
        %4714 = vmatprep.subr.mxu0 %v4120
        %4715 = vmatpush2.msra.mxu0 %v4119
        %4716 = vmatprep.subr.mxu0 %v4113
        %4717 = vmatpush2.msra.mxu0 %v4112
        %4718 = vmatprep.subr.mxu0 %v4106
        %4719 = vmatpush2.msra.mxu0 %v4105
        %4720 = vmatprep.subr.mxu0 %v4099
        %4721 = vmatpush2.msra.mxu0 %v4098
        %4722 = vmatprep.subr.mxu0 %v4092
        %4723 = vmatpush2.msra.mxu0 %v4091
        %4724 = vmatprep.subr.mxu0 %v4085
        %4725 = vmatpush2.msra.mxu0 %v4084
        %4726 = vmatprep.subr.mxu0 %v4078
        %4727 = vmatpush2.msra.mxu0 %v4077
        %4728 = vmatprep.subr.mxu0 %v4071
        %4729 = vmatpush2.msra.mxu0 %v4070
        %4730 = vmatprep.subr.mxu0 %v4064
        %4731 = vmatpush2.msra.mxu0 %v4063
        %4732 = vmatprep.subr.mxu0 %v4057
        %4733 = vmatpush2.msra.mxu0 %v4056
        %4734 = vmatprep.subr.mxu0 %v4050
        %4735 = vmatpush2.msra.mxu0 %v4049
        %4736 = vmatprep.subr.mxu0 %v4043
        %4737 = vmatpush2.msra.mxu0 %v4042
        %4738 = vmatprep.subr.mxu0 %v4036
        %4739 = vmatpush2.msra.mxu0 %v4035
        %4740 = vmatprep.subr.mxu0 %v4029
        %4741 = vmatpush2.msra.mxu0 %v4028
        %4742 = vmatprep.subr.mxu0 %v4022
        %4743 = vmatpush2.msra.mxu0 %v4021
        %4744 = vmatprep.subr.mxu0 %v4015
        %4745 = vmatpush2.msra.mxu0 %v4014
        %4746 = vmatprep.mubr.f32.mxu0 %v3161
        %4747 = vmatmul.mubr.f32.gmra.mxu0 %v3160
        %v4748 = vpop.f32.mrf.mxu0
        %v4749 = vadd.f32 %v4678, %v4748
        %v4750 = vpop.f32.mrf.mxu0
        %v4751 = vadd.f32 %v4680, %v4750
        %4752 = vdwg.mxu0
        %4753 = vmatprep.subr.mxu0 %v4232
        %4754 = vmatpush1.msra.mxu0 %v4231
        %4755 = vmatprep.subr.mxu0 %v4225
        %4756 = vmatpush1.msra.mxu0 %v4224
        %4757 = vmatprep.subr.mxu0 %v4218
        %4758 = vmatpush1.msra.mxu0 %v4217
        %4759 = vmatprep.subr.mxu0 %v4211
        %4760 = vmatpush1.msra.mxu0 %v4210
        %4761 = vmatprep.subr.mxu0 %v4204
        %4762 = vmatpush1.msra.mxu0 %v4203
        %4763 = vmatprep.subr.mxu0 %v4197
        %4764 = vmatpush1.msra.mxu0 %v4196
        %4765 = vmatprep.subr.mxu0 %v4190
        %4766 = vmatpush1.msra.mxu0 %v4189
        %4767 = vmatprep.subr.mxu0 %v4183
        %4768 = vmatpush1.msra.mxu0 %v4182
        %4769 = vmatprep.subr.mxu0 %v4176
        %4770 = vmatpush1.msra.mxu0 %v4175
        %4771 = vmatprep.subr.mxu0 %v4169
        %4772 = vmatpush1.msra.mxu0 %v4168
        %4773 = vmatprep.subr.mxu0 %v4162
        %4774 = vmatpush1.msra.mxu0 %v4161
        %4775 = vmatprep.subr.mxu0 %v4155
        %4776 = vmatpush1.msra.mxu0 %v4154
        %4777 = vmatprep.subr.mxu0 %v4148
        %4778 = vmatpush1.msra.mxu0 %v4147
        %4779 = vmatprep.subr.mxu0 %v4141
        %4780 = vmatpush1.msra.mxu0 %v4140
        %4781 = vmatprep.subr.mxu0 %v4134
        %4782 = vmatpush1.msra.mxu0 %v4133
        %4783 = vmatprep.subr.mxu0 %v4127
        %4784 = vmatpush1.msra.mxu0 %v4126
        %4785 = vmatprep.subr.mxu0 %v4344
        %4786 = vmatpush2.msra.mxu0 %v4343
        %4787 = vmatprep.subr.mxu0 %v4337
        %4788 = vmatpush2.msra.mxu0 %v4336
        %4789 = vmatprep.subr.mxu0 %v4330
        %4790 = vmatpush2.msra.mxu0 %v4329
        %4791 = vmatprep.subr.mxu0 %v4323
        %4792 = vmatpush2.msra.mxu0 %v4322
        %4793 = vmatprep.subr.mxu0 %v4316
        %4794 = vmatpush2.msra.mxu0 %v4315
        %4795 = vmatprep.subr.mxu0 %v4309
        %4796 = vmatpush2.msra.mxu0 %v4308
        %4797 = vmatprep.subr.mxu0 %v4302
        %4798 = vmatpush2.msra.mxu0 %v4301
        %4799 = vmatprep.subr.mxu0 %v4295
        %4800 = vmatpush2.msra.mxu0 %v4294
        %4801 = vmatprep.subr.mxu0 %v4288
        %4802 = vmatpush2.msra.mxu0 %v4287
        %4803 = vmatprep.subr.mxu0 %v4281
        %4804 = vmatpush2.msra.mxu0 %v4280
        %4805 = vmatprep.subr.mxu0 %v4274
        %4806 = vmatpush2.msra.mxu0 %v4273
        %4807 = vmatprep.subr.mxu0 %v4267
        %4808 = vmatpush2.msra.mxu0 %v4266
        %4809 = vmatprep.subr.mxu0 %v4260
        %4810 = vmatpush2.msra.mxu0 %v4259
        %4811 = vmatprep.subr.mxu0 %v4253
        %4812 = vmatpush2.msra.mxu0 %v4252
        %4813 = vmatprep.subr.mxu0 %v4246
        %4814 = vmatpush2.msra.mxu0 %v4245
        %4815 = vmatprep.subr.mxu0 %v4239
        %4816 = vmatpush2.msra.mxu0 %v4238
        %4817 = vmatprep.mubr.f32.mxu0 %v3163
        %4818 = vmatmul.mubr.f32.gmra.mxu0 %v3162
        %v4819 = vpop.f32.mrf.mxu0
        %v4820 = vadd.f32 %v4749, %v4819
        %v4821 = vpop.f32.mrf.mxu0
        %v4822 = vadd.f32 %v4751, %v4821
        %4823 = vdwg.mxu0
        %4824 = vmatprep.subr.mxu0 %v4456
        %4825 = vmatpush1.msra.mxu0 %v4455
        %4826 = vmatprep.subr.mxu0 %v4449
        %4827 = vmatpush1.msra.mxu0 %v4448
        %4828 = vmatprep.subr.mxu0 %v4442
        %4829 = vmatpush1.msra.mxu0 %v4441
        %4830 = vmatprep.subr.mxu0 %v4435
        %4831 = vmatpush1.msra.mxu0 %v4434
        %4832 = vmatprep.subr.mxu0 %v4428
        %4833 = vmatpush1.msra.mxu0 %v4427
        %4834 = vmatprep.subr.mxu0 %v4421
        %4835 = vmatpush1.msra.mxu0 %v4420
        %4836 = vmatprep.subr.mxu0 %v4414
        %4837 = vmatpush1.msra.mxu0 %v4413
        %4838 = vmatprep.subr.mxu0 %v4407
        %4839 = vmatpush1.msra.mxu0 %v4406
        %4840 = vmatprep.subr.mxu0 %v4400
        %4841 = vmatpush1.msra.mxu0 %v4399
        %4842 = vmatprep.subr.mxu0 %v4393
        %4843 = vmatpush1.msra.mxu0 %v4392
        %4844 = vmatprep.subr.mxu0 %v4386
        %4845 = vmatpush1.msra.mxu0 %v4385
        %4846 = vmatprep.subr.mxu0 %v4379
        %4847 = vmatpush1.msra.mxu0 %v4378
        %4848 = vmatprep.subr.mxu0 %v4372
        %4849 = vmatpush1.msra.mxu0 %v4371
        %4850 = vmatprep.subr.mxu0 %v4365
        %4851 = vmatpush1.msra.mxu0 %v4364
        %4852 = vmatprep.subr.mxu0 %v4358
        %4853 = vmatpush1.msra.mxu0 %v4357
        %4854 = vmatprep.subr.mxu0 %v4351
        %4855 = vmatpush1.msra.mxu0 %v4350
        %4856 = vmatprep.subr.mxu0 %v4568
        %4857 = vmatpush2.msra.mxu0 %v4567
        %4858 = vmatprep.subr.mxu0 %v4561
        %4859 = vmatpush2.msra.mxu0 %v4560
        %4860 = vmatprep.subr.mxu0 %v4554
        %4861 = vmatpush2.msra.mxu0 %v4553
        %4862 = vmatprep.subr.mxu0 %v4547
        %4863 = vmatpush2.msra.mxu0 %v4546
        %4864 = vmatprep.subr.mxu0 %v4540
        %4865 = vmatpush2.msra.mxu0 %v4539
        %4866 = vmatprep.subr.mxu0 %v4533
        %4867 = vmatpush2.msra.mxu0 %v4532
        %4868 = vmatprep.subr.mxu0 %v4526
        %4869 = vmatpush2.msra.mxu0 %v4525
        %4870 = vmatprep.subr.mxu0 %v4519
        %4871 = vmatpush2.msra.mxu0 %v4518
        %4872 = vmatprep.subr.mxu0 %v4512
        %4873 = vmatpush2.msra.mxu0 %v4511
        %4874 = vmatprep.subr.mxu0 %v4505
        %4875 = vmatpush2.msra.mxu0 %v4504
        %4876 = vmatprep.subr.mxu0 %v4498
        %4877 = vmatpush2.msra.mxu0 %v4497
        %4878 = vmatprep.subr.mxu0 %v4491
        %4879 = vmatpush2.msra.mxu0 %v4490
        %4880 = vmatprep.subr.mxu0 %v4484
        %4881 = vmatpush2.msra.mxu0 %v4483
        %4882 = vmatprep.subr.mxu0 %v4477
        %4883 = vmatpush2.msra.mxu0 %v4476
        %4884 = vmatprep.subr.mxu0 %v4470
        %4885 = vmatpush2.msra.mxu0 %v4469
        %4886 = vmatprep.subr.mxu0 %v4463
        %4887 = vmatpush2.msra.mxu0 %v4462
        %4888 = vmatprep.mubr.f32.mxu0 %v3165
        %4889 = vmatmul.mubr.f32.gmra.mxu0 %v3164
        %v4890 = vpop.f32.mrf.mxu0
        %v4891 = vadd.f32 %v4820, %v4890
        %v4892 = vpop.f32.mrf.mxu0
        %v4893 = vadd.f32 %v4822, %v4892
        %4894 = vdwg.mxu0
        %4895 = vmatprep.subr.mxu0 %v3786
        %4896 = vmatpush1.msra.mxu0 %v3785
        %4897 = vmatprep.subr.mxu0 %v3779
        %4898 = vmatpush1.msra.mxu0 %v3778
        %4899 = vmatprep.subr.mxu0 %v3772
        %4900 = vmatpush1.msra.mxu0 %v3771
        %4901 = vmatprep.subr.mxu0 %v3765
        %4902 = vmatpush1.msra.mxu0 %v3764
        %4903 = vmatprep.subr.mxu0 %v3758
        %4904 = vmatpush1.msra.mxu0 %v3757
        %4905 = vmatprep.subr.mxu0 %v3751
        %4906 = vmatpush1.msra.mxu0 %v3750
        %4907 = vmatprep.subr.mxu0 %v3744
        %4908 = vmatpush1.msra.mxu0 %v3743
        %4909 = vmatprep.subr.mxu0 %v3737
        %4910 = vmatpush1.msra.mxu0 %v3736
        %4911 = vmatprep.subr.mxu0 %v3730
        %4912 = vmatpush1.msra.mxu0 %v3729
        %4913 = vmatprep.subr.mxu0 %v3723
        %4914 = vmatpush1.msra.mxu0 %v3722
        %4915 = vmatprep.subr.mxu0 %v3716
        %4916 = vmatpush1.msra.mxu0 %v3715
        %4917 = vmatprep.subr.mxu0 %v3709
        %4918 = vmatpush1.msra.mxu0 %v3708
        %4919 = vmatprep.subr.mxu0 %v3702
        %4920 = vmatpush1.msra.mxu0 %v3701
        %4921 = vmatprep.subr.mxu0 %v3695
        %4922 = vmatpush1.msra.mxu0 %v3694
        %4923 = vmatprep.subr.mxu0 %v3688
        %4924 = vmatpush1.msra.mxu0 %v3687
        %4925 = vmatprep.subr.mxu0 %v3681
        %4926 = vmatpush1.msra.mxu0 %v3680
        %4927 = vmatprep.subr.mxu0 %v3898
        %4928 = vmatpush2.msra.mxu0 %v3897
        %4929 = vmatprep.subr.mxu0 %v3891
        %4930 = vmatpush2.msra.mxu0 %v3890
        %4931 = vmatprep.subr.mxu0 %v3884
        %4932 = vmatpush2.msra.mxu0 %v3883
        %4933 = vmatprep.subr.mxu0 %v3877
        %4934 = vmatpush2.msra.mxu0 %v3876
        %4935 = vmatprep.subr.mxu0 %v3870
        %4936 = vmatpush2.msra.mxu0 %v3869
        %4937 = vmatprep.subr.mxu0 %v3863
        %4938 = vmatpush2.msra.mxu0 %v3862
        %4939 = vmatprep.subr.mxu0 %v3856
        %4940 = vmatpush2.msra.mxu0 %v3855
        %4941 = vmatprep.subr.mxu0 %v3849
        %4942 = vmatpush2.msra.mxu0 %v3848
        %4943 = vmatprep.subr.mxu0 %v3842
        %4944 = vmatpush2.msra.mxu0 %v3841
        %4945 = vmatprep.subr.mxu0 %v3835
        %4946 = vmatpush2.msra.mxu0 %v3834
        %4947 = vmatprep.subr.mxu0 %v3828
        %4948 = vmatpush2.msra.mxu0 %v3827
        %4949 = vmatprep.subr.mxu0 %v3821
        %4950 = vmatpush2.msra.mxu0 %v3820
        %4951 = vmatprep.subr.mxu0 %v3814
        %4952 = vmatpush2.msra.mxu0 %v3813
        %4953 = vmatprep.subr.mxu0 %v3807
        %4954 = vmatpush2.msra.mxu0 %v3806
        %4955 = vmatprep.subr.mxu0 %v3800
        %4956 = vmatpush2.msra.mxu0 %v3799
        %4957 = vmatprep.subr.mxu0 %v3793
        %4958 = vmatpush2.msra.mxu0 %v3792
        %4959 = vmatprep.mubr.f32.mxu0 %v3159
        %4960 = vmatmul.mubr.f32.gmra.mxu0 %v3158
        %v4961 = vpop.f32.mrf.mxu0
        %v4962 = vadd.f32 %v4587, %v4961
        %v4963 = vpop.f32.mrf.mxu0
        %v4964 = vadd.f32 %v4591, %v4963
        %4965 = vdwg.mxu0
        %4966 = vmatprep.subr.mxu0 %v4010
        %4967 = vmatpush1.msra.mxu0 %v4009
        %4968 = vmatprep.subr.mxu0 %v4003
        %4969 = vmatpush1.msra.mxu0 %v4002
        %4970 = vmatprep.subr.mxu0 %v3996
        %4971 = vmatpush1.msra.mxu0 %v3995
        %4972 = vmatprep.subr.mxu0 %v3989
        %4973 = vmatpush1.msra.mxu0 %v3988
        %4974 = vmatprep.subr.mxu0 %v3982
        %4975 = vmatpush1.msra.mxu0 %v3981
        %4976 = vmatprep.subr.mxu0 %v3975
        %4977 = vmatpush1.msra.mxu0 %v3974
        %4978 = vmatprep.subr.mxu0 %v3968
        %4979 = vmatpush1.msra.mxu0 %v3967
        %4980 = vmatprep.subr.mxu0 %v3961
        %4981 = vmatpush1.msra.mxu0 %v3960
        %4982 = vmatprep.subr.mxu0 %v3954
        %4983 = vmatpush1.msra.mxu0 %v3953
        %4984 = vmatprep.subr.mxu0 %v3947
        %4985 = vmatpush1.msra.mxu0 %v3946
        %4986 = vmatprep.subr.mxu0 %v3940
        %4987 = vmatpush1.msra.mxu0 %v3939
        %4988 = vmatprep.subr.mxu0 %v3933
        %4989 = vmatpush1.msra.mxu0 %v3932
        %4990 = vmatprep.subr.mxu0 %v3926
        %4991 = vmatpush1.msra.mxu0 %v3925
        %4992 = vmatprep.subr.mxu0 %v3919
        %4993 = vmatpush1.msra.mxu0 %v3918
        %4994 = vmatprep.subr.mxu0 %v3912
        %4995 = vmatpush1.msra.mxu0 %v3911
        %4996 = vmatprep.subr.mxu0 %v3905
        %4997 = vmatpush1.msra.mxu0 %v3904
        %4998 = vmatprep.subr.mxu0 %v4122
        %4999 = vmatpush2.msra.mxu0 %v4121
        %5000 = vmatprep.subr.mxu0 %v4115
        %5001 = vmatpush2.msra.mxu0 %v4114
        %5002 = vmatprep.subr.mxu0 %v4108
        %5003 = vmatpush2.msra.mxu0 %v4107
        %5004 = vmatprep.subr.mxu0 %v4101
        %5005 = vmatpush2.msra.mxu0 %v4100
        %5006 = vmatprep.subr.mxu0 %v4094
        %5007 = vmatpush2.msra.mxu0 %v4093
        %5008 = vmatprep.subr.mxu0 %v4087
        %5009 = vmatpush2.msra.mxu0 %v4086
        %5010 = vmatprep.subr.mxu0 %v4080
        %5011 = vmatpush2.msra.mxu0 %v4079
        %5012 = vmatprep.subr.mxu0 %v4073
        %5013 = vmatpush2.msra.mxu0 %v4072
        %5014 = vmatprep.subr.mxu0 %v4066
        %5015 = vmatpush2.msra.mxu0 %v4065
        %5016 = vmatprep.subr.mxu0 %v4059
        %5017 = vmatpush2.msra.mxu0 %v4058
        %5018 = vmatprep.subr.mxu0 %v4052
        %5019 = vmatpush2.msra.mxu0 %v4051
        %5020 = vmatprep.subr.mxu0 %v4045
        %5021 = vmatpush2.msra.mxu0 %v4044
        %5022 = vmatprep.subr.mxu0 %v4038
        %5023 = vmatpush2.msra.mxu0 %v4037
        %5024 = vmatprep.subr.mxu0 %v4031
        %5025 = vmatpush2.msra.mxu0 %v4030
        %5026 = vmatprep.subr.mxu0 %v4024
        %5027 = vmatpush2.msra.mxu0 %v4023
        %5028 = vmatprep.subr.mxu0 %v4017
        %5029 = vmatpush2.msra.mxu0 %v4016
        %5030 = vmatprep.mubr.f32.mxu0 %v3161
        %5031 = vmatmul.mubr.f32.gmra.mxu0 %v3160
        %v5032 = vpop.f32.mrf.mxu0
        %v5033 = vadd.f32 %v4962, %v5032
        %v5034 = vpop.f32.mrf.mxu0
        %v5035 = vadd.f32 %v4964, %v5034
        %5036 = vdwg.mxu0
        %5037 = vmatprep.subr.mxu0 %v4234
        %5038 = vmatpush1.msra.mxu0 %v4233
        %5039 = vmatprep.subr.mxu0 %v4227
        %5040 = vmatpush1.msra.mxu0 %v4226
        %5041 = vmatprep.subr.mxu0 %v4220
        %5042 = vmatpush1.msra.mxu0 %v4219
        %5043 = vmatprep.subr.mxu0 %v4213
        %5044 = vmatpush1.msra.mxu0 %v4212
        %5045 = vmatprep.subr.mxu0 %v4206
        %5046 = vmatpush1.msra.mxu0 %v4205
        %5047 = vmatprep.subr.mxu0 %v4199
        %5048 = vmatpush1.msra.mxu0 %v4198
        %5049 = vmatprep.subr.mxu0 %v4192
        %5050 = vmatpush1.msra.mxu0 %v4191
        %5051 = vmatprep.subr.mxu0 %v4185
        %5052 = vmatpush1.msra.mxu0 %v4184
        %5053 = vmatprep.subr.mxu0 %v4178
        %5054 = vmatpush1.msra.mxu0 %v4177
        %5055 = vmatprep.subr.mxu0 %v4171
        %5056 = vmatpush1.msra.mxu0 %v4170
        %5057 = vmatprep.subr.mxu0 %v4164
        %5058 = vmatpush1.msra.mxu0 %v4163
        %5059 = vmatprep.subr.mxu0 %v4157
        %5060 = vmatpush1.msra.mxu0 %v4156
        %5061 = vmatprep.subr.mxu0 %v4150
        %5062 = vmatpush1.msra.mxu0 %v4149
        %5063 = vmatprep.subr.mxu0 %v4143
        %5064 = vmatpush1.msra.mxu0 %v4142
        %5065 = vmatprep.subr.mxu0 %v4136
        %5066 = vmatpush1.msra.mxu0 %v4135
        %5067 = vmatprep.subr.mxu0 %v4129
        %5068 = vmatpush1.msra.mxu0 %v4128
        %5069 = vmatprep.subr.mxu0 %v4346
        %5070 = vmatpush2.msra.mxu0 %v4345
        %5071 = vmatprep.subr.mxu0 %v4339
        %5072 = vmatpush2.msra.mxu0 %v4338
        %5073 = vmatprep.subr.mxu0 %v4332
        %5074 = vmatpush2.msra.mxu0 %v4331
        %5075 = vmatprep.subr.mxu0 %v4325
        %5076 = vmatpush2.msra.mxu0 %v4324
        %5077 = vmatprep.subr.mxu0 %v4318
        %5078 = vmatpush2.msra.mxu0 %v4317
        %5079 = vmatprep.subr.mxu0 %v4311
        %5080 = vmatpush2.msra.mxu0 %v4310
        %5081 = vmatprep.subr.mxu0 %v4304
        %5082 = vmatpush2.msra.mxu0 %v4303
        %5083 = vmatprep.subr.mxu0 %v4297
        %5084 = vmatpush2.msra.mxu0 %v4296
        %5085 = vmatprep.subr.mxu0 %v4290
        %5086 = vmatpush2.msra.mxu0 %v4289
        %5087 = vmatprep.subr.mxu0 %v4283
        %5088 = vmatpush2.msra.mxu0 %v4282
        %5089 = vmatprep.subr.mxu0 %v4276
        %5090 = vmatpush2.msra.mxu0 %v4275
        %5091 = vmatprep.subr.mxu0 %v4269
        %5092 = vmatpush2.msra.mxu0 %v4268
        %5093 = vmatprep.subr.mxu0 %v4262
        %5094 = vmatpush2.msra.mxu0 %v4261
        %5095 = vmatprep.subr.mxu0 %v4255
        %5096 = vmatpush2.msra.mxu0 %v4254
        %5097 = vmatprep.subr.mxu0 %v4248
        %5098 = vmatpush2.msra.mxu0 %v4247
        %5099 = vmatprep.subr.mxu0 %v4241
        %5100 = vmatpush2.msra.mxu0 %v4240
        %5101 = vmatprep.mubr.f32.mxu0 %v3163
        %5102 = vmatmul.mubr.f32.gmra.mxu0 %v3162
        %v5103 = vpop.f32.mrf.mxu0
        %v5104 = vadd.f32 %v5033, %v5103
        %v5105 = vpop.f32.mrf.mxu0
        %v5106 = vadd.f32 %v5035, %v5105
        %5107 = vdwg.mxu0
        %5108 = vmatprep.subr.mxu0 %v4458
        %5109 = vmatpush1.msra.mxu0 %v4457
        %5110 = vmatprep.subr.mxu0 %v4451
        %5111 = vmatpush1.msra.mxu0 %v4450
        %5112 = vmatprep.subr.mxu0 %v4444
        %5113 = vmatpush1.msra.mxu0 %v4443
        %5114 = vmatprep.subr.mxu0 %v4437
        %5115 = vmatpush1.msra.mxu0 %v4436
        %5116 = vmatprep.subr.mxu0 %v4430
        %5117 = vmatpush1.msra.mxu0 %v4429
        %5118 = vmatprep.subr.mxu0 %v4423
        %5119 = vmatpush1.msra.mxu0 %v4422
        %5120 = vmatprep.subr.mxu0 %v4416
        %5121 = vmatpush1.msra.mxu0 %v4415
        %5122 = vmatprep.subr.mxu0 %v4409
        %5123 = vmatpush1.msra.mxu0 %v4408
        %5124 = vmatprep.subr.mxu0 %v4402
        %5125 = vmatpush1.msra.mxu0 %v4401
        %5126 = vmatprep.subr.mxu0 %v4395
        %5127 = vmatpush1.msra.mxu0 %v4394
        %5128 = vmatprep.subr.mxu0 %v4388
        %5129 = vmatpush1.msra.mxu0 %v4387
        %5130 = vmatprep.subr.mxu0 %v4381
        %5131 = vmatpush1.msra.mxu0 %v4380
        %5132 = vmatprep.subr.mxu0 %v4374
        %5133 = vmatpush1.msra.mxu0 %v4373
        %5134 = vmatprep.subr.mxu0 %v4367
        %5135 = vmatpush1.msra.mxu0 %v4366
        %5136 = vmatprep.subr.mxu0 %v4360
        %5137 = vmatpush1.msra.mxu0 %v4359
        %5138 = vmatprep.subr.mxu0 %v4353
        %5139 = vmatpush1.msra.mxu0 %v4352
        %5140 = vmatprep.subr.mxu0 %v4570
        %5141 = vmatpush2.msra.mxu0 %v4569
        %5142 = vmatprep.subr.mxu0 %v4563
        %5143 = vmatpush2.msra.mxu0 %v4562
        %5144 = vmatprep.subr.mxu0 %v4556
        %5145 = vmatpush2.msra.mxu0 %v4555
        %5146 = vmatprep.subr.mxu0 %v4549
        %5147 = vmatpush2.msra.mxu0 %v4548
        %5148 = vmatprep.subr.mxu0 %v4542
        %5149 = vmatpush2.msra.mxu0 %v4541
        %5150 = vmatprep.subr.mxu0 %v4535
        %5151 = vmatpush2.msra.mxu0 %v4534
        %5152 = vmatprep.subr.mxu0 %v4528
        %5153 = vmatpush2.msra.mxu0 %v4527
        %5154 = vmatprep.subr.mxu0 %v4521
        %5155 = vmatpush2.msra.mxu0 %v4520
        %5156 = vmatprep.subr.mxu0 %v4514
        %5157 = vmatpush2.msra.mxu0 %v4513
        %5158 = vmatprep.subr.mxu0 %v4507
        %5159 = vmatpush2.msra.mxu0 %v4506
        %5160 = vmatprep.subr.mxu0 %v4500
        %5161 = vmatpush2.msra.mxu0 %v4499
        %5162 = vmatprep.subr.mxu0 %v4493
        %5163 = vmatpush2.msra.mxu0 %v4492
        %5164 = vmatprep.subr.mxu0 %v4486
        %5165 = vmatpush2.msra.mxu0 %v4485
        %5166 = vmatprep.subr.mxu0 %v4479
        %5167 = vmatpush2.msra.mxu0 %v4478
        %5168 = vmatprep.subr.mxu0 %v4472
        %5169 = vmatpush2.msra.mxu0 %v4471
        %5170 = vmatprep.subr.mxu0 %v4465
        %5171 = vmatpush2.msra.mxu0 %v4464
        %5172 = vmatprep.mubr.f32.mxu0 %v3165
        %5173 = vmatmul.mubr.f32.gmra.mxu0 %v3164
        %v5174 = vpop.f32.mrf.mxu0
        %v5175 = vadd.f32 %v5104, %v5174
        %v5176 = vpop.f32.mrf.mxu0
        %v5177 = vadd.f32 %v5106, %v5176
        %5178 = vdwg.mxu0
        %5179 = vmatprep.subr.mxu0 %v3788
        %5180 = vmatpush1.msra.mxu0 %v3787
        %5181 = vmatprep.subr.mxu0 %v3781
        %5182 = vmatpush1.msra.mxu0 %v3780
        %5183 = vmatprep.subr.mxu0 %v3774
        %5184 = vmatpush1.msra.mxu0 %v3773
        %5185 = vmatprep.subr.mxu0 %v3767
        %5186 = vmatpush1.msra.mxu0 %v3766
        %5187 = vmatprep.subr.mxu0 %v3760
        %5188 = vmatpush1.msra.mxu0 %v3759
        %5189 = vmatprep.subr.mxu0 %v3753
        %5190 = vmatpush1.msra.mxu0 %v3752
        %5191 = vmatprep.subr.mxu0 %v3746
        %5192 = vmatpush1.msra.mxu0 %v3745
        %5193 = vmatprep.subr.mxu0 %v3739
        %5194 = vmatpush1.msra.mxu0 %v3738
        %5195 = vmatprep.subr.mxu0 %v3732
        %5196 = vmatpush1.msra.mxu0 %v3731
        %5197 = vmatprep.subr.mxu0 %v3725
        %5198 = vmatpush1.msra.mxu0 %v3724
        %5199 = vmatprep.subr.mxu0 %v3718
        %5200 = vmatpush1.msra.mxu0 %v3717
        %5201 = vmatprep.subr.mxu0 %v3711
        %5202 = vmatpush1.msra.mxu0 %v3710
        %5203 = vmatprep.subr.mxu0 %v3704
        %5204 = vmatpush1.msra.mxu0 %v3703
        %5205 = vmatprep.subr.mxu0 %v3697
        %5206 = vmatpush1.msra.mxu0 %v3696
        %5207 = vmatprep.subr.mxu0 %v3690
        %5208 = vmatpush1.msra.mxu0 %v3689
        %5209 = vmatprep.subr.mxu0 %v3683
        %5210 = vmatpush1.msra.mxu0 %v3682
        %5211 = vmatprep.subr.mxu0 %v3900
        %5212 = vmatpush2.msra.mxu0 %v3899
        %5213 = vmatprep.subr.mxu0 %v3893
        %5214 = vmatpush2.msra.mxu0 %v3892
        %5215 = vmatprep.subr.mxu0 %v3886
        %5216 = vmatpush2.msra.mxu0 %v3885
        %5217 = vmatprep.subr.mxu0 %v3879
        %5218 = vmatpush2.msra.mxu0 %v3878
        %5219 = vmatprep.subr.mxu0 %v3872
        %5220 = vmatpush2.msra.mxu0 %v3871
        %5221 = vmatprep.subr.mxu0 %v3865
        %5222 = vmatpush2.msra.mxu0 %v3864
        %5223 = vmatprep.subr.mxu0 %v3858
        %5224 = vmatpush2.msra.mxu0 %v3857
        %5225 = vmatprep.subr.mxu0 %v3851
        %5226 = vmatpush2.msra.mxu0 %v3850
        %5227 = vmatprep.subr.mxu0 %v3844
        %5228 = vmatpush2.msra.mxu0 %v3843
        %5229 = vmatprep.subr.mxu0 %v3837
        %5230 = vmatpush2.msra.mxu0 %v3836
        %5231 = vmatprep.subr.mxu0 %v3830
        %5232 = vmatpush2.msra.mxu0 %v3829
        %5233 = vmatprep.subr.mxu0 %v3823
        %5234 = vmatpush2.msra.mxu0 %v3822
        %5235 = vmatprep.subr.mxu0 %v3816
        %5236 = vmatpush2.msra.mxu0 %v3815
        %5237 = vmatprep.subr.mxu0 %v3809
        %5238 = vmatpush2.msra.mxu0 %v3808
        %5239 = vmatprep.subr.mxu0 %v3802
        %5240 = vmatpush2.msra.mxu0 %v3801
        %5241 = vmatprep.subr.mxu0 %v3795
        %5242 = vmatpush2.msra.mxu0 %v3794
        %5243 = vmatprep.mubr.f32.mxu0 %v3159
        %5244 = vmatmul.mubr.f32.gmra.mxu0 %v3158
        %v5245 = vpop.f32.mrf.mxu0
        %v5246 = vadd.f32 %v4595, %v5245
        %v5247 = vpop.f32.mrf.mxu0
        %v5248 = vadd.f32 %v4599, %v5247
        %5249 = vdwg.mxu0
        %5250 = vmatprep.subr.mxu0 %v4012
        %5251 = vmatpush1.msra.mxu0 %v4011
        %5252 = vmatprep.subr.mxu0 %v4005
        %5253 = vmatpush1.msra.mxu0 %v4004
        %5254 = vmatprep.subr.mxu0 %v3998
        %5255 = vmatpush1.msra.mxu0 %v3997
        %5256 = vmatprep.subr.mxu0 %v3991
        %5257 = vmatpush1.msra.mxu0 %v3990
        %5258 = vmatprep.subr.mxu0 %v3984
        %5259 = vmatpush1.msra.mxu0 %v3983
        %5260 = vmatprep.subr.mxu0 %v3977
        %5261 = vmatpush1.msra.mxu0 %v3976
        %5262 = vmatprep.subr.mxu0 %v3970
        %5263 = vmatpush1.msra.mxu0 %v3969
        %5264 = vmatprep.subr.mxu0 %v3963
        %5265 = vmatpush1.msra.mxu0 %v3962
        %5266 = vmatprep.subr.mxu0 %v3956
        %5267 = vmatpush1.msra.mxu0 %v3955
        %5268 = vmatprep.subr.mxu0 %v3949
        %5269 = vmatpush1.msra.mxu0 %v3948
        %5270 = vmatprep.subr.mxu0 %v3942
        %5271 = vmatpush1.msra.mxu0 %v3941
        %5272 = vmatprep.subr.mxu0 %v3935
        %5273 = vmatpush1.msra.mxu0 %v3934
        %5274 = vmatprep.subr.mxu0 %v3928
        %5275 = vmatpush1.msra.mxu0 %v3927
        %5276 = vmatprep.subr.mxu0 %v3921
        %5277 = vmatpush1.msra.mxu0 %v3920
        %5278 = vmatprep.subr.mxu0 %v3914
        %5279 = vmatpush1.msra.mxu0 %v3913
        %5280 = vmatprep.subr.mxu0 %v3907
        %5281 = vmatpush1.msra.mxu0 %v3906
        %5282 = vmatprep.subr.mxu0 %v4124
        %5283 = vmatpush2.msra.mxu0 %v4123
        %5284 = vmatprep.subr.mxu0 %v4117
        %5285 = vmatpush2.msra.mxu0 %v4116
        %5286 = vmatprep.subr.mxu0 %v4110
        %5287 = vmatpush2.msra.mxu0 %v4109
        %5288 = vmatprep.subr.mxu0 %v4103
        %5289 = vmatpush2.msra.mxu0 %v4102
        %5290 = vmatprep.subr.mxu0 %v4096
        %5291 = vmatpush2.msra.mxu0 %v4095
        %5292 = vmatprep.subr.mxu0 %v4089
        %5293 = vmatpush2.msra.mxu0 %v4088
        %5294 = vmatprep.subr.mxu0 %v4082
        %5295 = vmatpush2.msra.mxu0 %v4081
        %5296 = vmatprep.subr.mxu0 %v4075
        %5297 = vmatpush2.msra.mxu0 %v4074
        %5298 = vmatprep.subr.mxu0 %v4068
        %5299 = vmatpush2.msra.mxu0 %v4067
        %5300 = vmatprep.subr.mxu0 %v4061
        %5301 = vmatpush2.msra.mxu0 %v4060
        %5302 = vmatprep.subr.mxu0 %v4054
        %5303 = vmatpush2.msra.mxu0 %v4053
        %5304 = vmatprep.subr.mxu0 %v4047
        %5305 = vmatpush2.msra.mxu0 %v4046
        %5306 = vmatprep.subr.mxu0 %v4040
        %5307 = vmatpush2.msra.mxu0 %v4039
        %5308 = vmatprep.subr.mxu0 %v4033
        %5309 = vmatpush2.msra.mxu0 %v4032
        %5310 = vmatprep.subr.mxu0 %v4026
        %5311 = vmatpush2.msra.mxu0 %v4025
        %5312 = vmatprep.subr.mxu0 %v4019
        %5313 = vmatpush2.msra.mxu0 %v4018
        %5314 = vmatprep.mubr.f32.mxu0 %v3161
        %5315 = vmatmul.mubr.f32.gmra.mxu0 %v3160
        %v5316 = vpop.f32.mrf.mxu0
        %v5317 = vadd.f32 %v5246, %v5316
        %v5318 = vpop.f32.mrf.mxu0
        %v5319 = vadd.f32 %v5248, %v5318
        %5320 = vdwg.mxu0
        %5321 = vmatprep.subr.mxu0 %v4236
        %5322 = vmatpush1.msra.mxu0 %v4235
        %5323 = vmatprep.subr.mxu0 %v4229
        %5324 = vmatpush1.msra.mxu0 %v4228
        %5325 = vmatprep.subr.mxu0 %v4222
        %5326 = vmatpush1.msra.mxu0 %v4221
        %5327 = vmatprep.subr.mxu0 %v4215
        %5328 = vmatpush1.msra.mxu0 %v4214
        %5329 = vmatprep.subr.mxu0 %v4208
        %5330 = vmatpush1.msra.mxu0 %v4207
        %5331 = vmatprep.subr.mxu0 %v4201
        %5332 = vmatpush1.msra.mxu0 %v4200
        %5333 = vmatprep.subr.mxu0 %v4194
        %5334 = vmatpush1.msra.mxu0 %v4193
        %5335 = vmatprep.subr.mxu0 %v4187
        %5336 = vmatpush1.msra.mxu0 %v4186
        %5337 = vmatprep.subr.mxu0 %v4180
        %5338 = vmatpush1.msra.mxu0 %v4179
        %5339 = vmatprep.subr.mxu0 %v4173
        %5340 = vmatpush1.msra.mxu0 %v4172
        %5341 = vmatprep.subr.mxu0 %v4166
        %5342 = vmatpush1.msra.mxu0 %v4165
        %5343 = vmatprep.subr.mxu0 %v4159
        %5344 = vmatpush1.msra.mxu0 %v4158
        %5345 = vmatprep.subr.mxu0 %v4152
        %5346 = vmatpush1.msra.mxu0 %v4151
        %5347 = vmatprep.subr.mxu0 %v4145
        %5348 = vmatpush1.msra.mxu0 %v4144
        %5349 = vmatprep.subr.mxu0 %v4138
        %5350 = vmatpush1.msra.mxu0 %v4137
        %5351 = vmatprep.subr.mxu0 %v4131
        %5352 = vmatpush1.msra.mxu0 %v4130
        %5353 = vmatprep.subr.mxu0 %v4348
        %5354 = vmatpush2.msra.mxu0 %v4347
        %5355 = vmatprep.subr.mxu0 %v4341
        %5356 = vmatpush2.msra.mxu0 %v4340
        %5357 = vmatprep.subr.mxu0 %v4334
        %5358 = vmatpush2.msra.mxu0 %v4333
        %5359 = vmatprep.subr.mxu0 %v4327
        %5360 = vmatpush2.msra.mxu0 %v4326
        %5361 = vmatprep.subr.mxu0 %v4320
        %5362 = vmatpush2.msra.mxu0 %v4319
        %5363 = vmatprep.subr.mxu0 %v4313
        %5364 = vmatpush2.msra.mxu0 %v4312
        %5365 = vmatprep.subr.mxu0 %v4306
        %5366 = vmatpush2.msra.mxu0 %v4305
        %5367 = vmatprep.subr.mxu0 %v4299
        %5368 = vmatpush2.msra.mxu0 %v4298
        %5369 = vmatprep.subr.mxu0 %v4292
        %5370 = vmatpush2.msra.mxu0 %v4291
        %5371 = vmatprep.subr.mxu0 %v4285
        %5372 = vmatpush2.msra.mxu0 %v4284
        %5373 = vmatprep.subr.mxu0 %v4278
        %5374 = vmatpush2.msra.mxu0 %v4277
        %5375 = vmatprep.subr.mxu0 %v4271
        %5376 = vmatpush2.msra.mxu0 %v4270
        %5377 = vmatprep.subr.mxu0 %v4264
        %5378 = vmatpush2.msra.mxu0 %v4263
        %5379 = vmatprep.subr.mxu0 %v4257
        %5380 = vmatpush2.msra.mxu0 %v4256
        %5381 = vmatprep.subr.mxu0 %v4250
        %5382 = vmatpush2.msra.mxu0 %v4249
        %5383 = vmatprep.subr.mxu0 %v4243
        %5384 = vmatpush2.msra.mxu0 %v4242
        %5385 = vmatprep.mubr.f32.mxu0 %v3163
        %5386 = vmatmul.mubr.f32.gmra.mxu0 %v3162
        %v5387 = vpop.f32.mrf.mxu0
        %v5388 = vadd.f32 %v5317, %v5387
        %v5389 = vpop.f32.mrf.mxu0
        %v5390 = vadd.f32 %v5319, %v5389
        %5391 = vdwg.mxu0
        %5392 = vmatprep.subr.mxu0 %v4460
        %5393 = vmatpush1.msra.mxu0 %v4459
        %5394 = vmatprep.subr.mxu0 %v4453
        %5395 = vmatpush1.msra.mxu0 %v4452
        %5396 = vmatprep.subr.mxu0 %v4446
        %5397 = vmatpush1.msra.mxu0 %v4445
        %5398 = vmatprep.subr.mxu0 %v4439
        %5399 = vmatpush1.msra.mxu0 %v4438
        %5400 = vmatprep.subr.mxu0 %v4432
        %5401 = vmatpush1.msra.mxu0 %v4431
        %5402 = vmatprep.subr.mxu0 %v4425
        %5403 = vmatpush1.msra.mxu0 %v4424
        %5404 = vmatprep.subr.mxu0 %v4418
        %5405 = vmatpush1.msra.mxu0 %v4417
        %5406 = vmatprep.subr.mxu0 %v4411
        %5407 = vmatpush1.msra.mxu0 %v4410
        %5408 = vmatprep.subr.mxu0 %v4404
        %5409 = vmatpush1.msra.mxu0 %v4403
        %5410 = vmatprep.subr.mxu0 %v4397
        %5411 = vmatpush1.msra.mxu0 %v4396
        %5412 = vmatprep.subr.mxu0 %v4390
        %5413 = vmatpush1.msra.mxu0 %v4389
        %5414 = vmatprep.subr.mxu0 %v4383
        %5415 = vmatpush1.msra.mxu0 %v4382
        %5416 = vmatprep.subr.mxu0 %v4376
        %5417 = vmatpush1.msra.mxu0 %v4375
        %5418 = vmatprep.subr.mxu0 %v4369
        %5419 = vmatpush1.msra.mxu0 %v4368
        %5420 = vmatprep.subr.mxu0 %v4362
        %5421 = vmatpush1.msra.mxu0 %v4361
        %5422 = vmatprep.subr.mxu0 %v4355
        %5423 = vmatpush1.msra.mxu0 %v4354
        %5424 = vmatprep.subr.mxu0 %v4572
        %5425 = vmatpush2.msra.mxu0 %v4571
        %5426 = vmatprep.subr.mxu0 %v4565
        %5427 = vmatpush2.msra.mxu0 %v4564
        %5428 = vmatprep.subr.mxu0 %v4558
        %5429 = vmatpush2.msra.mxu0 %v4557
        %5430 = vmatprep.subr.mxu0 %v4551
        %5431 = vmatpush2.msra.mxu0 %v4550
        %5432 = vmatprep.subr.mxu0 %v4544
        %5433 = vmatpush2.msra.mxu0 %v4543
        %5434 = vmatprep.subr.mxu0 %v4537
        %5435 = vmatpush2.msra.mxu0 %v4536
        %5436 = vmatprep.subr.mxu0 %v4530
        %5437 = vmatpush2.msra.mxu0 %v4529
        %5438 = vmatprep.subr.mxu0 %v4523
        %5439 = vmatpush2.msra.mxu0 %v4522
        %5440 = vmatprep.subr.mxu0 %v4516
        %5441 = vmatpush2.msra.mxu0 %v4515
        %5442 = vmatprep.subr.mxu0 %v4509
        %5443 = vmatpush2.msra.mxu0 %v4508
        %5444 = vmatprep.subr.mxu0 %v4502
        %5445 = vmatpush2.msra.mxu0 %v4501
        %5446 = vmatprep.subr.mxu0 %v4495
        %5447 = vmatpush2.msra.mxu0 %v4494
        %5448 = vmatprep.subr.mxu0 %v4488
        %5449 = vmatpush2.msra.mxu0 %v4487
        %5450 = vmatprep.subr.mxu0 %v4481
        %5451 = vmatpush2.msra.mxu0 %v4480
        %5452 = vmatprep.subr.mxu0 %v4474
        %5453 = vmatpush2.msra.mxu0 %v4473
        %5454 = vmatprep.subr.mxu0 %v4467
        %5455 = vmatpush2.msra.mxu0 %v4466
        %5456 = vmatprep.mubr.f32.mxu0 %v3165
        %5457 = vmatmul.mubr.f32.gmra.mxu0 %v3164
        %v5458 = vpop.f32.mrf.mxu0
        %v5459 = vadd.f32 %v5388, %v5458
        %v5460 = vpop.f32.mrf.mxu0
        %v5461 = vadd.f32 %v5390, %v5460
        %5462 = vdwg.mxu0
        %5463 = vmatprep.subr.mxu0 0.0
        %5464 = vmatpush1.msra.mxu0 %v3789
        %5465 = vmatprep.subr.mxu0 0.0
        %5466 = vmatpush1.msra.mxu0 %v3782
        %5467 = vmatprep.subr.mxu0 0.0
        %5468 = vmatpush1.msra.mxu0 %v3775
        %5469 = vmatprep.subr.mxu0 0.0
        %5470 = vmatpush1.msra.mxu0 %v3768
        %5471 = vmatprep.subr.mxu0 0.0
        %5472 = vmatpush1.msra.mxu0 %v3761
        %5473 = vmatprep.subr.mxu0 0.0
        %5474 = vmatpush1.msra.mxu0 %v3754
        %5475 = vmatprep.subr.mxu0 0.0
        %5476 = vmatpush1.msra.mxu0 %v3747
        %5477 = vmatprep.subr.mxu0 0.0
        %5478 = vmatpush1.msra.mxu0 %v3740
        %5479 = vmatprep.subr.mxu0 0.0
        %5480 = vmatpush1.msra.mxu0 %v3733
        %5481 = vmatprep.subr.mxu0 0.0
        %5482 = vmatpush1.msra.mxu0 %v3726
        %5483 = vmatprep.subr.mxu0 0.0
        %5484 = vmatpush1.msra.mxu0 %v3719
        %5485 = vmatprep.subr.mxu0 0.0
        %5486 = vmatpush1.msra.mxu0 %v3712
        %5487 = vmatprep.subr.mxu0 0.0
        %5488 = vmatpush1.msra.mxu0 %v3705
        %5489 = vmatprep.subr.mxu0 0.0
        %5490 = vmatpush1.msra.mxu0 %v3698
        %5491 = vmatprep.subr.mxu0 0.0
        %5492 = vmatpush1.msra.mxu0 %v3691
        %5493 = vmatprep.subr.mxu0 0.0
        %5494 = vmatpush1.msra.mxu0 %v3684
        %5495 = vmatprep.subr.mxu0 0.0
        %5496 = vmatpush2.msra.mxu0 %v3901
        %5497 = vmatprep.subr.mxu0 0.0
        %5498 = vmatpush2.msra.mxu0 %v3894
        %5499 = vmatprep.subr.mxu0 0.0
        %5500 = vmatpush2.msra.mxu0 %v3887
        %5501 = vmatprep.subr.mxu0 0.0
        %5502 = vmatpush2.msra.mxu0 %v3880
        %5503 = vmatprep.subr.mxu0 0.0
        %5504 = vmatpush2.msra.mxu0 %v3873
        %5505 = vmatprep.subr.mxu0 0.0
        %5506 = vmatpush2.msra.mxu0 %v3866
        %5507 = vmatprep.subr.mxu0 0.0
        %5508 = vmatpush2.msra.mxu0 %v3859
        %5509 = vmatprep.subr.mxu0 0.0
        %5510 = vmatpush2.msra.mxu0 %v3852
        %5511 = vmatprep.subr.mxu0 0.0
        %5512 = vmatpush2.msra.mxu0 %v3845
        %5513 = vmatprep.subr.mxu0 0.0
        %5514 = vmatpush2.msra.mxu0 %v3838
        %5515 = vmatprep.subr.mxu0 0.0
        %5516 = vmatpush2.msra.mxu0 %v3831
        %5517 = vmatprep.subr.mxu0 0.0
        %5518 = vmatpush2.msra.mxu0 %v3824
        %5519 = vmatprep.subr.mxu0 0.0
        %5520 = vmatpush2.msra.mxu0 %v3817
        %5521 = vmatprep.subr.mxu0 0.0
        %5522 = vmatpush2.msra.mxu0 %v3810
        %5523 = vmatprep.subr.mxu0 0.0
        %5524 = vmatpush2.msra.mxu0 %v3803
        %5525 = vmatprep.subr.mxu0 0.0
        %5526 = vmatpush2.msra.mxu0 %v3796
        %5527 = vmatprep.mubr.f32.mxu0 %v3159
        %5528 = vmatmul.mubr.f32.gmra.mxu0 %v3158
        %v5529 = vpop.f32.mrf.mxu0
        %v5530 = vadd.f32 %v4603, %v5529
        %v5531 = vpop.f32.mrf.mxu0
        %5532 = vdwg.mxu0
        %5533 = vmatprep.subr.mxu0 0.0
        %5534 = vmatpush1.msra.mxu0 %v4013
        %5535 = vmatprep.subr.mxu0 0.0
        %5536 = vmatpush1.msra.mxu0 %v4006
        %5537 = vmatprep.subr.mxu0 0.0
        %5538 = vmatpush1.msra.mxu0 %v3999
        %5539 = vmatprep.subr.mxu0 0.0
        %5540 = vmatpush1.msra.mxu0 %v3992
        %5541 = vmatprep.subr.mxu0 0.0
        %5542 = vmatpush1.msra.mxu0 %v3985
        %5543 = vmatprep.subr.mxu0 0.0
        %5544 = vmatpush1.msra.mxu0 %v3978
        %5545 = vmatprep.subr.mxu0 0.0
        %5546 = vmatpush1.msra.mxu0 %v3971
        %5547 = vmatprep.subr.mxu0 0.0
        %5548 = vmatpush1.msra.mxu0 %v3964
        %5549 = vmatprep.subr.mxu0 0.0
        %5550 = vmatpush1.msra.mxu0 %v3957
        %5551 = vmatprep.subr.mxu0 0.0
        %5552 = vmatpush1.msra.mxu0 %v3950
        %5553 = vmatprep.subr.mxu0 0.0
        %5554 = vmatpush1.msra.mxu0 %v3943
        %5555 = vmatprep.subr.mxu0 0.0
        %5556 = vmatpush1.msra.mxu0 %v3936
        %5557 = vmatprep.subr.mxu0 0.0
        %5558 = vmatpush1.msra.mxu0 %v3929
        %5559 = vmatprep.subr.mxu0 0.0
        %5560 = vmatpush1.msra.mxu0 %v3922
        %5561 = vmatprep.subr.mxu0 0.0
        %5562 = vmatpush1.msra.mxu0 %v3915
        %5563 = vmatprep.subr.mxu0 0.0
        %5564 = vmatpush1.msra.mxu0 %v3908
        %5565 = vmatprep.subr.mxu0 0.0
        %5566 = vmatpush2.msra.mxu0 %v4125
        %5567 = vmatprep.subr.mxu0 0.0
        %5568 = vmatpush2.msra.mxu0 %v4118
        %5569 = vmatprep.subr.mxu0 0.0
        %5570 = vmatpush2.msra.mxu0 %v4111
        %5571 = vmatprep.subr.mxu0 0.0
        %5572 = vmatpush2.msra.mxu0 %v4104
        %5573 = vmatprep.subr.mxu0 0.0
        %5574 = vmatpush2.msra.mxu0 %v4097
        %5575 = vmatprep.subr.mxu0 0.0
        %5576 = vmatpush2.msra.mxu0 %v4090
        %5577 = vmatprep.subr.mxu0 0.0
        %5578 = vmatpush2.msra.mxu0 %v4083
        %5579 = vmatprep.subr.mxu0 0.0
        %5580 = vmatpush2.msra.mxu0 %v4076
        %5581 = vmatprep.subr.mxu0 0.0
        %5582 = vmatpush2.msra.mxu0 %v4069
        %5583 = vmatprep.subr.mxu0 0.0
        %5584 = vmatpush2.msra.mxu0 %v4062
        %5585 = vmatprep.subr.mxu0 0.0
        %5586 = vmatpush2.msra.mxu0 %v4055
        %5587 = vmatprep.subr.mxu0 0.0
        %5588 = vmatpush2.msra.mxu0 %v4048
        %5589 = vmatprep.subr.mxu0 0.0
        %5590 = vmatpush2.msra.mxu0 %v4041
        %5591 = vmatprep.subr.mxu0 0.0
        %5592 = vmatpush2.msra.mxu0 %v4034
        %5593 = vmatprep.subr.mxu0 0.0
        %5594 = vmatpush2.msra.mxu0 %v4027
        %5595 = vmatprep.subr.mxu0 0.0
        %5596 = vmatpush2.msra.mxu0 %v4020
        %5597 = vmatprep.mubr.f32.mxu0 %v3161
        %5598 = vmatmul.mubr.f32.gmra.mxu0 %v3160
        %v5599 = vpop.f32.mrf.mxu0
        %v5600 = vadd.f32 %v5530, %v5599
        %v5601 = vpop.f32.mrf.mxu0
        %5602 = vdwg.mxu0
        %5603 = vmatprep.subr.mxu0 0.0
        %5604 = vmatpush1.msra.mxu0 %v4237
        %5605 = vmatprep.subr.mxu0 0.0
        %5606 = vmatpush1.msra.mxu0 %v4230
        %5607 = vmatprep.subr.mxu0 0.0
        %5608 = vmatpush1.msra.mxu0 %v4223
        %5609 = vmatprep.subr.mxu0 0.0
        %5610 = vmatpush1.msra.mxu0 %v4216
        %5611 = vmatprep.subr.mxu0 0.0
        %5612 = vmatpush1.msra.mxu0 %v4209
        %5613 = vmatprep.subr.mxu0 0.0
        %5614 = vmatpush1.msra.mxu0 %v4202
        %5615 = vmatprep.subr.mxu0 0.0
        %5616 = vmatpush1.msra.mxu0 %v4195
        %5617 = vmatprep.subr.mxu0 0.0
        %5618 = vmatpush1.msra.mxu0 %v4188
        %5619 = vmatprep.subr.mxu0 0.0
        %5620 = vmatpush1.msra.mxu0 %v4181
        %5621 = vmatprep.subr.mxu0 0.0
        %5622 = vmatpush1.msra.mxu0 %v4174
        %5623 = vmatprep.subr.mxu0 0.0
        %5624 = vmatpush1.msra.mxu0 %v4167
        %5625 = vmatprep.subr.mxu0 0.0
        %5626 = vmatpush1.msra.mxu0 %v4160
        %5627 = vmatprep.subr.mxu0 0.0
        %5628 = vmatpush1.msra.mxu0 %v4153
        %5629 = vmatprep.subr.mxu0 0.0
        %5630 = vmatpush1.msra.mxu0 %v4146
        %5631 = vmatprep.subr.mxu0 0.0
        %5632 = vmatpush1.msra.mxu0 %v4139
        %5633 = vmatprep.subr.mxu0 0.0
        %5634 = vmatpush1.msra.mxu0 %v4132
        %5635 = vmatprep.subr.mxu0 0.0
        %5636 = vmatpush2.msra.mxu0 %v4349
        %5637 = vmatprep.subr.mxu0 0.0
        %5638 = vmatpush2.msra.mxu0 %v4342
        %5639 = vmatprep.subr.mxu0 0.0
        %5640 = vmatpush2.msra.mxu0 %v4335
        %5641 = vmatprep.subr.mxu0 0.0
        %5642 = vmatpush2.msra.mxu0 %v4328
        %5643 = vmatprep.subr.mxu0 0.0
        %5644 = vmatpush2.msra.mxu0 %v4321
        %5645 = vmatprep.subr.mxu0 0.0
        %5646 = vmatpush2.msra.mxu0 %v4314
        %5647 = vmatprep.subr.mxu0 0.0
        %5648 = vmatpush2.msra.mxu0 %v4307
        %5649 = vmatprep.subr.mxu0 0.0
        %5650 = vmatpush2.msra.mxu0 %v4300
        %5651 = vmatprep.subr.mxu0 0.0
        %5652 = vmatpush2.msra.mxu0 %v4293
        %5653 = vmatprep.subr.mxu0 0.0
        %5654 = vmatpush2.msra.mxu0 %v4286
        %5655 = vmatprep.subr.mxu0 0.0
        %5656 = vmatpush2.msra.mxu0 %v4279
        %5657 = vmatprep.subr.mxu0 0.0
        %5658 = vmatpush2.msra.mxu0 %v4272
        %5659 = vmatprep.subr.mxu0 0.0
        %5660 = vmatpush2.msra.mxu0 %v4265
        %5661 = vmatprep.subr.mxu0 0.0
        %5662 = vmatpush2.msra.mxu0 %v4258
        %5663 = vmatprep.subr.mxu0 0.0
        %5664 = vmatpush2.msra.mxu0 %v4251
        %5665 = vmatprep.subr.mxu0 0.0
        %5666 = vmatpush2.msra.mxu0 %v4244
        %5667 = vmatprep.mubr.f32.mxu0 %v3163
        %5668 = vmatmul.mubr.f32.gmra.mxu0 %v3162
        %v5669 = vpop.f32.mrf.mxu0
        %v5670 = vadd.f32 %v5600, %v5669
        %v5671 = vpop.f32.mrf.mxu0
        %5672 = vdwg.mxu0
        %5673 = vmatprep.subr.mxu0 0.0
        %5674 = vmatpush1.msra.mxu0 %v4461
        %5675 = vmatprep.subr.mxu0 0.0
        %5676 = vmatpush1.msra.mxu0 %v4454
        %5677 = vmatprep.subr.mxu0 0.0
        %5678 = vmatpush1.msra.mxu0 %v4447
        %5679 = vmatprep.subr.mxu0 0.0
        %5680 = vmatpush1.msra.mxu0 %v4440
        %5681 = vmatprep.subr.mxu0 0.0
        %5682 = vmatpush1.msra.mxu0 %v4433
        %5683 = vmatprep.subr.mxu0 0.0
        %5684 = vmatpush1.msra.mxu0 %v4426
        %5685 = vmatprep.subr.mxu0 0.0
        %5686 = vmatpush1.msra.mxu0 %v4419
        %5687 = vmatprep.subr.mxu0 0.0
        %5688 = vmatpush1.msra.mxu0 %v4412
        %5689 = vmatprep.subr.mxu0 0.0
        %5690 = vmatpush1.msra.mxu0 %v4405
        %5691 = vmatprep.subr.mxu0 0.0
        %5692 = vmatpush1.msra.mxu0 %v4398
        %5693 = vmatprep.subr.mxu0 0.0
        %5694 = vmatpush1.msra.mxu0 %v4391
        %5695 = vmatprep.subr.mxu0 0.0
        %5696 = vmatpush1.msra.mxu0 %v4384
        %5697 = vmatprep.subr.mxu0 0.0
        %5698 = vmatpush1.msra.mxu0 %v4377
        %5699 = vmatprep.subr.mxu0 0.0
        %5700 = vmatpush1.msra.mxu0 %v4370
        %5701 = vmatprep.subr.mxu0 0.0
        %5702 = vmatpush1.msra.mxu0 %v4363
        %5703 = vmatprep.subr.mxu0 0.0
        %5704 = vmatpush1.msra.mxu0 %v4356
        %5705 = vmatprep.subr.mxu0 0.0
        %5706 = vmatpush2.msra.mxu0 %v4573
        %5707 = vmatprep.subr.mxu0 0.0
        %5708 = vmatpush2.msra.mxu0 %v4566
        %5709 = vmatprep.subr.mxu0 0.0
        %5710 = vmatpush2.msra.mxu0 %v4559
        %5711 = vmatprep.subr.mxu0 0.0
        %5712 = vmatpush2.msra.mxu0 %v4552
        %5713 = vmatprep.subr.mxu0 0.0
        %5714 = vmatpush2.msra.mxu0 %v4545
        %5715 = vmatprep.subr.mxu0 0.0
        %5716 = vmatpush2.msra.mxu0 %v4538
        %5717 = vmatprep.subr.mxu0 0.0
        %5718 = vmatpush2.msra.mxu0 %v4531
        %5719 = vmatprep.subr.mxu0 0.0
        %5720 = vmatpush2.msra.mxu0 %v4524
        %5721 = vmatprep.subr.mxu0 0.0
        %5722 = vmatpush2.msra.mxu0 %v4517
        %5723 = vmatprep.subr.mxu0 0.0
        %5724 = vmatpush2.msra.mxu0 %v4510
        %5725 = vmatprep.subr.mxu0 0.0
        %5726 = vmatpush2.msra.mxu0 %v4503
        %5727 = vmatprep.subr.mxu0 0.0
        %5728 = vmatpush2.msra.mxu0 %v4496
        %5729 = vmatprep.subr.mxu0 0.0
        %5730 = vmatpush2.msra.mxu0 %v4489
        %5731 = vmatprep.subr.mxu0 0.0
        %5732 = vmatpush2.msra.mxu0 %v4482
        %5733 = vmatprep.subr.mxu0 0.0
        %5734 = vmatpush2.msra.mxu0 %v4475
        %5735 = vmatprep.subr.mxu0 0.0
        %5736 = vmatpush2.msra.mxu0 %v4468
        %5737 = vmatprep.mubr.f32.mxu0 %v3165
        %5738 = vmatmul.mubr.f32.gmra.mxu0 %v3164
        %v5739 = vpop.f32.mrf.mxu0
        %v5740 = vadd.f32 %v5670, %v5739
        %v5741 = vpop.f32.mrf.mxu0
        %5742 = vdwg.mxu0
        %v5743 = vxor.u32 %v4891, 2147483648
        %v5744 = vxor.u32 %v4893, 2147483648
        %v5745 = vxor.u32 %v5175, 2147483648
        %v5746 = vxor.u32 %v5177, 2147483648
        %v5747 = vxor.u32 %v5459, 2147483648
        %v5748 = vxor.u32 %v5461, 2147483648
        %v5749 = vxor.u32 %v5740, 2147483648
        %v5750 = vmul.f32 %v5743, 1.442695
        %v5751 = vpow.pop %v5750
        %v5752 = vmul.f32 %v5744, 1.442695
        %v5753 = vpow.pop %v5752
        %v5754 = vmul.f32 %v5745, 1.442695
        %v5755 = vpow.pop %v5754
        %v5756 = vmul.f32 %v5746, 1.442695
        %v5757 = vpow.pop %v5756
        %v5758 = vmul.f32 %v5747, 1.442695
        %v5759 = vpow.pop %v5758
        %v5760 = vmul.f32 %v5748, 1.442695
        %v5761 = vpow.pop %v5760
        %v5762 = vmul.f32 %v5749, 1.442695
        %v5763 = vpow.pop %v5762
        %v5764 = vadd.f32 %v5751, 1.0
        %v5765 = vadd.f32 %v5753, 1.0
        %v5766 = vadd.f32 %v5755, 1.0
        %v5767 = vadd.f32 %v5757, 1.0
        %v5768 = vadd.f32 %v5759, 1.0
        %v5769 = vadd.f32 %v5761, 1.0
        %v5770 = vadd.f32 %v5763, 1.0
        %v5771 = vrcp.pop %v5764
        %v5772 = vmul.f32 1.0, %v5771
        %v5773 = vrcp.pop %v5765
        %v5774 = vmul.f32 1.0, %v5773
        %v5775 = vrcp.pop %v5766
        %v5776 = vmul.f32 1.0, %v5775
        %v5777 = vrcp.pop %v5767
        %v5778 = vmul.f32 1.0, %v5777
        %v5779 = vrcp.pop %v5768
        %v5780 = vmul.f32 1.0, %v5779
        %v5781 = vrcp.pop %v5769
        %v5782 = vmul.f32 1.0, %v5781
        %v5783 = vrcp.pop %v5770
        %v5784 = vmul.f32 1.0, %v5783
        %5785 = vst [vmem:[%s694] sm:$0xff] %v5772
        %5786 = vst [vmem:[%s694 + $0x8] sm:$0xff] %v5774
        %5787 = vst [vmem:[%s694 + $0x10] sm:$0xff] %v5776
        %5788 = vst [vmem:[%s694 + $0x18] sm:$0xff] %v5778
        %5789 = vst [vmem:[%s694 + $0x20] sm:$0xff] %v5780
        %5790 = vst [vmem:[%s694 + $0x28] sm:$0xff] %v5782
        %5791 = vst [vmem:[%s694 + $0x30] sm:$0xff] %v5784
        %s5792 = sand.u32 %s367, 1
        %s5793 = scalar_lea.sflag [#allocation4], %s5792
        %s5794 = sand.u32 %s367, 1
        %s5795 = smul.addr %s5794, 56
        %s5796 = scalar_lea.vmem [#allocation26], %s5795
        // Predicated region
        $region141: #{generator_forward.1} parent=79 // pred_check
          %p5797 = pneg %p377
        $region142: #{generator_forward.1} parent=79 // pred_check_branch
          %5799 = sbr.rel (%p5797) target = $region144
        $region143: #{generator_forward.1} parent=79 // pred_region
          %s5801 = ssub.s32 896, 896
          %5802 = vsyncadd %s5793, %s5801
          %s5803 = smul.addr %s39, 7
          %s5804 = smul.addr %s5803, 128
          %s5805 = scalar_lea.hbm %s15, %s5804
          %s5807 = sshll.u32 %s5796, 4
          %s5808 = int_to_ptr.vmem [resolvable:$true] %s5807
          %5810 = dma.vmem_to_hbm [thread:$0]  %s5808, 896, %s5805, %s5793
        $region144: #{generator_forward.1} parent=79 // pred_fallthru
          _
      $region80: #{generator_forward.1} parent=5 // pred_fallthru
        _
      %p5811 = scmp.le.s32.totalorder 2, %s34
      // Predicated region
      $region145: #{generator_forward.1} parent=5 // pred_check
        %p5812 = pneg %p5811
      $region146: #{generator_forward.1} parent=5 // pred_check_branch
        %5814 = sbr.rel (%p5812) target = $region148
      $region147: #{generator_forward.1} parent=5 // pred_region
        %s5815 = ssub.s32 %s34, 2
        // Predicated region
        $region149: #{generator_forward.1} parent=147 // pred_check
          %p5816 = pneg %p383
        $region150: #{generator_forward.1} parent=147 // pred_check_branch
          %5818 = sbr.rel (%p5816) target = $region152
        $region151: #{generator_forward.1} parent=147 // pred_region
          %s5819 = sand.u32 %s368, 1
          %s5820 = scalar_lea.sflag [#allocation4], %s5819
          %s5821 = sand.u32 %s368, 1
          %s5822 = smul.addr %s5821, 56
          %s5823 = scalar_lea.vmem [#allocation26], %s5822
          %5824 = dma.done %s5820, 896
        $region152: #{generator_forward.1} parent=147 // pred_fallthru
          _
      $region148: #{generator_forward.1} parent=5 // pred_fallthru
        _
    $region6: #{generator_forward.1} parent=1 // loop_footer
      %s38 = sadd.s32 1, %s34
    $region7: #{generator_forward.1} parent=1 // loop_footer_branch
      %33 = sbr.rel target = $region3
    $region8: #{generator_forward.1} parent=1 // loop_exit
      _
    %5825 = vsyncpa [#allocation3], 1
    %s5826 = scalar_lea.sflag [#allocation3], 1
    %5827 = vsyncpa %s5826, 1
    %5828 = vsyncpa [#allocation6], 1
    %5829 = vsyncpa [#allocation9], 1
    %5830 = vsyncpa [#allocation12], 1
    %5831 = vsyncpa [#allocation15], 1
    %5832 = vsyncpa [#allocation18], 1
    %5833 = vsyncpa [#allocation21], 1
    %5834 = vsyncpa [#allocation24], 1
    %5835 = vsyncpa [#allocation4], 1
    %s5836 = scalar_lea.sflag [#allocation4], 1
    %5837 = vsyncpa %s5836, 1

</llo_original>
